<compile_context>
chip_gen: v7x
topology: tpu7x:2x2x1
jax: 0.10.0
libtpu: 0.0.40
codegen_flags: <defaults>
</compile_context>

<pallas_src>
import functools

import numpy as np
import jax
import jax.numpy as jnp
from jax import lax
from jax.experimental import pallas as pl
from jax.experimental.pallas import tpu as pltpu

GATE_PITCH = 128  # lanes per gate slot in the stacked/padded weights


# ----------------------------------------------------------------------------
# Fused kernel: GRU layer 1 + GRU layer 2 (interleaved) -> Tanh -> Linear
# ----------------------------------------------------------------------------
def _gru_stack_fc_kernel(x_ref, wih1_ref, whh1_ref, bih1_ref, bhh1_ref,
                         wih2_ref, whh2_ref, bih2_ref, bhh2_ref,
                         wfc_ref, bfc_ref, o_ref, xp1_ref,
                         *, T, BB, H1, H2, GP):
    """x_ref: (1, T*BB, D) time-major rows (row = t*BB + local_batch).
    wih1 (D,3GP), whh1 (H1,3GP), wih2 (H1,3GP), whh2 (H2,3GP): bf16, gate-padded
    [r|z|n], gate g in columns [g*GP, g*GP+H).  b*: (1, 3GP) f32 (same layout).
    wfc (H2,O) f32, bfc (1,O) f32.  o_ref: (1, BB, O).
    Scratch: xp1 (T*BB, 3GP) f32 — hoisted layer-1 input projections."""
    cdt = jnp.bfloat16

    # Layer-1 input projections for ALL timesteps: one MXU pass, off the serial
    # chain (only the h-projections stay inside the recurrence).
    x_flat = x_ref[0].astype(cdt)                              # (T*BB, D)
    xp1_ref[...] = (jnp.dot(x_flat, wih1_ref[...],
                            preferred_element_type=jnp.float32)
                    + bih1_ref[...])

    wih2 = wih2_ref[...]
    whh1, whh2 = whh1_ref[...], whh2_ref[...]
    # Hoist bias broadcasts out of the unrolled loop (no CSE of broadcast_in_dim).
    bhh1 = jnp.broadcast_to(bhh1_ref[...], (BB, 3 * GP))
    bhh2 = jnp.broadcast_to(bhh2_ref[...], (BB, 3 * GP))
    bih2 = jnp.broadcast_to(bih2_ref[...], (BB, 3 * GP))

    def gru_step(gx, h, whh, bhh, H):
        # One gate-stacked (BB,H)x(H,3GP) bf16 matmul per step; gates land at
        # lane offset 0 of their own 128-lane tile -> no lane rotates below.
        gh = jnp.dot(h.astype(cdt), whh,
                     preferred_element_type=jnp.float32) + bhh
        r = jax.nn.sigmoid(gx[:, 0:H] + gh[:, 0:H])
        z = jax.nn.sigmoid(gx[:, GP:GP + H] + gh[:, GP:GP + H])
        # PyTorch GRU: n = tanh(W_in x + b_in + r * (W_hn h + b_hn))
        n = jnp.tanh(gx[:, 2 * GP:2 * GP + H] + r * gh[:, 2 * GP:2 * GP + H])
        return (1.0 - z) * n + z * h

    def body(t, carry):
        h1, h2 = carry
        row = pl.multiple_of(t * BB, BB)                       # BB % 8 == 0
        gx1 = xp1_ref[pl.ds(row, BB), :]                       # tile-aligned read
        h1 = gru_step(gx1, h1, whh1, bhh1, H1)
        gx2 = jnp.dot(h1.astype(cdt), wih2,
                      preferred_element_type=jnp.float32) + bih2
        h2 = gru_step(gx2, h2, whh2, bhh2, H2)
        return (h1, h2)

    h1_0 = jnp.zeros((BB, H1), jnp.float32)
    h2_0 = jnp.zeros((BB, H2), jnp.float32)
    _, h2 = lax.fori_loop(0, T, body, (h1_0, h2_0), unroll=True)

    # x[:, -1, :] -> Tanh -> fc1 (single small f32 matmul, end of chain).
    logits = jnp.dot(jnp.tanh(h2), wfc_ref[...],
                     preferred_element_type=jnp.float32) + bfc_ref[...]
    o_ref[0] = logits


# ----------------------------------------------------------------------------
# Wrapper
# ----------------------------------------------------------------------------
def _num_batch_blocks():
    # Only split the batch over the grid where a chip has 2 TensorCores (v7x);
    # on single-TC v5e/v6e a grid split just runs the serial recurrence twice.
    try:
        kind = jax.devices()[0].device_kind.lower()
    except Exception:
        return 1
    return 2 if ("v7" in kind or "tpu7" in kind) else 1


def gru_forward(x, packed):
    """x: (B, T, D) float32, batch_first — same contract as the PyTorch module."""
    (wih1, whh1, bih1, bhh1, wih2, whh2, bih2, bhh2, wfc, bfc) = packed
    B, T, D = x.shape
    H1, H2 = whh1.shape[0], whh2.shape[0]
    GP = wih1.shape[1] // 3
    O = wfc.shape[1]

    nb = _num_batch_blocks()
    BP = -(-B // (8 * nb)) * (8 * nb)        # batch padded to 8-row tiles/block
    BB = BP // nb

    # Time-major, batch-blocked layout: kernel's hoisted x@Wih matmul and the
    # per-step pl.ds reads then need no in-kernel transposes or reshapes.
    xb = jnp.pad(x.astype(jnp.float32), ((0, BP - B), (0, 0), (0, 0)))
    x_tm = (xb.transpose(1, 0, 2)                              # (T, BP, D)
              .reshape(T, nb, BB, D).transpose(1, 0, 2, 3)     # (nb, T, BB, D)
              .reshape(nb, T * BB, D))

    const2 = lambda i: (0, 0)
    kernel = functools.partial(_gru_stack_fc_kernel,
                               T=T, BB=BB, H1=H1, H2=H2, GP=GP)

    out = pl.pallas_call(
        kernel,
        out_shape=jax.ShapeDtypeStruct((nb, BB, O), jnp.float32),
        grid=(nb,),
        in_specs=[
            pl.BlockSpec((1, T * BB, D), lambda i: (i, 0, 0)),
            pl.BlockSpec((D, 3 * GP), const2),
            pl.BlockSpec((H1, 3 * GP), const2),
            pl.BlockSpec((1, 3 * GP), const2),
            pl.BlockSpec((1, 3 * GP), const2),
            pl.BlockSpec((H1, 3 * GP), const2),
            pl.BlockSpec((H2, 3 * GP), const2),
            pl.BlockSpec((1, 3 * GP), const2),
            pl.BlockSpec((1, 3 * GP), const2),
            pl.BlockSpec((H2, O), const2),
            pl.BlockSpec((1, O), const2),
        ],
        out_specs=pl.BlockSpec((1, BB, O), lambda i: (i, 0, 0)),
        scratch_shapes=[pltpu.VMEM((T * BB, 3 * GP), jnp.float32)],
        compiler_params=pltpu.CompilerParams(dimension_semantics=("parallel",)),
    )(x_tm, wih1, whh1, bih1, bhh1, wih2, whh2, bih2, bhh2, wfc, bfc)

    return out.reshape(BP, O)[:B]


# ----------------------------------------------------------------------------
# Parameters (native torch layouts) + packing + pure-JAX reference
# ----------------------------------------------------------------------------
def init_params(key, D, H1, H2, O):
    """torch.nn.GRU / nn.Linear native layouts: w_ih (3H,in), w_hh (3H,H),
    biases (3H,), fc weight (O,H), gate order [r, z, n]."""
    ks = iter(jax.random.split(key, 10))

    def unif(shape, scale):
        return jax.random.uniform(next(ks), shape, jnp.float32, -scale, scale)

    s1, s2 = 1.0 / np.sqrt(H1), 1.0 / np.sqrt(H2)
    return {
        'gru1': dict(w_ih=unif((3 * H1, D), s1), w_hh=unif((3 * H1, H1), s1),
                     b_ih=unif((3 * H1,), s1), b_hh=unif((3 * H1,), s1)),
        'gru2': dict(w_ih=unif((3 * H2, H1), s2), w_hh=unif((3 * H2, H2), s2),
                     b_ih=unif((3 * H2,), s2), b_hh=unif((3 * H2,), s2)),
        'fc1': dict(w=unif((O, H2), s2), b=unif((O,), s2)),
    }


def _pad_gate_cols(w3h, H, GP):
    """(rows, 3H) stacked [r|z|n] -> (rows, 3*GP), each gate at lane offset 0."""
    parts = [jnp.pad(w3h[:, g * H:(g + 1) * H], ((0, 0), (0, GP - H)))
             for g in range(3)]
    return jnp.concatenate(parts, axis=1)


def pack_params(p, H1, H2, GP=GATE_PITCH, mxu_dtype=jnp.bfloat16):
    """torch layout -> kernel layout: transposed, gate-padded, bf16 MXU weights;
    biases stay f32 (added after the f32-accumulated matmul)."""
    def gru_pack(layer, H):
        wih = _pad_gate_cols(layer['w_ih'].T, H, GP).astype(mxu_dtype)
        whh = _pad_gate_cols(layer['w_hh'].T, H, GP).astype(mxu_dtype)
        bih = _pad_gate_cols(layer['b_ih'][None, :], H, GP)
        bhh = _pad_gate_cols(layer['b_hh'][None, :], H, GP)
        return wih, whh, bih, bhh

    wih1, whh1, bih1, bhh1 = gru_pack(p['gru1'], H1)
    wih2, whh2, bih2, bhh2 = gru_pack(p['gru2'], H2)
    wfc = p['fc1']['w'].T.astype(jnp.float32)        # (H2, O)
    bfc = p['fc1']['b'][None, :].astype(jnp.float32)
    return (wih1, whh1, bih1, bhh1, wih2, whh2, bih2, bhh2, wfc, bfc)


def reference_forward(x, p):
    """Pure-JAX reference with exact torch.nn.GRU math (batch_first, h0=0)."""
    B, T, _ = x.shape

    def gru_layer(seq, layer):
        H = layer['w_hh'].shape[1]
        w_ih_t, w_hh_t = layer['w_ih'].T, layer['w_hh'].T
        b_ih, b_hh = layer['b_ih'], layer['b_hh']
        h = jnp.zeros((B, H), jnp.float32)
        outs = []
        for t in range(T):
            gx = seq[:, t] @ w_ih_t + b_ih
            gh = h @ w_hh_t + b_hh
            r = jax.nn.sigmoid(gx[:, :H] + gh[:, :H])
            z = jax.nn.sigmoid(gx[:, H:2 * H] + gh[:, H:2 * H])
            n = jnp.tanh(gx[:, 2 * H:] + r * gh[:, 2 * H:])
            h = (1.0 - z) * n + z * h
            outs.append(h)
        return jnp.stack(outs, axis=1), h

    seq1, _ = gru_layer(x.astype(jnp.float32), p['gru1'])
    _, h2 = gru_layer(seq1, p['gru2'])
    return jnp.tanh(h2) @ p['fc1']['w'].T + p['fc1']['b']


if __name__ == "__main__":
    key = jax.random.PRNGKey(0)
    kp, kx = jax.random.split(key)

    B, T = 4, 8
    INPUT_DIM, HIDDEN1, HIDDEN2, OUTPUT_DIM = 16, 32, 32, 8

    params = init_params(kp, INPUT_DIM, HIDDEN1, HIDDEN2, OUTPUT_DIM)
    packed = pack_params(params, HIDDEN1, HIDDEN2)
    x = jax.random.normal(kx, (B, T, INPUT_DIM), jnp.float32)

    out = jax.jit(gru_forward)(x, packed)
    out = jax.block_until_ready(out)

    assert out.shape == (B, OUTPUT_DIM)
    assert bool(jnp.all(jnp.isfinite(out)))

    ref = reference_forward(x, params)
    # Tolerance loosened vs. f32-only version because MXU operands are bf16
    # (accumulation and all nonlinearities remain f32).
    np.testing.assert_allclose(np.asarray(out), np.asarray(ref),
                               rtol=2e-2, atol=2e-2)
    print("KERNEL_OK")
</pallas_src>

<mosaic_0001>
module attributes {stable_mosaic.version = 11 : i64} {
  func.func @_gru_stack_fc_kernel(%arg0: i32, %arg1: memref<1x64x16xf32, #tpu.memory_space<vmem>>, %arg2: memref<16x384xbf16, #tpu.memory_space<vmem>>, %arg3: memref<32x384xbf16, #tpu.memory_space<vmem>>, %arg4: memref<1x384xf32, #tpu.memory_space<vmem>>, %arg5: memref<1x384xf32, #tpu.memory_space<vmem>>, %arg6: memref<32x384xbf16, #tpu.memory_space<vmem>>, %arg7: memref<32x384xbf16, #tpu.memory_space<vmem>>, %arg8: memref<1x384xf32, #tpu.memory_space<vmem>>, %arg9: memref<1x384xf32, #tpu.memory_space<vmem>>, %arg10: memref<32x8xf32, #tpu.memory_space<vmem>>, %arg11: memref<1x8xf32, #tpu.memory_space<vmem>>, %arg12: memref<1x8x8xf32, #tpu.memory_space<vmem>>, %arg13: memref<64x384xf32, #tpu.memory_space<vmem>>) attributes {dimension_semantics = [#tpu.dimension_semantics<parallel>], iteration_bounds = array<i64: 1>, scalar_prefetch = 0 : i64, scratch_operands = 1 : i64, tpu.core_type = #tpu.core_type<tc>, window_params = [{transform_indices = @transform_0, window_bounds = array<i64: 1, 64, 16>}, {pipeline_mode = #tpu.pipeline_mode<synchronous>, transform_indices = @transform_1, window_bounds = array<i64: 16, 384>}, {pipeline_mode = #tpu.pipeline_mode<synchronous>, transform_indices = @transform_2, window_bounds = array<i64: 32, 384>}, {pipeline_mode = #tpu.pipeline_mode<synchronous>, transform_indices = @transform_3, window_bounds = array<i64: 1, 384>}, {pipeline_mode = #tpu.pipeline_mode<synchronous>, transform_indices = @transform_4, window_bounds = array<i64: 1, 384>}, {pipeline_mode = #tpu.pipeline_mode<synchronous>, transform_indices = @transform_5, window_bounds = array<i64: 32, 384>}, {pipeline_mode = #tpu.pipeline_mode<synchronous>, transform_indices = @transform_6, window_bounds = array<i64: 32, 384>}, {pipeline_mode = #tpu.pipeline_mode<synchronous>, transform_indices = @transform_7, window_bounds = array<i64: 1, 384>}, {pipeline_mode = #tpu.pipeline_mode<synchronous>, transform_indices = @transform_8, window_bounds = array<i64: 1, 384>}, {pipeline_mode = #tpu.pipeline_mode<synchronous>, transform_indices = @transform_9, window_bounds = array<i64: 32, 8>}, {pipeline_mode = #tpu.pipeline_mode<synchronous>, transform_indices = @transform_10, window_bounds = array<i64: 1, 8>}, {transform_indices = @transform_11, window_bounds = array<i64: 1, 8, 8>}]} {
    %c0 = arith.constant 0 : index
    %c0_0 = arith.constant 0 : index
    %c0_1 = arith.constant 0 : index
    %0 = vector.load %arg1[%c0, %c0_0, %c0_1] : memref<1x64x16xf32, #tpu.memory_space<vmem>>, vector<1x64x16xf32>
    %1 = vector.shape_cast %0 : vector<1x64x16xf32> to vector<64x16xf32>
    %2 = arith.truncf %1 : vector<64x16xf32> to vector<64x16xbf16>
    %c0_2 = arith.constant 0 : index
    %c0_3 = arith.constant 0 : index
    %3 = vector.load %arg2[%c0_2, %c0_3] : memref<16x384xbf16, #tpu.memory_space<vmem>>, vector<16x384xbf16>
    %cst = arith.constant dense<0.000000e+00> : vector<64x384xf32>
    %4 = tpu.matmul %2, %3, %cst {dimension_numbers = #tpu.dot_dimension_numbers<[1], [0], [0], [1], [0, 0, 1, 1], [], []>} : vector<64x16xbf16>, vector<16x384xbf16>, vector<64x384xf32> -> vector<64x384xf32>
    %c0_4 = arith.constant 0 : index
    %c0_5 = arith.constant 0 : index
    %5 = vector.load %arg4[%c0_4, %c0_5] : memref<1x384xf32, #tpu.memory_space<vmem>>, vector<1x384xf32>
    %6 = vector.broadcast %5 : vector<1x384xf32> to vector<64x384xf32>
    %7 = arith.addf %4, %6 : vector<64x384xf32>
    %c0_6 = arith.constant 0 : index
    %c0_7 = arith.constant 0 : index
    %8 = vector.load %arg13[%c0_6, %c0_7] : memref<64x384xf32, #tpu.memory_space<vmem>>, vector<64x384xf32>
    tpu.vector_store %arg13[%c0_6, %c0_7], %7 {strides = array<i32>} : memref<64x384xf32, #tpu.memory_space<vmem>>, vector<64x384xf32>,
    %c0_8 = arith.constant 0 : index
    %c0_9 = arith.constant 0 : index
    %9 = vector.load %arg6[%c0_8, %c0_9] : memref<32x384xbf16, #tpu.memory_space<vmem>>, vector<32x384xbf16>
    %c0_10 = arith.constant 0 : index
    %c0_11 = arith.constant 0 : index
    %10 = vector.load %arg3[%c0_10, %c0_11] : memref<32x384xbf16, #tpu.memory_space<vmem>>, vector<32x384xbf16>
    %c0_12 = arith.constant 0 : index
    %c0_13 = arith.constant 0 : index
    %11 = vector.load %arg7[%c0_12, %c0_13] : memref<32x384xbf16, #tpu.memory_space<vmem>>, vector<32x384xbf16>
    %c0_14 = arith.constant 0 : index
    %c0_15 = arith.constant 0 : index
    %12 = vector.load %arg5[%c0_14, %c0_15] : memref<1x384xf32, #tpu.memory_space<vmem>>, vector<1x384xf32>
    %13 = vector.shape_cast %12 : vector<1x384xf32> to vector<1x384xf32>
    %14 = vector.broadcast %13 : vector<1x384xf32> to vector<8x384xf32>
    %c0_16 = arith.constant 0 : index
    %c0_17 = arith.constant 0 : index
    %15 = vector.load %arg9[%c0_16, %c0_17] : memref<1x384xf32, #tpu.memory_space<vmem>>, vector<1x384xf32>
    %16 = vector.shape_cast %15 : vector<1x384xf32> to vector<1x384xf32>
    %17 = vector.broadcast %16 : vector<1x384xf32> to vector<8x384xf32>
    %c0_18 = arith.constant 0 : index
    %c0_19 = arith.constant 0 : index
    %18 = vector.load %arg8[%c0_18, %c0_19] : memref<1x384xf32, #tpu.memory_space<vmem>>, vector<1x384xf32>
    %19 = vector.shape_cast %18 : vector<1x384xf32> to vector<1x384xf32>
    %20 = vector.broadcast %19 : vector<1x384xf32> to vector<8x384xf32>
    %cst_20 = arith.constant 0.000000e+00 : f32
    %21 = vector.broadcast %cst_20 : f32 to vector<8x32xf32>
    %cst_21 = arith.constant 0.000000e+00 : f32
    %22 = vector.broadcast %cst_21 : f32 to vector<8x32xf32>
    %c0_i32 = arith.constant 0 : i32
    %c8_i32 = arith.constant 8 : i32
    %23 = arith.muli %c0_i32, %c8_i32 : i32
    %24 = tpu.assume_multiple %23, 8 : i32
    %25 = arith.index_cast %24 : i32 to index
    %c0_22 = arith.constant 0 : index
    %26 = vector.load %arg13[%25, %c0_22] : memref<64x384xf32, #tpu.memory_space<vmem>>, vector<8x384xf32>
    %27 = arith.truncf %21 : vector<8x32xf32> to vector<8x32xbf16>
    %cst_23 = arith.constant dense<0.000000e+00> : vector<8x384xf32>
    %28 = tpu.matmul %27, %10, %cst_23 {dimension_numbers = #tpu.dot_dimension_numbers<[1], [0], [0], [1], [0, 0, 1, 1], [], []>} : vector<8x32xbf16>, vector<32x384xbf16>, vector<8x384xf32> -> vector<8x384xf32>
    %29 = arith.addf %28, %14 : vector<8x384xf32>
    %30 = vector.extract_strided_slice %26 {offsets = [0, 0], sizes = [8, 32], strides = [1, 1]} : vector<8x384xf32> to vector<8x32xf32>
    %31 = vector.extract_strided_slice %29 {offsets = [0, 0], sizes = [8, 32], strides = [1, 1]} : vector<8x384xf32> to vector<8x32xf32>
    %32 = arith.addf %30, %31 : vector<8x32xf32>
    %33 = arith.negf %32 : vector<8x32xf32>
    %34 = math.exp %33 : vector<8x32xf32>
    %cst_24 = arith.constant 1.000000e+00 : f32
    %35 = vector.broadcast %cst_24 : f32 to vector<8x32xf32>
    %36 = arith.addf %35, %34 : vector<8x32xf32>
    %37 = arith.divf %35, %36 : vector<8x32xf32>
    %38 = vector.extract_strided_slice %26 {offsets = [0, 128], sizes = [8, 32], strides = [1, 1]} : vector<8x384xf32> to vector<8x32xf32>
    %39 = vector.extract_strided_slice %29 {offsets = [0, 128], sizes = [8, 32], strides = [1, 1]} : vector<8x384xf32> to vector<8x32xf32>
    %40 = arith.addf %38, %39 : vector<8x32xf32>
    %41 = arith.negf %40 : vector<8x32xf32>
    %42 = math.exp %41 : vector<8x32xf32>
    %cst_25 = arith.constant 1.000000e+00 : f32
    %43 = vector.broadcast %cst_25 : f32 to vector<8x32xf32>
    %44 = arith.addf %43, %42 : vector<8x32xf32>
    %45 = arith.divf %43, %44 : vector<8x32xf32>
    %46 = vector.extract_strided_slice %26 {offsets = [0, 256], sizes = [8, 32], strides = [1, 1]} : vector<8x384xf32> to vector<8x32xf32>
    %47 = vector.extract_strided_slice %29 {offsets = [0, 256], sizes = [8, 32], strides = [1, 1]} : vector<8x384xf32> to vector<8x32xf32>
    %48 = arith.mulf %37, %47 : vector<8x32xf32>
    %49 = arith.addf %46, %48 : vector<8x32xf32>
    %50 = math.tanh %49 : vector<8x32xf32>
    %cst_26 = arith.constant 1.000000e+00 : f32
    %51 = vector.broadcast %cst_26 : f32 to vector<8x32xf32>
    %52 = arith.subf %51, %45 : vector<8x32xf32>
    %53 = arith.mulf %52, %50 : vector<8x32xf32>
    %54 = arith.mulf %45, %21 : vector<8x32xf32>
    %55 = arith.addf %53, %54 : vector<8x32xf32>
    %56 = arith.truncf %55 : vector<8x32xf32> to vector<8x32xbf16>
    %cst_27 = arith.constant dense<0.000000e+00> : vector<8x384xf32>
    %57 = tpu.matmul %56, %9, %cst_27 {dimension_numbers = #tpu.dot_dimension_numbers<[1], [0], [0], [1], [0, 0, 1, 1], [], []>} : vector<8x32xbf16>, vector<32x384xbf16>, vector<8x384xf32> -> vector<8x384xf32>
    %58 = arith.addf %57, %20 : vector<8x384xf32>
    %59 = arith.truncf %22 : vector<8x32xf32> to vector<8x32xbf16>
    %cst_28 = arith.constant dense<0.000000e+00> : vector<8x384xf32>
    %60 = tpu.matmul %59, %11, %cst_28 {dimension_numbers = #tpu.dot_dimension_numbers<[1], [0], [0], [1], [0, 0, 1, 1], [], []>} : vector<8x32xbf16>, vector<32x384xbf16>, vector<8x384xf32> -> vector<8x384xf32>
    %61 = arith.addf %60, %17 : vector<8x384xf32>
    %62 = vector.extract_strided_slice %58 {offsets = [0, 0], sizes = [8, 32], strides = [1, 1]} : vector<8x384xf32> to vector<8x32xf32>
    %63 = vector.extract_strided_slice %61 {offsets = [0, 0], sizes = [8, 32], strides = [1, 1]} : vector<8x384xf32> to vector<8x32xf32>
    %64 = arith.addf %62, %63 : vector<8x32xf32>
    %65 = arith.negf %64 : vector<8x32xf32>
    %66 = math.exp %65 : vector<8x32xf32>
    %cst_29 = arith.constant 1.000000e+00 : f32
    %67 = vector.broadcast %cst_29 : f32 to vector<8x32xf32>
    %68 = arith.addf %67, %66 : vector<8x32xf32>
    %69 = arith.divf %67, %68 : vector<8x32xf32>
    %70 = vector.extract_strided_slice %58 {offsets = [0, 128], sizes = [8, 32], strides = [1, 1]} : vector<8x384xf32> to vector<8x32xf32>
    %71 = vector.extract_strided_slice %61 {offsets = [0, 128], sizes = [8, 32], strides = [1, 1]} : vector<8x384xf32> to vector<8x32xf32>
    %72 = arith.addf %70, %71 : vector<8x32xf32>
    %73 = arith.negf %72 : vector<8x32xf32>
    %74 = math.exp %73 : vector<8x32xf32>
    %cst_30 = arith.constant 1.000000e+00 : f32
    %75 = vector.broadcast %cst_30 : f32 to vector<8x32xf32>
    %76 = arith.addf %75, %74 : vector<8x32xf32>
    %77 = arith.divf %75, %76 : vector<8x32xf32>
    %78 = vector.extract_strided_slice %58 {offsets = [0, 256], sizes = [8, 32], strides = [1, 1]} : vector<8x384xf32> to vector<8x32xf32>
    %79 = vector.extract_strided_slice %61 {offsets = [0, 256], sizes = [8, 32], strides = [1, 1]} : vector<8x384xf32> to vector<8x32xf32>
    %80 = arith.mulf %69, %79 : vector<8x32xf32>
    %81 = arith.addf %78, %80 : vector<8x32xf32>
    %82 = math.tanh %81 : vector<8x32xf32>
    %cst_31 = arith.constant 1.000000e+00 : f32
    %83 = vector.broadcast %cst_31 : f32 to vector<8x32xf32>
    %84 = arith.subf %83, %77 : vector<8x32xf32>
    %85 = arith.mulf %84, %82 : vector<8x32xf32>
    %86 = arith.mulf %77, %22 : vector<8x32xf32>
    %87 = arith.addf %85, %86 : vector<8x32xf32>
    %c1_i32 = arith.constant 1 : i32
    %c8_i32_32 = arith.constant 8 : i32
    %88 = arith.muli %c1_i32, %c8_i32_32 : i32
    %89 = tpu.assume_multiple %88, 8 : i32
    %90 = arith.index_cast %89 : i32 to index
    %c0_33 = arith.constant 0 : index
    %91 = vector.load %arg13[%90, %c0_33] : memref<64x384xf32, #tpu.memory_space<vmem>>, vector<8x384xf32>
    %92 = arith.truncf %55 : vector<8x32xf32> to vector<8x32xbf16>
    %cst_34 = arith.constant dense<0.000000e+00> : vector<8x384xf32>
    %93 = tpu.matmul %92, %10, %cst_34 {dimension_numbers = #tpu.dot_dimension_numbers<[1], [0], [0], [1], [0, 0, 1, 1], [], []>} : vector<8x32xbf16>, vector<32x384xbf16>, vector<8x384xf32> -> vector<8x384xf32>
    %94 = arith.addf %93, %14 : vector<8x384xf32>
    %95 = vector.extract_strided_slice %91 {offsets = [0, 0], sizes = [8, 32], strides = [1, 1]} : vector<8x384xf32> to vector<8x32xf32>
    %96 = vector.extract_strided_slice %94 {offsets = [0, 0], sizes = [8, 32], strides = [1, 1]} : vector<8x384xf32> to vector<8x32xf32>
    %97 = arith.addf %95, %96 : vector<8x32xf32>
    %98 = arith.negf %97 : vector<8x32xf32>
    %99 = math.exp %98 : vector<8x32xf32>
    %cst_35 = arith.constant 1.000000e+00 : f32
    %100 = vector.broadcast %cst_35 : f32 to vector<8x32xf32>
    %101 = arith.addf %100, %99 : vector<8x32xf32>
    %102 = arith.divf %100, %101 : vector<8x32xf32>
    %103 = vector.extract_strided_slice %91 {offsets = [0, 128], sizes = [8, 32], strides = [1, 1]} : vector<8x384xf32> to vector<8x32xf32>
    %104 = vector.extract_strided_slice %94 {offsets = [0, 128], sizes = [8, 32], strides = [1, 1]} : vector<8x384xf32> to vector<8x32xf32>
    %105 = arith.addf %103, %104 : vector<8x32xf32>
    %106 = arith.negf %105 : vector<8x32xf32>
    %107 = math.exp %106 : vector<8x32xf32>
    %cst_36 = arith.constant 1.000000e+00 : f32
    %108 = vector.broadcast %cst_36 : f32 to vector<8x32xf32>
    %109 = arith.addf %108, %107 : vector<8x32xf32>
    %110 = arith.divf %108, %109 : vector<8x32xf32>
    %111 = vector.extract_strided_slice %91 {offsets = [0, 256], sizes = [8, 32], strides = [1, 1]} : vector<8x384xf32> to vector<8x32xf32>
    %112 = vector.extract_strided_slice %94 {offsets = [0, 256], sizes = [8, 32], strides = [1, 1]} : vector<8x384xf32> to vector<8x32xf32>
    %113 = arith.mulf %102, %112 : vector<8x32xf32>
    %114 = arith.addf %111, %113 : vector<8x32xf32>
    %115 = math.tanh %114 : vector<8x32xf32>
    %cst_37 = arith.constant 1.000000e+00 : f32
    %116 = vector.broadcast %cst_37 : f32 to vector<8x32xf32>
    %117 = arith.subf %116, %110 : vector<8x32xf32>
    %118 = arith.mulf %117, %115 : vector<8x32xf32>
    %119 = arith.mulf %110, %55 : vector<8x32xf32>
    %120 = arith.addf %118, %119 : vector<8x32xf32>
    %121 = arith.truncf %120 : vector<8x32xf32> to vector<8x32xbf16>
    %cst_38 = arith.constant dense<0.000000e+00> : vector<8x384xf32>
    %122 = tpu.matmul %121, %9, %cst_38 {dimension_numbers = #tpu.dot_dimension_numbers<[1], [0], [0], [1], [0, 0, 1, 1], [], []>} : vector<8x32xbf16>, vector<32x384xbf16>, vector<8x384xf32> -> vector<8x384xf32>
    %123 = arith.addf %122, %20 : vector<8x384xf32>
    %124 = arith.truncf %87 : vector<8x32xf32> to vector<8x32xbf16>
    %cst_39 = arith.constant dense<0.000000e+00> : vector<8x384xf32>
    %125 = tpu.matmul %124, %11, %cst_39 {dimension_numbers = #tpu.dot_dimension_numbers<[1], [0], [0], [1], [0, 0, 1, 1], [], []>} : vector<8x32xbf16>, vector<32x384xbf16>, vector<8x384xf32> -> vector<8x384xf32>
    %126 = arith.addf %125, %17 : vector<8x384xf32>
    %127 = vector.extract_strided_slice %123 {offsets = [0, 0], sizes = [8, 32], strides = [1, 1]} : vector<8x384xf32> to vector<8x32xf32>
    %128 = vector.extract_strided_slice %126 {offsets = [0, 0], sizes = [8, 32], strides = [1, 1]} : vector<8x384xf32> to vector<8x32xf32>
    %129 = arith.addf %127, %128 : vector<8x32xf32>
    %130 = arith.negf %129 : vector<8x32xf32>
    %131 = math.exp %130 : vector<8x32xf32>
    %cst_40 = arith.constant 1.000000e+00 : f32
    %132 = vector.broadcast %cst_40 : f32 to vector<8x32xf32>
    %133 = arith.addf %132, %131 : vector<8x32xf32>
    %134 = arith.divf %132, %133 : vector<8x32xf32>
    %135 = vector.extract_strided_slice %123 {offsets = [0, 128], sizes = [8, 32], strides = [1, 1]} : vector<8x384xf32> to vector<8x32xf32>
    %136 = vector.extract_strided_slice %126 {offsets = [0, 128], sizes = [8, 32], strides = [1, 1]} : vector<8x384xf32> to vector<8x32xf32>
    %137 = arith.addf %135, %136 : vector<8x32xf32>
    %138 = arith.negf %137 : vector<8x32xf32>
    %139 = math.exp %138 : vector<8x32xf32>
    %cst_41 = arith.constant 1.000000e+00 : f32
    %140 = vector.broadcast %cst_41 : f32 to vector<8x32xf32>
    %141 = arith.addf %140, %139 : vector<8x32xf32>
    %142 = arith.divf %140, %141 : vector<8x32xf32>
    %143 = vector.extract_strided_slice %123 {offsets = [0, 256], sizes = [8, 32], strides = [1, 1]} : vector<8x384xf32> to vector<8x32xf32>
    %144 = vector.extract_strided_slice %126 {offsets = [0, 256], sizes = [8, 32], strides = [1, 1]} : vector<8x384xf32> to vector<8x32xf32>
    %145 = arith.mulf %134, %144 : vector<8x32xf32>
    %146 = arith.addf %143, %145 : vector<8x32xf32>
    %147 = math.tanh %146 : vector<8x32xf32>
    %cst_42 = arith.constant 1.000000e+00 : f32
    %148 = vector.broadcast %cst_42 : f32 to vector<8x32xf32>
    %149 = arith.subf %148, %142 : vector<8x32xf32>
    %150 = arith.mulf %149, %147 : vector<8x32xf32>
    %151 = arith.mulf %142, %87 : vector<8x32xf32>
    %152 = arith.addf %150, %151 : vector<8x32xf32>
    %c2_i32 = arith.constant 2 : i32
    %c8_i32_43 = arith.constant 8 : i32
    %153 = arith.muli %c2_i32, %c8_i32_43 : i32
    %154 = tpu.assume_multiple %153, 8 : i32
    %155 = arith.index_cast %154 : i32 to index
    %c0_44 = arith.constant 0 : index
    %156 = vector.load %arg13[%155, %c0_44] : memref<64x384xf32, #tpu.memory_space<vmem>>, vector<8x384xf32>
    %157 = arith.truncf %120 : vector<8x32xf32> to vector<8x32xbf16>
    %cst_45 = arith.constant dense<0.000000e+00> : vector<8x384xf32>
    %158 = tpu.matmul %157, %10, %cst_45 {dimension_numbers = #tpu.dot_dimension_numbers<[1], [0], [0], [1], [0, 0, 1, 1], [], []>} : vector<8x32xbf16>, vector<32x384xbf16>, vector<8x384xf32> -> vector<8x384xf32>
    %159 = arith.addf %158, %14 : vector<8x384xf32>
    %160 = vector.extract_strided_slice %156 {offsets = [0, 0], sizes = [8, 32], strides = [1, 1]} : vector<8x384xf32> to vector<8x32xf32>
    %161 = vector.extract_strided_slice %159 {offsets = [0, 0], sizes = [8, 32], strides = [1, 1]} : vector<8x384xf32> to vector<8x32xf32>
    %162 = arith.addf %160, %161 : vector<8x32xf32>
    %163 = arith.negf %162 : vector<8x32xf32>
    %164 = math.exp %163 : vector<8x32xf32>
    %cst_46 = arith.constant 1.000000e+00 : f32
    %165 = vector.broadcast %cst_46 : f32 to vector<8x32xf32>
    %166 = arith.addf %165, %164 : vector<8x32xf32>
    %167 = arith.divf %165, %166 : vector<8x32xf32>
    %168 = vector.extract_strided_slice %156 {offsets = [0, 128], sizes = [8, 32], strides = [1, 1]} : vector<8x384xf32> to vector<8x32xf32>
    %169 = vector.extract_strided_slice %159 {offsets = [0, 128], sizes = [8, 32], strides = [1, 1]} : vector<8x384xf32> to vector<8x32xf32>
    %170 = arith.addf %168, %169 : vector<8x32xf32>
    %171 = arith.negf %170 : vector<8x32xf32>
    %172 = math.exp %171 : vector<8x32xf32>
    %cst_47 = arith.constant 1.000000e+00 : f32
    %173 = vector.broadcast %cst_47 : f32 to vector<8x32xf32>
    %174 = arith.addf %173, %172 : vector<8x32xf32>
    %175 = arith.divf %173, %174 : vector<8x32xf32>
    %176 = vector.extract_strided_slice %156 {offsets = [0, 256], sizes = [8, 32], strides = [1, 1]} : vector<8x384xf32> to vector<8x32xf32>
    %177 = vector.extract_strided_slice %159 {offsets = [0, 256], sizes = [8, 32], strides = [1, 1]} : vector<8x384xf32> to vector<8x32xf32>
    %178 = arith.mulf %167, %177 : vector<8x32xf32>
    %179 = arith.addf %176, %178 : vector<8x32xf32>
    %180 = math.tanh %179 : vector<8x32xf32>
    %cst_48 = arith.constant 1.000000e+00 : f32
    %181 = vector.broadcast %cst_48 : f32 to vector<8x32xf32>
    %182 = arith.subf %181, %175 : vector<8x32xf32>
    %183 = arith.mulf %182, %180 : vector<8x32xf32>
    %184 = arith.mulf %175, %120 : vector<8x32xf32>
    %185 = arith.addf %183, %184 : vector<8x32xf32>
    %186 = arith.truncf %185 : vector<8x32xf32> to vector<8x32xbf16>
    %cst_49 = arith.constant dense<0.000000e+00> : vector<8x384xf32>
    %187 = tpu.matmul %186, %9, %cst_49 {dimension_numbers = #tpu.dot_dimension_numbers<[1], [0], [0], [1], [0, 0, 1, 1], [], []>} : vector<8x32xbf16>, vector<32x384xbf16>, vector<8x384xf32> -> vector<8x384xf32>
    %188 = arith.addf %187, %20 : vector<8x384xf32>
    %189 = arith.truncf %152 : vector<8x32xf32> to vector<8x32xbf16>
    %cst_50 = arith.constant dense<0.000000e+00> : vector<8x384xf32>
    %190 = tpu.matmul %189, %11, %cst_50 {dimension_numbers = #tpu.dot_dimension_numbers<[1], [0], [0], [1], [0, 0, 1, 1], [], []>} : vector<8x32xbf16>, vector<32x384xbf16>, vector<8x384xf32> -> vector<8x384xf32>
    %191 = arith.addf %190, %17 : vector<8x384xf32>
    %192 = vector.extract_strided_slice %188 {offsets = [0, 0], sizes = [8, 32], strides = [1, 1]} : vector<8x384xf32> to vector<8x32xf32>
    %193 = vector.extract_strided_slice %191 {offsets = [0, 0], sizes = [8, 32], strides = [1, 1]} : vector<8x384xf32> to vector<8x32xf32>
    %194 = arith.addf %192, %193 : vector<8x32xf32>
    %195 = arith.negf %194 : vector<8x32xf32>
    %196 = math.exp %195 : vector<8x32xf32>
    %cst_51 = arith.constant 1.000000e+00 : f32
    %197 = vector.broadcast %cst_51 : f32 to vector<8x32xf32>
    %198 = arith.addf %197, %196 : vector<8x32xf32>
    %199 = arith.divf %197, %198 : vector<8x32xf32>
    %200 = vector.extract_strided_slice %188 {offsets = [0, 128], sizes = [8, 32], strides = [1, 1]} : vector<8x384xf32> to vector<8x32xf32>
    %201 = vector.extract_strided_slice %191 {offsets = [0, 128], sizes = [8, 32], strides = [1, 1]} : vector<8x384xf32> to vector<8x32xf32>
    %202 = arith.addf %200, %201 : vector<8x32xf32>
    %203 = arith.negf %202 : vector<8x32xf32>
    %204 = math.exp %203 : vector<8x32xf32>
    %cst_52 = arith.constant 1.000000e+00 : f32
    %205 = vector.broadcast %cst_52 : f32 to vector<8x32xf32>
    %206 = arith.addf %205, %204 : vector<8x32xf32>
    %207 = arith.divf %205, %206 : vector<8x32xf32>
    %208 = vector.extract_strided_slice %188 {offsets = [0, 256], sizes = [8, 32], strides = [1, 1]} : vector<8x384xf32> to vector<8x32xf32>
    %209 = vector.extract_strided_slice %191 {offsets = [0, 256], sizes = [8, 32], strides = [1, 1]} : vector<8x384xf32> to vector<8x32xf32>
    %210 = arith.mulf %199, %209 : vector<8x32xf32>
    %211 = arith.addf %208, %210 : vector<8x32xf32>
    %212 = math.tanh %211 : vector<8x32xf32>
    %cst_53 = arith.constant 1.000000e+00 : f32
    %213 = vector.broadcast %cst_53 : f32 to vector<8x32xf32>
    %214 = arith.subf %213, %207 : vector<8x32xf32>
    %215 = arith.mulf %214, %212 : vector<8x32xf32>
    %216 = arith.mulf %207, %152 : vector<8x32xf32>
    %217 = arith.addf %215, %216 : vector<8x32xf32>
    %c3_i32 = arith.constant 3 : i32
    %c8_i32_54 = arith.constant 8 : i32
    %218 = arith.muli %c3_i32, %c8_i32_54 : i32
    %219 = tpu.assume_multiple %218, 8 : i32
    %220 = arith.index_cast %219 : i32 to index
    %c0_55 = arith.constant 0 : index
    %221 = vector.load %arg13[%220, %c0_55] : memref<64x384xf32, #tpu.memory_space<vmem>>, vector<8x384xf32>
    %222 = arith.truncf %185 : vector<8x32xf32> to vector<8x32xbf16>
    %cst_56 = arith.constant dense<0.000000e+00> : vector<8x384xf32>
    %223 = tpu.matmul %222, %10, %cst_56 {dimension_numbers = #tpu.dot_dimension_numbers<[1], [0], [0], [1], [0, 0, 1, 1], [], []>} : vector<8x32xbf16>, vector<32x384xbf16>, vector<8x384xf32> -> vector<8x384xf32>
    %224 = arith.addf %223, %14 : vector<8x384xf32>
    %225 = vector.extract_strided_slice %221 {offsets = [0, 0], sizes = [8, 32], strides = [1, 1]} : vector<8x384xf32> to vector<8x32xf32>
    %226 = vector.extract_strided_slice %224 {offsets = [0, 0], sizes = [8, 32], strides = [1, 1]} : vector<8x384xf32> to vector<8x32xf32>
    %227 = arith.addf %225, %226 : vector<8x32xf32>
    %228 = arith.negf %227 : vector<8x32xf32>
    %229 = math.exp %228 : vector<8x32xf32>
    %cst_57 = arith.constant 1.000000e+00 : f32
    %230 = vector.broadcast %cst_57 : f32 to vector<8x32xf32>
    %231 = arith.addf %230, %229 : vector<8x32xf32>
    %232 = arith.divf %230, %231 : vector<8x32xf32>
    %233 = vector.extract_strided_slice %221 {offsets = [0, 128], sizes = [8, 32], strides = [1, 1]} : vector<8x384xf32> to vector<8x32xf32>
    %234 = vector.extract_strided_slice %224 {offsets = [0, 128], sizes = [8, 32], strides = [1, 1]} : vector<8x384xf32> to vector<8x32xf32>
    %235 = arith.addf %233, %234 : vector<8x32xf32>
    %236 = arith.negf %235 : vector<8x32xf32>
    %237 = math.exp %236 : vector<8x32xf32>
    %cst_58 = arith.constant 1.000000e+00 : f32
    %238 = vector.broadcast %cst_58 : f32 to vector<8x32xf32>
    %239 = arith.addf %238, %237 : vector<8x32xf32>
    %240 = arith.divf %238, %239 : vector<8x32xf32>
    %241 = vector.extract_strided_slice %221 {offsets = [0, 256], sizes = [8, 32], strides = [1, 1]} : vector<8x384xf32> to vector<8x32xf32>
    %242 = vector.extract_strided_slice %224 {offsets = [0, 256], sizes = [8, 32], strides = [1, 1]} : vector<8x384xf32> to vector<8x32xf32>
    %243 = arith.mulf %232, %242 : vector<8x32xf32>
    %244 = arith.addf %241, %243 : vector<8x32xf32>
    %245 = math.tanh %244 : vector<8x32xf32>
    %cst_59 = arith.constant 1.000000e+00 : f32
    %246 = vector.broadcast %cst_59 : f32 to vector<8x32xf32>
    %247 = arith.subf %246, %240 : vector<8x32xf32>
    %248 = arith.mulf %247, %245 : vector<8x32xf32>
    %249 = arith.mulf %240, %185 : vector<8x32xf32>
    %250 = arith.addf %248, %249 : vector<8x32xf32>
    %251 = arith.truncf %250 : vector<8x32xf32> to vector<8x32xbf16>
    %cst_60 = arith.constant dense<0.000000e+00> : vector<8x384xf32>
    %252 = tpu.matmul %251, %9, %cst_60 {dimension_numbers = #tpu.dot_dimension_numbers<[1], [0], [0], [1], [0, 0, 1, 1], [], []>} : vector<8x32xbf16>, vector<32x384xbf16>, vector<8x384xf32> -> vector<8x384xf32>
    %253 = arith.addf %252, %20 : vector<8x384xf32>
    %254 = arith.truncf %217 : vector<8x32xf32> to vector<8x32xbf16>
    %cst_61 = arith.constant dense<0.000000e+00> : vector<8x384xf32>
    %255 = tpu.matmul %254, %11, %cst_61 {dimension_numbers = #tpu.dot_dimension_numbers<[1], [0], [0], [1], [0, 0, 1, 1], [], []>} : vector<8x32xbf16>, vector<32x384xbf16>, vector<8x384xf32> -> vector<8x384xf32>
    %256 = arith.addf %255, %17 : vector<8x384xf32>
    %257 = vector.extract_strided_slice %253 {offsets = [0, 0], sizes = [8, 32], strides = [1, 1]} : vector<8x384xf32> to vector<8x32xf32>
    %258 = vector.extract_strided_slice %256 {offsets = [0, 0], sizes = [8, 32], strides = [1, 1]} : vector<8x384xf32> to vector<8x32xf32>
    %259 = arith.addf %257, %258 : vector<8x32xf32>
    %260 = arith.negf %259 : vector<8x32xf32>
    %261 = math.exp %260 : vector<8x32xf32>
    %cst_62 = arith.constant 1.000000e+00 : f32
    %262 = vector.broadcast %cst_62 : f32 to vector<8x32xf32>
    %263 = arith.addf %262, %261 : vector<8x32xf32>
    %264 = arith.divf %262, %263 : vector<8x32xf32>
    %265 = vector.extract_strided_slice %253 {offsets = [0, 128], sizes = [8, 32], strides = [1, 1]} : vector<8x384xf32> to vector<8x32xf32>
    %266 = vector.extract_strided_slice %256 {offsets = [0, 128], sizes = [8, 32], strides = [1, 1]} : vector<8x384xf32> to vector<8x32xf32>
    %267 = arith.addf %265, %266 : vector<8x32xf32>
    %268 = arith.negf %267 : vector<8x32xf32>
    %269 = math.exp %268 : vector<8x32xf32>
    %cst_63 = arith.constant 1.000000e+00 : f32
    %270 = vector.broadcast %cst_63 : f32 to vector<8x32xf32>
    %271 = arith.addf %270, %269 : vector<8x32xf32>
    %272 = arith.divf %270, %271 : vector<8x32xf32>
    %273 = vector.extract_strided_slice %253 {offsets = [0, 256], sizes = [8, 32], strides = [1, 1]} : vector<8x384xf32> to vector<8x32xf32>
    %274 = vector.extract_strided_slice %256 {offsets = [0, 256], sizes = [8, 32], strides = [1, 1]} : vector<8x384xf32> to vector<8x32xf32>
    %275 = arith.mulf %264, %274 : vector<8x32xf32>
    %276 = arith.addf %273, %275 : vector<8x32xf32>
    %277 = math.tanh %276 : vector<8x32xf32>
    %cst_64 = arith.constant 1.000000e+00 : f32
    %278 = vector.broadcast %cst_64 : f32 to vector<8x32xf32>
    %279 = arith.subf %278, %272 : vector<8x32xf32>
    %280 = arith.mulf %279, %277 : vector<8x32xf32>
    %281 = arith.mulf %272, %217 : vector<8x32xf32>
    %282 = arith.addf %280, %281 : vector<8x32xf32>
    %c4_i32 = arith.constant 4 : i32
    %c8_i32_65 = arith.constant 8 : i32
    %283 = arith.muli %c4_i32, %c8_i32_65 : i32
    %284 = tpu.assume_multiple %283, 8 : i32
    %285 = arith.index_cast %284 : i32 to index
    %c0_66 = arith.constant 0 : index
    %286 = vector.load %arg13[%285, %c0_66] : memref<64x384xf32, #tpu.memory_space<vmem>>, vector<8x384xf32>
    %287 = arith.truncf %250 : vector<8x32xf32> to vector<8x32xbf16>
    %cst_67 = arith.constant dense<0.000000e+00> : vector<8x384xf32>
    %288 = tpu.matmul %287, %10, %cst_67 {dimension_numbers = #tpu.dot_dimension_numbers<[1], [0], [0], [1], [0, 0, 1, 1], [], []>} : vector<8x32xbf16>, vector<32x384xbf16>, vector<8x384xf32> -> vector<8x384xf32>
    %289 = arith.addf %288, %14 : vector<8x384xf32>
    %290 = vector.extract_strided_slice %286 {offsets = [0, 0], sizes = [8, 32], strides = [1, 1]} : vector<8x384xf32> to vector<8x32xf32>
    %291 = vector.extract_strided_slice %289 {offsets = [0, 0], sizes = [8, 32], strides = [1, 1]} : vector<8x384xf32> to vector<8x32xf32>
    %292 = arith.addf %290, %291 : vector<8x32xf32>
    %293 = arith.negf %292 : vector<8x32xf32>
    %294 = math.exp %293 : vector<8x32xf32>
    %cst_68 = arith.constant 1.000000e+00 : f32
    %295 = vector.broadcast %cst_68 : f32 to vector<8x32xf32>
    %296 = arith.addf %295, %294 : vector<8x32xf32>
    %297 = arith.divf %295, %296 : vector<8x32xf32>
    %298 = vector.extract_strided_slice %286 {offsets = [0, 128], sizes = [8, 32], strides = [1, 1]} : vector<8x384xf32> to vector<8x32xf32>
    %299 = vector.extract_strided_slice %289 {offsets = [0, 128], sizes = [8, 32], strides = [1, 1]} : vector<8x384xf32> to vector<8x32xf32>
    %300 = arith.addf %298, %299 : vector<8x32xf32>
    %301 = arith.negf %300 : vector<8x32xf32>
    %302 = math.exp %301 : vector<8x32xf32>
    %cst_69 = arith.constant 1.000000e+00 : f32
    %303 = vector.broadcast %cst_69 : f32 to vector<8x32xf32>
    %304 = arith.addf %303, %302 : vector<8x32xf32>
    %305 = arith.divf %303, %304 : vector<8x32xf32>
    %306 = vector.extract_strided_slice %286 {offsets = [0, 256], sizes = [8, 32], strides = [1, 1]} : vector<8x384xf32> to vector<8x32xf32>
    %307 = vector.extract_strided_slice %289 {offsets = [0, 256], sizes = [8, 32], strides = [1, 1]} : vector<8x384xf32> to vector<8x32xf32>
    %308 = arith.mulf %297, %307 : vector<8x32xf32>
    %309 = arith.addf %306, %308 : vector<8x32xf32>
    %310 = math.tanh %309 : vector<8x32xf32>
    %cst_70 = arith.constant 1.000000e+00 : f32
    %311 = vector.broadcast %cst_70 : f32 to vector<8x32xf32>
    %312 = arith.subf %311, %305 : vector<8x32xf32>
    %313 = arith.mulf %312, %310 : vector<8x32xf32>
    %314 = arith.mulf %305, %250 : vector<8x32xf32>
    %315 = arith.addf %313, %314 : vector<8x32xf32>
    %316 = arith.truncf %315 : vector<8x32xf32> to vector<8x32xbf16>
    %cst_71 = arith.constant dense<0.000000e+00> : vector<8x384xf32>
    %317 = tpu.matmul %316, %9, %cst_71 {dimension_numbers = #tpu.dot_dimension_numbers<[1], [0], [0], [1], [0, 0, 1, 1], [], []>} : vector<8x32xbf16>, vector<32x384xbf16>, vector<8x384xf32> -> vector<8x384xf32>
    %318 = arith.addf %317, %20 : vector<8x384xf32>
    %319 = arith.truncf %282 : vector<8x32xf32> to vector<8x32xbf16>
    %cst_72 = arith.constant dense<0.000000e+00> : vector<8x384xf32>
    %320 = tpu.matmul %319, %11, %cst_72 {dimension_numbers = #tpu.dot_dimension_numbers<[1], [0], [0], [1], [0, 0, 1, 1], [], []>} : vector<8x32xbf16>, vector<32x384xbf16>, vector<8x384xf32> -> vector<8x384xf32>
    %321 = arith.addf %320, %17 : vector<8x384xf32>
    %322 = vector.extract_strided_slice %318 {offsets = [0, 0], sizes = [8, 32], strides = [1, 1]} : vector<8x384xf32> to vector<8x32xf32>
    %323 = vector.extract_strided_slice %321 {offsets = [0, 0], sizes = [8, 32], strides = [1, 1]} : vector<8x384xf32> to vector<8x32xf32>
    %324 = arith.addf %322, %323 : vector<8x32xf32>
    %325 = arith.negf %324 : vector<8x32xf32>
    %326 = math.exp %325 : vector<8x32xf32>
    %cst_73 = arith.constant 1.000000e+00 : f32
    %327 = vector.broadcast %cst_73 : f32 to vector<8x32xf32>
    %328 = arith.addf %327, %326 : vector<8x32xf32>
    %329 = arith.divf %327, %328 : vector<8x32xf32>
    %330 = vector.extract_strided_slice %318 {offsets = [0, 128], sizes = [8, 32], strides = [1, 1]} : vector<8x384xf32> to vector<8x32xf32>
    %331 = vector.extract_strided_slice %321 {offsets = [0, 128], sizes = [8, 32], strides = [1, 1]} : vector<8x384xf32> to vector<8x32xf32>
    %332 = arith.addf %330, %331 : vector<8x32xf32>
    %333 = arith.negf %332 : vector<8x32xf32>
    %334 = math.exp %333 : vector<8x32xf32>
    %cst_74 = arith.constant 1.000000e+00 : f32
    %335 = vector.broadcast %cst_74 : f32 to vector<8x32xf32>
    %336 = arith.addf %335, %334 : vector<8x32xf32>
    %337 = arith.divf %335, %336 : vector<8x32xf32>
    %338 = vector.extract_strided_slice %318 {offsets = [0, 256], sizes = [8, 32], strides = [1, 1]} : vector<8x384xf32> to vector<8x32xf32>
    %339 = vector.extract_strided_slice %321 {offsets = [0, 256], sizes = [8, 32], strides = [1, 1]} : vector<8x384xf32> to vector<8x32xf32>
    %340 = arith.mulf %329, %339 : vector<8x32xf32>
    %341 = arith.addf %338, %340 : vector<8x32xf32>
    %342 = math.tanh %341 : vector<8x32xf32>
    %cst_75 = arith.constant 1.000000e+00 : f32
    %343 = vector.broadcast %cst_75 : f32 to vector<8x32xf32>
    %344 = arith.subf %343, %337 : vector<8x32xf32>
    %345 = arith.mulf %344, %342 : vector<8x32xf32>
    %346 = arith.mulf %337, %282 : vector<8x32xf32>
    %347 = arith.addf %345, %346 : vector<8x32xf32>
    %c5_i32 = arith.constant 5 : i32
    %c8_i32_76 = arith.constant 8 : i32
    %348 = arith.muli %c5_i32, %c8_i32_76 : i32
    %349 = tpu.assume_multiple %348, 8 : i32
    %350 = arith.index_cast %349 : i32 to index
    %c0_77 = arith.constant 0 : index
    %351 = vector.load %arg13[%350, %c0_77] : memref<64x384xf32, #tpu.memory_space<vmem>>, vector<8x384xf32>
    %352 = arith.truncf %315 : vector<8x32xf32> to vector<8x32xbf16>
    %cst_78 = arith.constant dense<0.000000e+00> : vector<8x384xf32>
    %353 = tpu.matmul %352, %10, %cst_78 {dimension_numbers = #tpu.dot_dimension_numbers<[1], [0], [0], [1], [0, 0, 1, 1], [], []>} : vector<8x32xbf16>, vector<32x384xbf16>, vector<8x384xf32> -> vector<8x384xf32>
    %354 = arith.addf %353, %14 : vector<8x384xf32>
    %355 = vector.extract_strided_slice %351 {offsets = [0, 0], sizes = [8, 32], strides = [1, 1]} : vector<8x384xf32> to vector<8x32xf32>
    %356 = vector.extract_strided_slice %354 {offsets = [0, 0], sizes = [8, 32], strides = [1, 1]} : vector<8x384xf32> to vector<8x32xf32>
    %357 = arith.addf %355, %356 : vector<8x32xf32>
    %358 = arith.negf %357 : vector<8x32xf32>
    %359 = math.exp %358 : vector<8x32xf32>
    %cst_79 = arith.constant 1.000000e+00 : f32
    %360 = vector.broadcast %cst_79 : f32 to vector<8x32xf32>
    %361 = arith.addf %360, %359 : vector<8x32xf32>
    %362 = arith.divf %360, %361 : vector<8x32xf32>
    %363 = vector.extract_strided_slice %351 {offsets = [0, 128], sizes = [8, 32], strides = [1, 1]} : vector<8x384xf32> to vector<8x32xf32>
    %364 = vector.extract_strided_slice %354 {offsets = [0, 128], sizes = [8, 32], strides = [1, 1]} : vector<8x384xf32> to vector<8x32xf32>
    %365 = arith.addf %363, %364 : vector<8x32xf32>
    %366 = arith.negf %365 : vector<8x32xf32>
    %367 = math.exp %366 : vector<8x32xf32>
    %cst_80 = arith.constant 1.000000e+00 : f32
    %368 = vector.broadcast %cst_80 : f32 to vector<8x32xf32>
    %369 = arith.addf %368, %367 : vector<8x32xf32>
    %370 = arith.divf %368, %369 : vector<8x32xf32>
    %371 = vector.extract_strided_slice %351 {offsets = [0, 256], sizes = [8, 32], strides = [1, 1]} : vector<8x384xf32> to vector<8x32xf32>
    %372 = vector.extract_strided_slice %354 {offsets = [0, 256], sizes = [8, 32], strides = [1, 1]} : vector<8x384xf32> to vector<8x32xf32>
    %373 = arith.mulf %362, %372 : vector<8x32xf32>
    %374 = arith.addf %371, %373 : vector<8x32xf32>
    %375 = math.tanh %374 : vector<8x32xf32>
    %cst_81 = arith.constant 1.000000e+00 : f32
    %376 = vector.broadcast %cst_81 : f32 to vector<8x32xf32>
    %377 = arith.subf %376, %370 : vector<8x32xf32>
    %378 = arith.mulf %377, %375 : vector<8x32xf32>
    %379 = arith.mulf %370, %315 : vector<8x32xf32>
    %380 = arith.addf %378, %379 : vector<8x32xf32>
    %381 = arith.truncf %380 : vector<8x32xf32> to vector<8x32xbf16>
    %cst_82 = arith.constant dense<0.000000e+00> : vector<8x384xf32>
    %382 = tpu.matmul %381, %9, %cst_82 {dimension_numbers = #tpu.dot_dimension_numbers<[1], [0], [0], [1], [0, 0, 1, 1], [], []>} : vector<8x32xbf16>, vector<32x384xbf16>, vector<8x384xf32> -> vector<8x384xf32>
    %383 = arith.addf %382, %20 : vector<8x384xf32>
    %384 = arith.truncf %347 : vector<8x32xf32> to vector<8x32xbf16>
    %cst_83 = arith.constant dense<0.000000e+00> : vector<8x384xf32>
    %385 = tpu.matmul %384, %11, %cst_83 {dimension_numbers = #tpu.dot_dimension_numbers<[1], [0], [0], [1], [0, 0, 1, 1], [], []>} : vector<8x32xbf16>, vector<32x384xbf16>, vector<8x384xf32> -> vector<8x384xf32>
    %386 = arith.addf %385, %17 : vector<8x384xf32>
    %387 = vector.extract_strided_slice %383 {offsets = [0, 0], sizes = [8, 32], strides = [1, 1]} : vector<8x384xf32> to vector<8x32xf32>
    %388 = vector.extract_strided_slice %386 {offsets = [0, 0], sizes = [8, 32], strides = [1, 1]} : vector<8x384xf32> to vector<8x32xf32>
    %389 = arith.addf %387, %388 : vector<8x32xf32>
    %390 = arith.negf %389 : vector<8x32xf32>
    %391 = math.exp %390 : vector<8x32xf32>
    %cst_84 = arith.constant 1.000000e+00 : f32
    %392 = vector.broadcast %cst_84 : f32 to vector<8x32xf32>
    %393 = arith.addf %392, %391 : vector<8x32xf32>
    %394 = arith.divf %392, %393 : vector<8x32xf32>
    %395 = vector.extract_strided_slice %383 {offsets = [0, 128], sizes = [8, 32], strides = [1, 1]} : vector<8x384xf32> to vector<8x32xf32>
    %396 = vector.extract_strided_slice %386 {offsets = [0, 128], sizes = [8, 32], strides = [1, 1]} : vector<8x384xf32> to vector<8x32xf32>
    %397 = arith.addf %395, %396 : vector<8x32xf32>
    %398 = arith.negf %397 : vector<8x32xf32>
    %399 = math.exp %398 : vector<8x32xf32>
    %cst_85 = arith.constant 1.000000e+00 : f32
    %400 = vector.broadcast %cst_85 : f32 to vector<8x32xf32>
    %401 = arith.addf %400, %399 : vector<8x32xf32>
    %402 = arith.divf %400, %401 : vector<8x32xf32>
    %403 = vector.extract_strided_slice %383 {offsets = [0, 256], sizes = [8, 32], strides = [1, 1]} : vector<8x384xf32> to vector<8x32xf32>
    %404 = vector.extract_strided_slice %386 {offsets = [0, 256], sizes = [8, 32], strides = [1, 1]} : vector<8x384xf32> to vector<8x32xf32>
    %405 = arith.mulf %394, %404 : vector<8x32xf32>
    %406 = arith.addf %403, %405 : vector<8x32xf32>
    %407 = math.tanh %406 : vector<8x32xf32>
    %cst_86 = arith.constant 1.000000e+00 : f32
    %408 = vector.broadcast %cst_86 : f32 to vector<8x32xf32>
    %409 = arith.subf %408, %402 : vector<8x32xf32>
    %410 = arith.mulf %409, %407 : vector<8x32xf32>
    %411 = arith.mulf %402, %347 : vector<8x32xf32>
    %412 = arith.addf %410, %411 : vector<8x32xf32>
    %c6_i32 = arith.constant 6 : i32
    %c8_i32_87 = arith.constant 8 : i32
    %413 = arith.muli %c6_i32, %c8_i32_87 : i32
    %414 = tpu.assume_multiple %413, 8 : i32
    %415 = arith.index_cast %414 : i32 to index
    %c0_88 = arith.constant 0 : index
    %416 = vector.load %arg13[%415, %c0_88] : memref<64x384xf32, #tpu.memory_space<vmem>>, vector<8x384xf32>
    %417 = arith.truncf %380 : vector<8x32xf32> to vector<8x32xbf16>
    %cst_89 = arith.constant dense<0.000000e+00> : vector<8x384xf32>
    %418 = tpu.matmul %417, %10, %cst_89 {dimension_numbers = #tpu.dot_dimension_numbers<[1], [0], [0], [1], [0, 0, 1, 1], [], []>} : vector<8x32xbf16>, vector<32x384xbf16>, vector<8x384xf32> -> vector<8x384xf32>
    %419 = arith.addf %418, %14 : vector<8x384xf32>
    %420 = vector.extract_strided_slice %416 {offsets = [0, 0], sizes = [8, 32], strides = [1, 1]} : vector<8x384xf32> to vector<8x32xf32>
    %421 = vector.extract_strided_slice %419 {offsets = [0, 0], sizes = [8, 32], strides = [1, 1]} : vector<8x384xf32> to vector<8x32xf32>
    %422 = arith.addf %420, %421 : vector<8x32xf32>
    %423 = arith.negf %422 : vector<8x32xf32>
    %424 = math.exp %423 : vector<8x32xf32>
    %cst_90 = arith.constant 1.000000e+00 : f32
    %425 = vector.broadcast %cst_90 : f32 to vector<8x32xf32>
    %426 = arith.addf %425, %424 : vector<8x32xf32>
    %427 = arith.divf %425, %426 : vector<8x32xf32>
    %428 = vector.extract_strided_slice %416 {offsets = [0, 128], sizes = [8, 32], strides = [1, 1]} : vector<8x384xf32> to vector<8x32xf32>
    %429 = vector.extract_strided_slice %419 {offsets = [0, 128], sizes = [8, 32], strides = [1, 1]} : vector<8x384xf32> to vector<8x32xf32>
    %430 = arith.addf %428, %429 : vector<8x32xf32>
    %431 = arith.negf %430 : vector<8x32xf32>
    %432 = math.exp %431 : vector<8x32xf32>
    %cst_91 = arith.constant 1.000000e+00 : f32
    %433 = vector.broadcast %cst_91 : f32 to vector<8x32xf32>
    %434 = arith.addf %433, %432 : vector<8x32xf32>
    %435 = arith.divf %433, %434 : vector<8x32xf32>
    %436 = vector.extract_strided_slice %416 {offsets = [0, 256], sizes = [8, 32], strides = [1, 1]} : vector<8x384xf32> to vector<8x32xf32>
    %437 = vector.extract_strided_slice %419 {offsets = [0, 256], sizes = [8, 32], strides = [1, 1]} : vector<8x384xf32> to vector<8x32xf32>
    %438 = arith.mulf %427, %437 : vector<8x32xf32>
    %439 = arith.addf %436, %438 : vector<8x32xf32>
    %440 = math.tanh %439 : vector<8x32xf32>
    %cst_92 = arith.constant 1.000000e+00 : f32
    %441 = vector.broadcast %cst_92 : f32 to vector<8x32xf32>
    %442 = arith.subf %441, %435 : vector<8x32xf32>
    %443 = arith.mulf %442, %440 : vector<8x32xf32>
    %444 = arith.mulf %435, %380 : vector<8x32xf32>
    %445 = arith.addf %443, %444 : vector<8x32xf32>
    %446 = arith.truncf %445 : vector<8x32xf32> to vector<8x32xbf16>
    %cst_93 = arith.constant dense<0.000000e+00> : vector<8x384xf32>
    %447 = tpu.matmul %446, %9, %cst_93 {dimension_numbers = #tpu.dot_dimension_numbers<[1], [0], [0], [1], [0, 0, 1, 1], [], []>} : vector<8x32xbf16>, vector<32x384xbf16>, vector<8x384xf32> -> vector<8x384xf32>
    %448 = arith.addf %447, %20 : vector<8x384xf32>
    %449 = arith.truncf %412 : vector<8x32xf32> to vector<8x32xbf16>
    %cst_94 = arith.constant dense<0.000000e+00> : vector<8x384xf32>
    %450 = tpu.matmul %449, %11, %cst_94 {dimension_numbers = #tpu.dot_dimension_numbers<[1], [0], [0], [1], [0, 0, 1, 1], [], []>} : vector<8x32xbf16>, vector<32x384xbf16>, vector<8x384xf32> -> vector<8x384xf32>
    %451 = arith.addf %450, %17 : vector<8x384xf32>
    %452 = vector.extract_strided_slice %448 {offsets = [0, 0], sizes = [8, 32], strides = [1, 1]} : vector<8x384xf32> to vector<8x32xf32>
    %453 = vector.extract_strided_slice %451 {offsets = [0, 0], sizes = [8, 32], strides = [1, 1]} : vector<8x384xf32> to vector<8x32xf32>
    %454 = arith.addf %452, %453 : vector<8x32xf32>
    %455 = arith.negf %454 : vector<8x32xf32>
    %456 = math.exp %455 : vector<8x32xf32>
    %cst_95 = arith.constant 1.000000e+00 : f32
    %457 = vector.broadcast %cst_95 : f32 to vector<8x32xf32>
    %458 = arith.addf %457, %456 : vector<8x32xf32>
    %459 = arith.divf %457, %458 : vector<8x32xf32>
    %460 = vector.extract_strided_slice %448 {offsets = [0, 128], sizes = [8, 32], strides = [1, 1]} : vector<8x384xf32> to vector<8x32xf32>
    %461 = vector.extract_strided_slice %451 {offsets = [0, 128], sizes = [8, 32], strides = [1, 1]} : vector<8x384xf32> to vector<8x32xf32>
    %462 = arith.addf %460, %461 : vector<8x32xf32>
    %463 = arith.negf %462 : vector<8x32xf32>
    %464 = math.exp %463 : vector<8x32xf32>
    %cst_96 = arith.constant 1.000000e+00 : f32
    %465 = vector.broadcast %cst_96 : f32 to vector<8x32xf32>
    %466 = arith.addf %465, %464 : vector<8x32xf32>
    %467 = arith.divf %465, %466 : vector<8x32xf32>
    %468 = vector.extract_strided_slice %448 {offsets = [0, 256], sizes = [8, 32], strides = [1, 1]} : vector<8x384xf32> to vector<8x32xf32>
    %469 = vector.extract_strided_slice %451 {offsets = [0, 256], sizes = [8, 32], strides = [1, 1]} : vector<8x384xf32> to vector<8x32xf32>
    %470 = arith.mulf %459, %469 : vector<8x32xf32>
    %471 = arith.addf %468, %470 : vector<8x32xf32>
    %472 = math.tanh %471 : vector<8x32xf32>
    %cst_97 = arith.constant 1.000000e+00 : f32
    %473 = vector.broadcast %cst_97 : f32 to vector<8x32xf32>
    %474 = arith.subf %473, %467 : vector<8x32xf32>
    %475 = arith.mulf %474, %472 : vector<8x32xf32>
    %476 = arith.mulf %467, %412 : vector<8x32xf32>
    %477 = arith.addf %475, %476 : vector<8x32xf32>
    %c7_i32 = arith.constant 7 : i32
    %c8_i32_98 = arith.constant 8 : i32
    %478 = arith.muli %c7_i32, %c8_i32_98 : i32
    %479 = tpu.assume_multiple %478, 8 : i32
    %480 = arith.index_cast %479 : i32 to index
    %c0_99 = arith.constant 0 : index
    %481 = vector.load %arg13[%480, %c0_99] : memref<64x384xf32, #tpu.memory_space<vmem>>, vector<8x384xf32>
    %482 = arith.truncf %445 : vector<8x32xf32> to vector<8x32xbf16>
    %cst_100 = arith.constant dense<0.000000e+00> : vector<8x384xf32>
    %483 = tpu.matmul %482, %10, %cst_100 {dimension_numbers = #tpu.dot_dimension_numbers<[1], [0], [0], [1], [0, 0, 1, 1], [], []>} : vector<8x32xbf16>, vector<32x384xbf16>, vector<8x384xf32> -> vector<8x384xf32>
    %484 = arith.addf %483, %14 : vector<8x384xf32>
    %485 = vector.extract_strided_slice %481 {offsets = [0, 0], sizes = [8, 32], strides = [1, 1]} : vector<8x384xf32> to vector<8x32xf32>
    %486 = vector.extract_strided_slice %484 {offsets = [0, 0], sizes = [8, 32], strides = [1, 1]} : vector<8x384xf32> to vector<8x32xf32>
    %487 = arith.addf %485, %486 : vector<8x32xf32>
    %488 = arith.negf %487 : vector<8x32xf32>
    %489 = math.exp %488 : vector<8x32xf32>
    %cst_101 = arith.constant 1.000000e+00 : f32
    %490 = vector.broadcast %cst_101 : f32 to vector<8x32xf32>
    %491 = arith.addf %490, %489 : vector<8x32xf32>
    %492 = arith.divf %490, %491 : vector<8x32xf32>
    %493 = vector.extract_strided_slice %481 {offsets = [0, 128], sizes = [8, 32], strides = [1, 1]} : vector<8x384xf32> to vector<8x32xf32>
    %494 = vector.extract_strided_slice %484 {offsets = [0, 128], sizes = [8, 32], strides = [1, 1]} : vector<8x384xf32> to vector<8x32xf32>
    %495 = arith.addf %493, %494 : vector<8x32xf32>
    %496 = arith.negf %495 : vector<8x32xf32>
    %497 = math.exp %496 : vector<8x32xf32>
    %cst_102 = arith.constant 1.000000e+00 : f32
    %498 = vector.broadcast %cst_102 : f32 to vector<8x32xf32>
    %499 = arith.addf %498, %497 : vector<8x32xf32>
    %500 = arith.divf %498, %499 : vector<8x32xf32>
    %501 = vector.extract_strided_slice %481 {offsets = [0, 256], sizes = [8, 32], strides = [1, 1]} : vector<8x384xf32> to vector<8x32xf32>
    %502 = vector.extract_strided_slice %484 {offsets = [0, 256], sizes = [8, 32], strides = [1, 1]} : vector<8x384xf32> to vector<8x32xf32>
    %503 = arith.mulf %492, %502 : vector<8x32xf32>
    %504 = arith.addf %501, %503 : vector<8x32xf32>
    %505 = math.tanh %504 : vector<8x32xf32>
    %cst_103 = arith.constant 1.000000e+00 : f32
    %506 = vector.broadcast %cst_103 : f32 to vector<8x32xf32>
    %507 = arith.subf %506, %500 : vector<8x32xf32>
    %508 = arith.mulf %507, %505 : vector<8x32xf32>
    %509 = arith.mulf %500, %445 : vector<8x32xf32>
    %510 = arith.addf %508, %509 : vector<8x32xf32>
    %511 = arith.truncf %510 : vector<8x32xf32> to vector<8x32xbf16>
    %cst_104 = arith.constant dense<0.000000e+00> : vector<8x384xf32>
    %512 = tpu.matmul %511, %9, %cst_104 {dimension_numbers = #tpu.dot_dimension_numbers<[1], [0], [0], [1], [0, 0, 1, 1], [], []>} : vector<8x32xbf16>, vector<32x384xbf16>, vector<8x384xf32> -> vector<8x384xf32>
    %513 = arith.addf %512, %20 : vector<8x384xf32>
    %514 = arith.truncf %477 : vector<8x32xf32> to vector<8x32xbf16>
    %cst_105 = arith.constant dense<0.000000e+00> : vector<8x384xf32>
    %515 = tpu.matmul %514, %11, %cst_105 {dimension_numbers = #tpu.dot_dimension_numbers<[1], [0], [0], [1], [0, 0, 1, 1], [], []>} : vector<8x32xbf16>, vector<32x384xbf16>, vector<8x384xf32> -> vector<8x384xf32>
    %516 = arith.addf %515, %17 : vector<8x384xf32>
    %517 = vector.extract_strided_slice %513 {offsets = [0, 0], sizes = [8, 32], strides = [1, 1]} : vector<8x384xf32> to vector<8x32xf32>
    %518 = vector.extract_strided_slice %516 {offsets = [0, 0], sizes = [8, 32], strides = [1, 1]} : vector<8x384xf32> to vector<8x32xf32>
    %519 = arith.addf %517, %518 : vector<8x32xf32>
    %520 = arith.negf %519 : vector<8x32xf32>
    %521 = math.exp %520 : vector<8x32xf32>
    %cst_106 = arith.constant 1.000000e+00 : f32
    %522 = vector.broadcast %cst_106 : f32 to vector<8x32xf32>
    %523 = arith.addf %522, %521 : vector<8x32xf32>
    %524 = arith.divf %522, %523 : vector<8x32xf32>
    %525 = vector.extract_strided_slice %513 {offsets = [0, 128], sizes = [8, 32], strides = [1, 1]} : vector<8x384xf32> to vector<8x32xf32>
    %526 = vector.extract_strided_slice %516 {offsets = [0, 128], sizes = [8, 32], strides = [1, 1]} : vector<8x384xf32> to vector<8x32xf32>
    %527 = arith.addf %525, %526 : vector<8x32xf32>
    %528 = arith.negf %527 : vector<8x32xf32>
    %529 = math.exp %528 : vector<8x32xf32>
    %cst_107 = arith.constant 1.000000e+00 : f32
    %530 = vector.broadcast %cst_107 : f32 to vector<8x32xf32>
    %531 = arith.addf %530, %529 : vector<8x32xf32>
    %532 = arith.divf %530, %531 : vector<8x32xf32>
    %533 = vector.extract_strided_slice %513 {offsets = [0, 256], sizes = [8, 32], strides = [1, 1]} : vector<8x384xf32> to vector<8x32xf32>
    %534 = vector.extract_strided_slice %516 {offsets = [0, 256], sizes = [8, 32], strides = [1, 1]} : vector<8x384xf32> to vector<8x32xf32>
    %535 = arith.mulf %524, %534 : vector<8x32xf32>
    %536 = arith.addf %533, %535 : vector<8x32xf32>
    %537 = math.tanh %536 : vector<8x32xf32>
    %cst_108 = arith.constant 1.000000e+00 : f32
    %538 = vector.broadcast %cst_108 : f32 to vector<8x32xf32>
    %539 = arith.subf %538, %532 : vector<8x32xf32>
    %540 = arith.mulf %539, %537 : vector<8x32xf32>
    %541 = arith.mulf %532, %477 : vector<8x32xf32>
    %542 = arith.addf %540, %541 : vector<8x32xf32>
    %c8_i32_109 = arith.constant 8 : i32
    %543 = math.tanh %542 : vector<8x32xf32>
    %c0_110 = arith.constant 0 : index
    %c0_111 = arith.constant 0 : index
    %544 = vector.load %arg10[%c0_110, %c0_111] : memref<32x8xf32, #tpu.memory_space<vmem>>, vector<32x8xf32>
    %cst_112 = arith.constant dense<0.000000e+00> : vector<8x8xf32>
    %545 = tpu.matmul %543, %544, %cst_112 {dimension_numbers = #tpu.dot_dimension_numbers<[1], [0], [0], [1], [0, 0, 1, 1], [], []>} : vector<8x32xf32>, vector<32x8xf32>, vector<8x8xf32> -> vector<8x8xf32>
    %c0_113 = arith.constant 0 : index
    %c0_114 = arith.constant 0 : index
    %546 = vector.load %arg11[%c0_113, %c0_114] : memref<1x8xf32, #tpu.memory_space<vmem>>, vector<1x8xf32>
    %547 = vector.broadcast %546 : vector<1x8xf32> to vector<8x8xf32>
    %548 = arith.addf %545, %547 : vector<8x8xf32>
    %c0_115 = arith.constant 0 : index
    %c0_116 = arith.constant 0 : index
    %c0_117 = arith.constant 0 : index
    %549 = vector.load %arg12[%c0_115, %c0_116, %c0_117] : memref<1x8x8xf32, #tpu.memory_space<vmem>>, vector<1x8x8xf32>
    %550 = vector.shape_cast %549 : vector<1x8x8xf32> to vector<8x8xf32>
    %551 = vector.shape_cast %548 : vector<8x8xf32> to vector<1x8x8xf32>
    tpu.vector_store %arg12[%c0_115, %c0_116, %c0_117], %551 {strides = array<i32>} : memref<1x8x8xf32, #tpu.memory_space<vmem>>, vector<1x8x8xf32>,
    return
  }
  func.func @transform_0(%arg0: i32) -> (i32, i32, i32) {
    %c0_i32 = arith.constant 0 : i32
    %c0_i32_0 = arith.constant 0 : i32
    %c0_i32_1 = arith.constant 0 : i32
    return %arg0, %c0_i32, %c0_i32_0 : i32, i32, i32
  }
  func.func @transform_1(%arg0: i32) -> (i32, i32) {
    %c0_i32 = arith.constant 0 : i32
    %c0_i32_0 = arith.constant 0 : i32
    %c0_i32_1 = arith.constant 0 : i32
    return %c0_i32, %c0_i32_0 : i32, i32
  }
  func.func @transform_2(%arg0: i32) -> (i32, i32) {
    %c0_i32 = arith.constant 0 : i32
    %c0_i32_0 = arith.constant 0 : i32
    %c0_i32_1 = arith.constant 0 : i32
    return %c0_i32, %c0_i32_0 : i32, i32
  }
  func.func @transform_3(%arg0: i32) -> (i32, i32) {
    %c0_i32 = arith.constant 0 : i32
    %c0_i32_0 = arith.constant 0 : i32
    %c0_i32_1 = arith.constant 0 : i32
    return %c0_i32, %c0_i32_0 : i32, i32
  }
  func.func @transform_4(%arg0: i32) -> (i32, i32) {
    %c0_i32 = arith.constant 0 : i32
    %c0_i32_0 = arith.constant 0 : i32
    %c0_i32_1 = arith.constant 0 : i32
    return %c0_i32, %c0_i32_0 : i32, i32
  }
  func.func @transform_5(%arg0: i32) -> (i32, i32) {
    %c0_i32 = arith.constant 0 : i32
    %c0_i32_0 = arith.constant 0 : i32
    %c0_i32_1 = arith.constant 0 : i32
    return %c0_i32, %c0_i32_0 : i32, i32
  }
  func.func @transform_6(%arg0: i32) -> (i32, i32) {
    %c0_i32 = arith.constant 0 : i32
    %c0_i32_0 = arith.constant 0 : i32
    %c0_i32_1 = arith.constant 0 : i32
    return %c0_i32, %c0_i32_0 : i32, i32
  }
  func.func @transform_7(%arg0: i32) -> (i32, i32) {
    %c0_i32 = arith.constant 0 : i32
    %c0_i32_0 = arith.constant 0 : i32
    %c0_i32_1 = arith.constant 0 : i32
    return %c0_i32, %c0_i32_0 : i32, i32
  }
  func.func @transform_8(%arg0: i32) -> (i32, i32) {
    %c0_i32 = arith.constant 0 : i32
    %c0_i32_0 = arith.constant 0 : i32
    %c0_i32_1 = arith.constant 0 : i32
    return %c0_i32, %c0_i32_0 : i32, i32
  }
  func.func @transform_9(%arg0: i32) -> (i32, i32) {
    %c0_i32 = arith.constant 0 : i32
    %c0_i32_0 = arith.constant 0 : i32
    %c0_i32_1 = arith.constant 0 : i32
    return %c0_i32, %c0_i32_0 : i32, i32
  }
  func.func @transform_10(%arg0: i32) -> (i32, i32) {
    %c0_i32 = arith.constant 0 : i32
    %c0_i32_0 = arith.constant 0 : i32
    %c0_i32_1 = arith.constant 0 : i32
    return %c0_i32, %c0_i32_0 : i32, i32
  }
  func.func @transform_11(%arg0: i32) -> (i32, i32, i32) {
    %c0_i32 = arith.constant 0 : i32
    %c0_i32_0 = arith.constant 0 : i32
    %c0_i32_1 = arith.constant 0 : i32
    return %arg0, %c0_i32, %c0_i32_0 : i32, i32, i32
  }
}

</mosaic_0001>

<llo_original>
// kernel: gru_forward.1
$region0: #{gru_forward.1}
  #allocation0 [shape = 'u32[]', space=smem, size = 0x4, offset = 0x4, fixed_abs, tag = 'smem constant byte address 0x4 - core index']
  #allocation1 [shape = 'u32[144,128]{1,0:T(1,128)}', space=vmem, size = 0x12000, scoped, tag = 'internal scratch']
  #allocation2 [shape = 'f32[64,384]{1,0:T(8,128)}', space=vmem, size = 0x18000, scoped, tag = 'scratch operand']
  %s0 = inlined_call_operand.vmem [shape: f32[1,64,16], index: 0, kind: input, shape index: {}]
  %s1 = inlined_call_operand.vmem [shape: bf16[16,384], index: 1, kind: input, shape index: {}]
  %s2 = inlined_call_operand.vmem [shape: bf16[32,384], index: 2, kind: input, shape index: {}]
  %s3 = inlined_call_operand.vmem [shape: f32[1,384], index: 3, kind: input, shape index: {}]
  %s4 = inlined_call_operand.vmem [shape: f32[1,384], index: 4, kind: input, shape index: {}]
  %s5 = inlined_call_operand.vmem [shape: bf16[32,384], index: 5, kind: input, shape index: {}]
  %s6 = inlined_call_operand.vmem [shape: bf16[32,384], index: 6, kind: input, shape index: {}]
  %s7 = inlined_call_operand.vmem [shape: f32[1,384], index: 7, kind: input, shape index: {}]
  %s8 = inlined_call_operand.vmem [shape: f32[1,384], index: 8, kind: input, shape index: {}]
  %s9 = inlined_call_operand.vmem [shape: f32[32,8], index: 9, kind: input, shape index: {}]
  %s10 = inlined_call_operand.vmem [shape: f32[1,8], index: 10, kind: input, shape index: {}]
  %s11 = inlined_call_operand.vmem [shape: f32[1,8,8], index: 11, kind: output, shape index: {}]
  %s12 = sld [smem:[#allocation0]]
  $region54: #{gru_forward.1} parent=0
    _
  %s14 = ssub.s32 1, %s12
  %s15 = scalar_select 0, %s14, %s12
  // Predicated region
  $region2: #{gru_forward.1} parent=0 // pred_check
    _
  $region3: #{gru_forward.1} parent=0 // pred_check_branch
    %17 = sbr.rel (0) target = $region5
  $region4: #{gru_forward.1} parent=0 // pred_region
    _
  $region5: #{gru_forward.1} parent=0 // pred_fallthru
    _
  // Predicated region
  $region6: #{gru_forward.1} parent=0 // pred_check
    _
  $region7: #{gru_forward.1} parent=0 // pred_check_branch
    %19 = sbr.rel (0) target = $region9
  $region8: #{gru_forward.1} parent=0 // pred_region
    _
  $region9: #{gru_forward.1} parent=0 // pred_fallthru
    _
  // Predicated region
  $region10: #{gru_forward.1} parent=0 // pred_check
    _
  $region11: #{gru_forward.1} parent=0 // pred_check_branch
    %21 = sbr.rel (0) target = $region13
  $region12: #{gru_forward.1} parent=0 // pred_region
    _
  $region13: #{gru_forward.1} parent=0 // pred_fallthru
    _
  // Predicated region
  $region14: #{gru_forward.1} parent=0 // pred_check
    _
  $region15: #{gru_forward.1} parent=0 // pred_check_branch
    %23 = sbr.rel (0) target = $region17
  $region16: #{gru_forward.1} parent=0 // pred_region
    _
  $region17: #{gru_forward.1} parent=0 // pred_fallthru
    _
  // Predicated region
  $region18: #{gru_forward.1} parent=0 // pred_check
    _
  $region19: #{gru_forward.1} parent=0 // pred_check_branch
    %25 = sbr.rel (0) target = $region21
  $region20: #{gru_forward.1} parent=0 // pred_region
    _
  $region21: #{gru_forward.1} parent=0 // pred_fallthru
    _
  // Predicated region
  $region22: #{gru_forward.1} parent=0 // pred_check
    _
  $region23: #{gru_forward.1} parent=0 // pred_check_branch
    %27 = sbr.rel (0) target = $region25
  $region24: #{gru_forward.1} parent=0 // pred_region
    _
  $region25: #{gru_forward.1} parent=0 // pred_fallthru
    _
  // Predicated region
  $region26: #{gru_forward.1} parent=0 // pred_check
    _
  $region27: #{gru_forward.1} parent=0 // pred_check_branch
    %29 = sbr.rel (0) target = $region29
  $region28: #{gru_forward.1} parent=0 // pred_region
    _
  $region29: #{gru_forward.1} parent=0 // pred_fallthru
    _
  // Predicated region
  $region30: #{gru_forward.1} parent=0 // pred_check
    _
  $region31: #{gru_forward.1} parent=0 // pred_check_branch
    %31 = sbr.rel (0) target = $region33
  $region32: #{gru_forward.1} parent=0 // pred_region
    _
  $region33: #{gru_forward.1} parent=0 // pred_fallthru
    _
  // Predicated region
  $region34: #{gru_forward.1} parent=0 // pred_check
    _
  $region35: #{gru_forward.1} parent=0 // pred_check_branch
    %33 = sbr.rel (0) target = $region37
  $region36: #{gru_forward.1} parent=0 // pred_region
    _
  $region37: #{gru_forward.1} parent=0 // pred_fallthru
    _
  // Predicated region
  $region38: #{gru_forward.1} parent=0 // pred_check
    _
  $region39: #{gru_forward.1} parent=0 // pred_check_branch
    %35 = sbr.rel (0) target = $region41
  $region40: #{gru_forward.1} parent=0 // pred_region
    _
  $region41: #{gru_forward.1} parent=0 // pred_fallthru
    _
  // Predicated region
  $region42: #{gru_forward.1} parent=0 // pred_check
    _
  $region43: #{gru_forward.1} parent=0 // pred_check_branch
    %37 = sbr.rel (0) target = $region45
  $region44: #{gru_forward.1} parent=0 // pred_region
    _
  $region45: #{gru_forward.1} parent=0 // pred_fallthru
    _
  %v39 = vld [vmem:[%s0] sm:$0xff]
  %v40 = vld [vmem:[%s0 + $0x8] sm:$0xff]
  %v41 = vld [vmem:[%s0 + $0x10] sm:$0xff]
  %v42 = vld [vmem:[%s0 + $0x18] sm:$0xff]
  %v43 = vld [vmem:[%s0 + $0x20] sm:$0xff]
  %v44 = vld [vmem:[%s0 + $0x28] sm:$0xff]
  %v45 = vld [vmem:[%s0 + $0x30] sm:$0xff]
  %v46 = vld [vmem:[%s0 + $0x38] sm:$0xff]
  %v47 = vpack.c.bf16 %v40, %v39
  %v48 = vpack.c.bf16 %v42, %v41
  %v49 = vpack.c.bf16 %v44, %v43
  %v50 = vpack.c.bf16 %v46, %v45
  %v51 = vld [vmem:[%s1] sm:$0xff]
  %v52 = vld [vmem:[%s1 + $0x8] sm:$0xf]
  %v53 = vld [vmem:[%s1 + $0xc] sm:$0xff]
  %v54 = vld [vmem:[%s1 + $0x14] sm:$0xf]
  %v55 = vld [vmem:[%s3] sm:$0x7]
  %v57 = vlaneseq
  %v58 = vshrl.u32 %v57, 7
  %v59 = vsub.s32 0, %v58
  %v60 = vrot.slane %v55, %v59
  %v61 = vlaneseq
  %v62 = vshrl.u32 %v61, 7
  %v63 = vsub.s32 1, %v62
  %v64 = vrot.slane %v55, %v63
  %v65 = vlaneseq
  %v66 = vshrl.u32 %v65, 7
  %v67 = vsub.s32 2, %v66
  %v68 = vrot.slane %v55, %v67
  %v76 = vunpack.c.l.b16 %v51
  %v77 = vunpack.c.h.b16 %v51
  %v78 = vunpack.c.l.b16 %v52
  %v79 = vunpack.c.l.b16 %v53
  %v80 = vunpack.c.h.b16 %v53
  %v81 = vunpack.c.l.b16 %v54
  %v82 = vpack.c.b16 %v79, %v76
  %v83 = vpack.c.b16 %v80, %v77
  %v84 = vpack.c.b16 %v81, %v78
  %vm88 = vcmask 130048
  %v90 = vsel %vm88, %v47, 0
  %v93 = vsel %vm88, %v48, 0
  %v96 = vsel %vm88, %v49, 0
  %v99 = vsel %vm88, %v50, 0
  %101 = vmatprep.subr.bf16.mxu0 %v83
  %102 = vmatpush1.bf16.msra.mxu0 %v82
  %103 = vmatprep.subr.bf16.mxu0 0
  %104 = vmatpush1.bf16.msra.mxu0 0
  %105 = vmatprep.subr.bf16.mxu0 0
  %106 = vmatpush1.bf16.msra.mxu0 0
  %107 = vmatprep.subr.bf16.mxu0 0
  %108 = vmatpush1.bf16.msra.mxu0 0
  %109 = vmatprep.subr.bf16.mxu0 0
  %110 = vmatpush1.bf16.msra.mxu0 0
  %111 = vmatprep.subr.bf16.mxu0 0
  %112 = vmatpush1.bf16.msra.mxu0 0
  %113 = vmatprep.subr.bf16.mxu0 0
  %114 = vmatpush1.bf16.msra.mxu0 0
  %115 = vmatprep.subr.bf16.mxu0 0
  %116 = vmatpush1.bf16.msra.mxu0 0
  %117 = vmatprep.subr.bf16.mxu0 0
  %118 = vmatpush1.bf16.msra.mxu0 0
  %119 = vmatprep.subr.bf16.mxu0 0
  %120 = vmatpush1.bf16.msra.mxu0 0
  %121 = vmatprep.subr.bf16.mxu0 0
  %122 = vmatpush1.bf16.msra.mxu0 0
  %123 = vmatprep.subr.bf16.mxu0 0
  %124 = vmatpush1.bf16.msra.mxu0 0
  %125 = vmatprep.subr.bf16.mxu0 0
  %126 = vmatpush1.bf16.msra.mxu0 0
  %127 = vmatprep.subr.bf16.mxu0 0
  %128 = vmatpush1.bf16.msra.mxu0 0
  %129 = vmatprep.subr.bf16.mxu0 0
  %130 = vmatpush1.bf16.msra.mxu0 0
  %131 = vmatprep.subr.bf16.mxu0 0
  %132 = vmatpush1.bf16.msra.mxu0 0
  %133 = vmatprep.mubr.bf16.mxu0 0
  %134 = vmatmul.mubr.bf16.gmra.mrb[0].mxu0 %v90
  %v135 = vpop.f32.mrb[0].mxu0
  %v136 = vadd.f32 %v60, %v135
  %v137 = vpop.f32.mrb[0].mxu0
  %v138 = vadd.f32 %v64, %v137
  %v139 = vpop.f32.mrb[0].mxu0
  %v140 = vadd.f32 %v60, %v139
  %v141 = vpop.f32.mrb[0].mxu0
  %v142 = vadd.f32 %v64, %v141
  %143 = vmatprep.mubr.bf16.mxu0 0
  %144 = vmatmul.mubr.bf16.gmra.mrb[0].mxu0 %v93
  %v145 = vpop.f32.mrb[0].mxu0
  %v146 = vadd.f32 %v60, %v145
  %v147 = vpop.f32.mrb[0].mxu0
  %v148 = vadd.f32 %v64, %v147
  %v149 = vpop.f32.mrb[0].mxu0
  %v150 = vadd.f32 %v60, %v149
  %v151 = vpop.f32.mrb[0].mxu0
  %v152 = vadd.f32 %v64, %v151
  %153 = vmatprep.mubr.bf16.mxu0 0
  %154 = vmatmul.mubr.bf16.gmra.mrb[0].mxu0 %v96
  %v155 = vpop.f32.mrb[0].mxu0
  %v156 = vadd.f32 %v60, %v155
  %v157 = vpop.f32.mrb[0].mxu0
  %v158 = vadd.f32 %v64, %v157
  %v159 = vpop.f32.mrb[0].mxu0
  %v160 = vadd.f32 %v60, %v159
  %v161 = vpop.f32.mrb[0].mxu0
  %v162 = vadd.f32 %v64, %v161
  %163 = vmatprep.mubr.bf16.mxu0 0
  %164 = vmatmul.mubr.bf16.gmra.mrb[0].mxu0 %v99
  %v165 = vpop.f32.mrb[0].mxu0
  %v166 = vadd.f32 %v60, %v165
  %v167 = vpop.f32.mrb[0].mxu0
  %v168 = vadd.f32 %v64, %v167
  %v169 = vpop.f32.mrb[0].mxu0
  %v170 = vadd.f32 %v60, %v169
  %v171 = vpop.f32.mrb[0].mxu0
  %v172 = vadd.f32 %v64, %v171
  %173 = vdwg.mxu0
  %174 = vmatprep.subr.bf16.mxu0 0
  %175 = vmatpush1.bf16.msra.mxu0 %v84
  %176 = vmatprep.subr.bf16.mxu0 0
  %177 = vmatpush1.bf16.msra.mxu0 0
  %178 = vmatprep.subr.bf16.mxu0 0
  %179 = vmatpush1.bf16.msra.mxu0 0
  %180 = vmatprep.subr.bf16.mxu0 0
  %181 = vmatpush1.bf16.msra.mxu0 0
  %182 = vmatprep.subr.bf16.mxu0 0
  %183 = vmatpush1.bf16.msra.mxu0 0
  %184 = vmatprep.subr.bf16.mxu0 0
  %185 = vmatpush1.bf16.msra.mxu0 0
  %186 = vmatprep.subr.bf16.mxu0 0
  %187 = vmatpush1.bf16.msra.mxu0 0
  %188 = vmatprep.subr.bf16.mxu0 0
  %189 = vmatpush1.bf16.msra.mxu0 0
  %190 = vmatprep.subr.bf16.mxu0 0
  %191 = vmatpush1.bf16.msra.mxu0 0
  %192 = vmatprep.subr.bf16.mxu0 0
  %193 = vmatpush1.bf16.msra.mxu0 0
  %194 = vmatprep.subr.bf16.mxu0 0
  %195 = vmatpush1.bf16.msra.mxu0 0
  %196 = vmatprep.subr.bf16.mxu0 0
  %197 = vmatpush1.bf16.msra.mxu0 0
  %198 = vmatprep.subr.bf16.mxu0 0
  %199 = vmatpush1.bf16.msra.mxu0 0
  %200 = vmatprep.subr.bf16.mxu0 0
  %201 = vmatpush1.bf16.msra.mxu0 0
  %202 = vmatprep.subr.bf16.mxu0 0
  %203 = vmatpush1.bf16.msra.mxu0 0
  %204 = vmatprep.subr.bf16.mxu0 0
  %205 = vmatpush1.bf16.msra.mxu0 0
  %206 = vmatprep.mubr.bf16.mxu0 0
  %207 = vmatmul.mubr.bf16.gmra.mrb[0].mxu0 %v90
  %v208 = vpop.f32.mrb[0].mxu0
  %v209 = vadd.f32 %v68, %v208
  %v210 = vpop.f32.mrb[0].mxu0
  %v211 = vpop.f32.mrb[0].mxu0
  %v212 = vadd.f32 %v68, %v211
  %v213 = vpop.f32.mrb[0].mxu0
  %214 = vmatprep.mubr.bf16.mxu0 0
  %215 = vmatmul.mubr.bf16.gmra.mrb[0].mxu0 %v93
  %v216 = vpop.f32.mrb[0].mxu0
  %v217 = vadd.f32 %v68, %v216
  %v218 = vpop.f32.mrb[0].mxu0
  %v219 = vpop.f32.mrb[0].mxu0
  %v220 = vadd.f32 %v68, %v219
  %v221 = vpop.f32.mrb[0].mxu0
  %222 = vmatprep.mubr.bf16.mxu0 0
  %223 = vmatmul.mubr.bf16.gmra.mrb[0].mxu0 %v96
  %v224 = vpop.f32.mrb[0].mxu0
  %v225 = vadd.f32 %v68, %v224
  %v226 = vpop.f32.mrb[0].mxu0
  %v227 = vpop.f32.mrb[0].mxu0
  %v228 = vadd.f32 %v68, %v227
  %v229 = vpop.f32.mrb[0].mxu0
  %230 = vmatprep.mubr.bf16.mxu0 0
  %231 = vmatmul.mubr.bf16.gmra.mrb[0].mxu0 %v99
  %v232 = vpop.f32.mrb[0].mxu0
  %v233 = vadd.f32 %v68, %v232
  %v234 = vpop.f32.mrb[0].mxu0
  %v235 = vpop.f32.mrb[0].mxu0
  %v236 = vadd.f32 %v68, %v235
  %v237 = vpop.f32.mrb[0].mxu0
  %238 = vdwg.mxu0
  %239 = vst [vmem:[#allocation2] sm:$0xff] %v136
  %240 = vst [vmem:[#allocation2 + $0x8] sm:$0xff] %v138
  %241 = vst [vmem:[#allocation2 + $0x10] sm:$0xff] %v209
  %242 = vst [vmem:[#allocation2 + $0x18] sm:$0xff] %v140
  %243 = vst [vmem:[#allocation2 + $0x20] sm:$0xff] %v142
  %244 = vst [vmem:[#allocation2 + $0x28] sm:$0xff] %v212
  %245 = vst [vmem:[#allocation2 + $0x30] sm:$0xff] %v146
  %246 = vst [vmem:[#allocation2 + $0x38] sm:$0xff] %v148
  %247 = vst [vmem:[#allocation2 + $0x40] sm:$0xff] %v217
  %248 = vst [vmem:[#allocation2 + $0x48] sm:$0xff] %v150
  %249 = vst [vmem:[#allocation2 + $0x50] sm:$0xff] %v152
  %250 = vst [vmem:[#allocation2 + $0x58] sm:$0xff] %v220
  %251 = vst [vmem:[#allocation2 + $0x60] sm:$0xff] %v156
  %252 = vst [vmem:[#allocation2 + $0x68] sm:$0xff] %v158
  %253 = vst [vmem:[#allocation2 + $0x70] sm:$0xff] %v225
  %254 = vst [vmem:[#allocation2 + $0x78] sm:$0xff] %v160
  %255 = vst [vmem:[#allocation2 + $0x80] sm:$0xff] %v162
  %256 = vst [vmem:[#allocation2 + $0x88] sm:$0xff] %v228
  %257 = vst [vmem:[#allocation2 + $0x90] sm:$0xff] %v166
  %258 = vst [vmem:[#allocation2 + $0x98] sm:$0xff] %v168
  %259 = vst [vmem:[#allocation2 + $0xa0] sm:$0xff] %v233
  %260 = vst [vmem:[#allocation2 + $0xa8] sm:$0xff] %v170
  %261 = vst [vmem:[#allocation2 + $0xb0] sm:$0xff] %v172
  %262 = vst [vmem:[#allocation2 + $0xb8] sm:$0xff] %v236
  %v263 = vld [vmem:[%s5] sm:$0xff]
  %v264 = vld [vmem:[%s5 + $0x8] sm:$0xf]
  %v265 = vld [vmem:[%s5 + $0xc] sm:$0xff]
  %v266 = vld [vmem:[%s5 + $0x14] sm:$0xf]
  %v267 = vld [vmem:[%s5 + $0x18] sm:$0xff]
  %v268 = vld [vmem:[%s5 + $0x20] sm:$0xf]
  %v269 = vld [vmem:[%s5 + $0x24] sm:$0xff]
  %v270 = vld [vmem:[%s5 + $0x2c] sm:$0xf]
  %v271 = vld [vmem:[%s2] sm:$0xff]
  %v272 = vld [vmem:[%s2 + $0x8] sm:$0xf]
  %v273 = vld [vmem:[%s2 + $0xc] sm:$0xff]
  %v274 = vld [vmem:[%s2 + $0x14] sm:$0xf]
  %v275 = vld [vmem:[%s2 + $0x18] sm:$0xff]
  %v276 = vld [vmem:[%s2 + $0x20] sm:$0xf]
  %v277 = vld [vmem:[%s2 + $0x24] sm:$0xff]
  %v278 = vld [vmem:[%s2 + $0x2c] sm:$0xf]
  %v279 = vld [vmem:[%s6] sm:$0xff]
  %v280 = vld [vmem:[%s6 + $0x8] sm:$0xf]
  %v281 = vld [vmem:[%s6 + $0xc] sm:$0xff]
  %v282 = vld [vmem:[%s6 + $0x14] sm:$0xf]
  %v283 = vld [vmem:[%s6 + $0x18] sm:$0xff]
  %v284 = vld [vmem:[%s6 + $0x20] sm:$0xf]
  %v285 = vld [vmem:[%s6 + $0x24] sm:$0xff]
  %v286 = vld [vmem:[%s6 + $0x2c] sm:$0xf]
  %v287 = vld [vmem:[%s4] sm:$0x7]
  %v289 = vlaneseq
  %v290 = vshrl.u32 %v289, 7
  %v291 = vsub.s32 0, %v290
  %v292 = vrot.slane %v287, %v291
  %v293 = vlaneseq
  %v294 = vshrl.u32 %v293, 7
  %v295 = vsub.s32 1, %v294
  %v296 = vrot.slane %v287, %v295
  %v297 = vlaneseq
  %v298 = vshrl.u32 %v297, 7
  %v299 = vsub.s32 2, %v298
  %v300 = vrot.slane %v287, %v299
  %v304 = vld [vmem:[%s8] sm:$0x7]
  %v306 = vlaneseq
  %v307 = vshrl.u32 %v306, 7
  %v308 = vsub.s32 0, %v307
  %v309 = vrot.slane %v304, %v308
  %v310 = vlaneseq
  %v311 = vshrl.u32 %v310, 7
  %v312 = vsub.s32 1, %v311
  %v313 = vrot.slane %v304, %v312
  %v314 = vlaneseq
  %v315 = vshrl.u32 %v314, 7
  %v316 = vsub.s32 2, %v315
  %v317 = vrot.slane %v304, %v316
  %v321 = vld [vmem:[%s7] sm:$0x7]
  %v323 = vlaneseq
  %v324 = vshrl.u32 %v323, 7
  %v325 = vsub.s32 0, %v324
  %v326 = vrot.slane %v321, %v325
  %v327 = vlaneseq
  %v328 = vshrl.u32 %v327, 7
  %v329 = vsub.s32 1, %v328
  %v330 = vrot.slane %v321, %v329
  %v331 = vlaneseq
  %v332 = vshrl.u32 %v331, 7
  %v333 = vsub.s32 2, %v332
  %v334 = vrot.slane %v321, %v333
  %s338 = smul.u32 0, 3
  %s339 = smul.addr %s338, 8
  %s340 = scalar_lea.vmem [#allocation2], %s339
  %v341 = vld [vmem:[%s340] sm:$0xff]
  %v342 = vld [vmem:[%s340 + $0x8] sm:$0xff]
  %v343 = vld [vmem:[%s340 + $0x10] sm:$0xff]
  %v352 = vunpack.c.l.b16 %v271
  %v353 = vunpack.c.h.b16 %v271
  %v354 = vunpack.c.l.b16 %v272
  %v355 = vunpack.c.l.b16 %v273
  %v356 = vunpack.c.h.b16 %v273
  %v357 = vunpack.c.l.b16 %v274
  %v358 = vunpack.c.l.b16 %v275
  %v359 = vunpack.c.h.b16 %v275
  %v360 = vunpack.c.l.b16 %v276
  %v361 = vunpack.c.l.b16 %v277
  %v362 = vunpack.c.h.b16 %v277
  %v363 = vunpack.c.l.b16 %v278
  %v364 = vpack.c.b16 %v355, %v352
  %v365 = vpack.c.b16 %v356, %v353
  %v366 = vpack.c.b16 %v357, %v354
  %v367 = vpack.c.b16 %v361, %v358
  %v368 = vpack.c.b16 %v362, %v359
  %v369 = vpack.c.b16 %v363, %v360
  %vm376 = vcmask 261120
  %v378 = vsel %vm376, 0, 0
  %380 = vmatprep.subr.bf16.mxu0 %v365
  %381 = vmatpush1.bf16.msra.mxu0 %v364
  %382 = vmatprep.subr.bf16.mxu0 %v368
  %383 = vmatpush1.bf16.msra.mxu0 %v367
  %384 = vmatprep.subr.bf16.mxu0 0
  %385 = vmatpush1.bf16.msra.mxu0 0
  %386 = vmatprep.subr.bf16.mxu0 0
  %387 = vmatpush1.bf16.msra.mxu0 0
  %388 = vmatprep.subr.bf16.mxu0 0
  %389 = vmatpush1.bf16.msra.mxu0 0
  %390 = vmatprep.subr.bf16.mxu0 0
  %391 = vmatpush1.bf16.msra.mxu0 0
  %392 = vmatprep.subr.bf16.mxu0 0
  %393 = vmatpush1.bf16.msra.mxu0 0
  %394 = vmatprep.subr.bf16.mxu0 0
  %395 = vmatpush1.bf16.msra.mxu0 0
  %396 = vmatprep.subr.bf16.mxu0 0
  %397 = vmatpush1.bf16.msra.mxu0 0
  %398 = vmatprep.subr.bf16.mxu0 0
  %399 = vmatpush1.bf16.msra.mxu0 0
  %400 = vmatprep.subr.bf16.mxu0 0
  %401 = vmatpush1.bf16.msra.mxu0 0
  %402 = vmatprep.subr.bf16.mxu0 0
  %403 = vmatpush1.bf16.msra.mxu0 0
  %404 = vmatprep.subr.bf16.mxu0 0
  %405 = vmatpush1.bf16.msra.mxu0 0
  %406 = vmatprep.subr.bf16.mxu0 0
  %407 = vmatpush1.bf16.msra.mxu0 0
  %408 = vmatprep.subr.bf16.mxu0 0
  %409 = vmatpush1.bf16.msra.mxu0 0
  %410 = vmatprep.subr.bf16.mxu0 0
  %411 = vmatpush1.bf16.msra.mxu0 0
  %412 = vmatprep.mubr.bf16.mxu0 0
  %413 = vmatmul.mubr.bf16.gmra.mrb[0].mxu0 %v378
  %v414 = vpop.f32.mrb[0].mxu0
  %v415 = vadd.f32 %v292, %v414
  %v416 = vpop.f32.mrb[0].mxu0
  %v417 = vadd.f32 %v296, %v416
  %v418 = vpop.f32.mrb[0].mxu0
  %v419 = vpop.f32.mrb[0].mxu0
  %420 = vdwg.mxu0
  %421 = vmatprep.subr.bf16.mxu0 0
  %422 = vmatpush1.bf16.msra.mxu0 %v366
  %423 = vmatprep.subr.bf16.mxu0 0
  %424 = vmatpush1.bf16.msra.mxu0 %v369
  %425 = vmatprep.subr.bf16.mxu0 0
  %426 = vmatpush1.bf16.msra.mxu0 0
  %427 = vmatprep.subr.bf16.mxu0 0
  %428 = vmatpush1.bf16.msra.mxu0 0
  %429 = vmatprep.subr.bf16.mxu0 0
  %430 = vmatpush1.bf16.msra.mxu0 0
  %431 = vmatprep.subr.bf16.mxu0 0
  %432 = vmatpush1.bf16.msra.mxu0 0
  %433 = vmatprep.subr.bf16.mxu0 0
  %434 = vmatpush1.bf16.msra.mxu0 0
  %435 = vmatprep.subr.bf16.mxu0 0
  %436 = vmatpush1.bf16.msra.mxu0 0
  %437 = vmatprep.subr.bf16.mxu0 0
  %438 = vmatpush1.bf16.msra.mxu0 0
  %439 = vmatprep.subr.bf16.mxu0 0
  %440 = vmatpush1.bf16.msra.mxu0 0
  %441 = vmatprep.subr.bf16.mxu0 0
  %442 = vmatpush1.bf16.msra.mxu0 0
  %443 = vmatprep.subr.bf16.mxu0 0
  %444 = vmatpush1.bf16.msra.mxu0 0
  %445 = vmatprep.subr.bf16.mxu0 0
  %446 = vmatpush1.bf16.msra.mxu0 0
  %447 = vmatprep.subr.bf16.mxu0 0
  %448 = vmatpush1.bf16.msra.mxu0 0
  %449 = vmatprep.subr.bf16.mxu0 0
  %450 = vmatpush1.bf16.msra.mxu0 0
  %451 = vmatprep.subr.bf16.mxu0 0
  %452 = vmatpush1.bf16.msra.mxu0 0
  %453 = vmatprep.mubr.bf16.mxu0 0
  %454 = vmatmul.mubr.bf16.gmra.mrb[0].mxu0 %v378
  %v455 = vpop.f32.mrb[0].mxu0
  %v456 = vadd.f32 %v300, %v455
  %v457 = vpop.f32.mrb[0].mxu0
  %v458 = vpop.f32.mrb[0].mxu0
  %v459 = vpop.f32.mrb[0].mxu0
  %460 = vdwg.mxu0
  %v461 = vadd.f32 %v341, %v415
  %v462 = vxor.u32 %v461, 2147483648
  %v463 = vmul.f32 %v462, 1.442695
  %v464 = vpow.pop %v463
  %v465 = vadd.f32 %v464, 1.0
  %v466 = vrcp.pop %v465
  %v467 = vmul.f32 1.0, %v466
  %v468 = vadd.f32 %v342, %v417
  %v469 = vxor.u32 %v468, 2147483648
  %v470 = vmul.f32 %v469, 1.442695
  %v471 = vpow.pop %v470
  %v472 = vadd.f32 %v471, 1.0
  %v473 = vrcp.pop %v472
  %v474 = vmul.f32 1.0, %v473
  %v475 = vmul.f32 %v467, %v456
  %v476 = vadd.f32 %v343, %v475
  %v477 = vtanh.pop %v476
  %v478 = vsub.f32 1.0, %v474
  %v479 = vmul.f32 %v478, %v477
  %v480 = vmul.f32 %v474, 0.0
  %v481 = vadd.f32 %v479, %v480
  %v482 = vpack.c.bf16 %v481, %v481
  %v491 = vunpack.c.l.b16 %v263
  %v492 = vunpack.c.h.b16 %v263
  %v493 = vunpack.c.l.b16 %v264
  %v494 = vunpack.c.l.b16 %v265
  %v495 = vunpack.c.h.b16 %v265
  %v496 = vunpack.c.l.b16 %v266
  %v497 = vunpack.c.l.b16 %v267
  %v498 = vunpack.c.h.b16 %v267
  %v499 = vunpack.c.l.b16 %v268
  %v500 = vunpack.c.l.b16 %v269
  %v501 = vunpack.c.h.b16 %v269
  %v502 = vunpack.c.l.b16 %v270
  %v503 = vpack.c.b16 %v494, %v491
  %v504 = vpack.c.b16 %v495, %v492
  %v505 = vpack.c.b16 %v496, %v493
  %v506 = vpack.c.b16 %v500, %v497
  %v507 = vpack.c.b16 %v501, %v498
  %v508 = vpack.c.b16 %v502, %v499
  %v516 = vsel %vm376, %v482, 0
  %518 = vmatprep.subr.bf16.mxu0 %v504
  %519 = vmatpush1.bf16.msra.mxu0 %v503
  %520 = vmatprep.subr.bf16.mxu0 %v507
  %521 = vmatpush1.bf16.msra.mxu0 %v506
  %522 = vmatprep.subr.bf16.mxu0 0
  %523 = vmatpush1.bf16.msra.mxu0 0
  %524 = vmatprep.subr.bf16.mxu0 0
  %525 = vmatpush1.bf16.msra.mxu0 0
  %526 = vmatprep.subr.bf16.mxu0 0
  %527 = vmatpush1.bf16.msra.mxu0 0
  %528 = vmatprep.subr.bf16.mxu0 0
  %529 = vmatpush1.bf16.msra.mxu0 0
  %530 = vmatprep.subr.bf16.mxu0 0
  %531 = vmatpush1.bf16.msra.mxu0 0
  %532 = vmatprep.subr.bf16.mxu0 0
  %533 = vmatpush1.bf16.msra.mxu0 0
  %534 = vmatprep.subr.bf16.mxu0 0
  %535 = vmatpush1.bf16.msra.mxu0 0
  %536 = vmatprep.subr.bf16.mxu0 0
  %537 = vmatpush1.bf16.msra.mxu0 0
  %538 = vmatprep.subr.bf16.mxu0 0
  %539 = vmatpush1.bf16.msra.mxu0 0
  %540 = vmatprep.subr.bf16.mxu0 0
  %541 = vmatpush1.bf16.msra.mxu0 0
  %542 = vmatprep.subr.bf16.mxu0 0
  %543 = vmatpush1.bf16.msra.mxu0 0
  %544 = vmatprep.subr.bf16.mxu0 0
  %545 = vmatpush1.bf16.msra.mxu0 0
  %546 = vmatprep.subr.bf16.mxu0 0
  %547 = vmatpush1.bf16.msra.mxu0 0
  %548 = vmatprep.subr.bf16.mxu0 0
  %549 = vmatpush1.bf16.msra.mxu0 0
  %550 = vmatprep.mubr.bf16.mxu0 0
  %551 = vmatmul.mubr.bf16.gmra.mrb[0].mxu0 %v516
  %v552 = vpop.f32.mrb[0].mxu0
  %v553 = vadd.f32 %v326, %v552
  %v554 = vpop.f32.mrb[0].mxu0
  %v555 = vadd.f32 %v330, %v554
  %v556 = vpop.f32.mrb[0].mxu0
  %v557 = vpop.f32.mrb[0].mxu0
  %558 = vdwg.mxu0
  %559 = vmatprep.subr.bf16.mxu0 0
  %560 = vmatpush1.bf16.msra.mxu0 %v505
  %561 = vmatprep.subr.bf16.mxu0 0
  %562 = vmatpush1.bf16.msra.mxu0 %v508
  %563 = vmatprep.subr.bf16.mxu0 0
  %564 = vmatpush1.bf16.msra.mxu0 0
  %565 = vmatprep.subr.bf16.mxu0 0
  %566 = vmatpush1.bf16.msra.mxu0 0
  %567 = vmatprep.subr.bf16.mxu0 0
  %568 = vmatpush1.bf16.msra.mxu0 0
  %569 = vmatprep.subr.bf16.mxu0 0
  %570 = vmatpush1.bf16.msra.mxu0 0
  %571 = vmatprep.subr.bf16.mxu0 0
  %572 = vmatpush1.bf16.msra.mxu0 0
  %573 = vmatprep.subr.bf16.mxu0 0
  %574 = vmatpush1.bf16.msra.mxu0 0
  %575 = vmatprep.subr.bf16.mxu0 0
  %576 = vmatpush1.bf16.msra.mxu0 0
  %577 = vmatprep.subr.bf16.mxu0 0
  %578 = vmatpush1.bf16.msra.mxu0 0
  %579 = vmatprep.subr.bf16.mxu0 0
  %580 = vmatpush1.bf16.msra.mxu0 0
  %581 = vmatprep.subr.bf16.mxu0 0
  %582 = vmatpush1.bf16.msra.mxu0 0
  %583 = vmatprep.subr.bf16.mxu0 0
  %584 = vmatpush1.bf16.msra.mxu0 0
  %585 = vmatprep.subr.bf16.mxu0 0
  %586 = vmatpush1.bf16.msra.mxu0 0
  %587 = vmatprep.subr.bf16.mxu0 0
  %588 = vmatpush1.bf16.msra.mxu0 0
  %589 = vmatprep.subr.bf16.mxu0 0
  %590 = vmatpush1.bf16.msra.mxu0 0
  %591 = vmatprep.mubr.bf16.mxu0 0
  %592 = vmatmul.mubr.bf16.gmra.mrb[0].mxu0 %v516
  %v593 = vpop.f32.mrb[0].mxu0
  %v594 = vadd.f32 %v334, %v593
  %v595 = vpop.f32.mrb[0].mxu0
  %v596 = vpop.f32.mrb[0].mxu0
  %v597 = vpop.f32.mrb[0].mxu0
  %598 = vdwg.mxu0
  %v607 = vunpack.c.l.b16 %v279
  %v608 = vunpack.c.h.b16 %v279
  %v609 = vunpack.c.l.b16 %v280
  %v610 = vunpack.c.l.b16 %v281
  %v611 = vunpack.c.h.b16 %v281
  %v612 = vunpack.c.l.b16 %v282
  %v613 = vunpack.c.l.b16 %v283
  %v614 = vunpack.c.h.b16 %v283
  %v615 = vunpack.c.l.b16 %v284
  %v616 = vunpack.c.l.b16 %v285
  %v617 = vunpack.c.h.b16 %v285
  %v618 = vunpack.c.l.b16 %v286
  %v619 = vpack.c.b16 %v610, %v607
  %v620 = vpack.c.b16 %v611, %v608
  %v621 = vpack.c.b16 %v612, %v609
  %v622 = vpack.c.b16 %v616, %v613
  %v623 = vpack.c.b16 %v617, %v614
  %v624 = vpack.c.b16 %v618, %v615
  %631 = vmatprep.subr.bf16.mxu0 %v620
  %632 = vmatpush1.bf16.msra.mxu0 %v619
  %633 = vmatprep.subr.bf16.mxu0 %v623
  %634 = vmatpush1.bf16.msra.mxu0 %v622
  %635 = vmatprep.subr.bf16.mxu0 0
  %636 = vmatpush1.bf16.msra.mxu0 0
  %637 = vmatprep.subr.bf16.mxu0 0
  %638 = vmatpush1.bf16.msra.mxu0 0
  %639 = vmatprep.subr.bf16.mxu0 0
  %640 = vmatpush1.bf16.msra.mxu0 0
  %641 = vmatprep.subr.bf16.mxu0 0
  %642 = vmatpush1.bf16.msra.mxu0 0
  %643 = vmatprep.subr.bf16.mxu0 0
  %644 = vmatpush1.bf16.msra.mxu0 0
  %645 = vmatprep.subr.bf16.mxu0 0
  %646 = vmatpush1.bf16.msra.mxu0 0
  %647 = vmatprep.subr.bf16.mxu0 0
  %648 = vmatpush1.bf16.msra.mxu0 0
  %649 = vmatprep.subr.bf16.mxu0 0
  %650 = vmatpush1.bf16.msra.mxu0 0
  %651 = vmatprep.subr.bf16.mxu0 0
  %652 = vmatpush1.bf16.msra.mxu0 0
  %653 = vmatprep.subr.bf16.mxu0 0
  %654 = vmatpush1.bf16.msra.mxu0 0
  %655 = vmatprep.subr.bf16.mxu0 0
  %656 = vmatpush1.bf16.msra.mxu0 0
  %657 = vmatprep.subr.bf16.mxu0 0
  %658 = vmatpush1.bf16.msra.mxu0 0
  %659 = vmatprep.subr.bf16.mxu0 0
  %660 = vmatpush1.bf16.msra.mxu0 0
  %661 = vmatprep.subr.bf16.mxu0 0
  %662 = vmatpush1.bf16.msra.mxu0 0
  %663 = vmatprep.mubr.bf16.mxu0 0
  %664 = vmatmul.mubr.bf16.gmra.mrb[0].mxu0 %v378
  %v665 = vpop.f32.mrb[0].mxu0
  %v666 = vadd.f32 %v309, %v665
  %v667 = vpop.f32.mrb[0].mxu0
  %v668 = vadd.f32 %v313, %v667
  %v669 = vpop.f32.mrb[0].mxu0
  %v670 = vpop.f32.mrb[0].mxu0
  %671 = vdwg.mxu0
  %672 = vmatprep.subr.bf16.mxu0 0
  %673 = vmatpush1.bf16.msra.mxu0 %v621
  %674 = vmatprep.subr.bf16.mxu0 0
  %675 = vmatpush1.bf16.msra.mxu0 %v624
  %676 = vmatprep.subr.bf16.mxu0 0
  %677 = vmatpush1.bf16.msra.mxu0 0
  %678 = vmatprep.subr.bf16.mxu0 0
  %679 = vmatpush1.bf16.msra.mxu0 0
  %680 = vmatprep.subr.bf16.mxu0 0
  %681 = vmatpush1.bf16.msra.mxu0 0
  %682 = vmatprep.subr.bf16.mxu0 0
  %683 = vmatpush1.bf16.msra.mxu0 0
  %684 = vmatprep.subr.bf16.mxu0 0
  %685 = vmatpush1.bf16.msra.mxu0 0
  %686 = vmatprep.subr.bf16.mxu0 0
  %687 = vmatpush1.bf16.msra.mxu0 0
  %688 = vmatprep.subr.bf16.mxu0 0
  %689 = vmatpush1.bf16.msra.mxu0 0
  %690 = vmatprep.subr.bf16.mxu0 0
  %691 = vmatpush1.bf16.msra.mxu0 0
  %692 = vmatprep.subr.bf16.mxu0 0
  %693 = vmatpush1.bf16.msra.mxu0 0
  %694 = vmatprep.subr.bf16.mxu0 0
  %695 = vmatpush1.bf16.msra.mxu0 0
  %696 = vmatprep.subr.bf16.mxu0 0
  %697 = vmatpush1.bf16.msra.mxu0 0
  %698 = vmatprep.subr.bf16.mxu0 0
  %699 = vmatpush1.bf16.msra.mxu0 0
  %700 = vmatprep.subr.bf16.mxu0 0
  %701 = vmatpush1.bf16.msra.mxu0 0
  %702 = vmatprep.subr.bf16.mxu0 0
  %703 = vmatpush1.bf16.msra.mxu0 0
  %704 = vmatprep.mubr.bf16.mxu0 0
  %705 = vmatmul.mubr.bf16.gmra.mrb[0].mxu0 %v378
  %v706 = vpop.f32.mrb[0].mxu0
  %v707 = vadd.f32 %v317, %v706
  %v708 = vpop.f32.mrb[0].mxu0
  %v709 = vpop.f32.mrb[0].mxu0
  %v710 = vpop.f32.mrb[0].mxu0
  %711 = vdwg.mxu0
  %v712 = vadd.f32 %v553, %v666
  %v713 = vxor.u32 %v712, 2147483648
  %v714 = vmul.f32 %v713, 1.442695
  %v715 = vpow.pop %v714
  %v716 = vadd.f32 %v715, 1.0
  %v717 = vrcp.pop %v716
  %v718 = vmul.f32 1.0, %v717
  %v719 = vadd.f32 %v555, %v668
  %v720 = vxor.u32 %v719, 2147483648
  %v721 = vmul.f32 %v720, 1.442695
  %v722 = vpow.pop %v721
  %v723 = vadd.f32 %v722, 1.0
  %v724 = vrcp.pop %v723
  %v725 = vmul.f32 1.0, %v724
  %v726 = vmul.f32 %v718, %v707
  %v727 = vadd.f32 %v594, %v726
  %v728 = vtanh.pop %v727
  %v729 = vsub.f32 1.0, %v725
  %v730 = vmul.f32 %v729, %v728
  %v731 = vmul.f32 %v725, 0.0
  %v732 = vadd.f32 %v730, %v731
  %s733 = smul.u32 1, 3
  %s734 = smul.addr %s733, 8
  %s735 = scalar_lea.vmem [#allocation2], %s734
  %v736 = vld [vmem:[%s735] sm:$0xff]
  %v737 = vld [vmem:[%s735 + $0x8] sm:$0xff]
  %v738 = vld [vmem:[%s735 + $0x10] sm:$0xff]
  %739 = vmatprep.subr.bf16.mxu0 %v365
  %740 = vmatpush1.bf16.msra.mxu0 %v364
  %741 = vmatprep.subr.bf16.mxu0 %v368
  %742 = vmatpush1.bf16.msra.mxu0 %v367
  %743 = vmatprep.subr.bf16.mxu0 0
  %744 = vmatpush1.bf16.msra.mxu0 0
  %745 = vmatprep.subr.bf16.mxu0 0
  %746 = vmatpush1.bf16.msra.mxu0 0
  %747 = vmatprep.subr.bf16.mxu0 0
  %748 = vmatpush1.bf16.msra.mxu0 0
  %749 = vmatprep.subr.bf16.mxu0 0
  %750 = vmatpush1.bf16.msra.mxu0 0
  %751 = vmatprep.subr.bf16.mxu0 0
  %752 = vmatpush1.bf16.msra.mxu0 0
  %753 = vmatprep.subr.bf16.mxu0 0
  %754 = vmatpush1.bf16.msra.mxu0 0
  %755 = vmatprep.subr.bf16.mxu0 0
  %756 = vmatpush1.bf16.msra.mxu0 0
  %757 = vmatprep.subr.bf16.mxu0 0
  %758 = vmatpush1.bf16.msra.mxu0 0
  %759 = vmatprep.subr.bf16.mxu0 0
  %760 = vmatpush1.bf16.msra.mxu0 0
  %761 = vmatprep.subr.bf16.mxu0 0
  %762 = vmatpush1.bf16.msra.mxu0 0
  %763 = vmatprep.subr.bf16.mxu0 0
  %764 = vmatpush1.bf16.msra.mxu0 0
  %765 = vmatprep.subr.bf16.mxu0 0
  %766 = vmatpush1.bf16.msra.mxu0 0
  %767 = vmatprep.subr.bf16.mxu0 0
  %768 = vmatpush1.bf16.msra.mxu0 0
  %769 = vmatprep.subr.bf16.mxu0 0
  %770 = vmatpush1.bf16.msra.mxu0 0
  %771 = vmatprep.mubr.bf16.mxu0 0
  %772 = vmatmul.mubr.bf16.gmra.mrb[0].mxu0 %v516
  %v773 = vpop.f32.mrb[0].mxu0
  %v774 = vadd.f32 %v292, %v773
  %v775 = vpop.f32.mrb[0].mxu0
  %v776 = vadd.f32 %v296, %v775
  %v777 = vpop.f32.mrb[0].mxu0
  %v778 = vpop.f32.mrb[0].mxu0
  %779 = vdwg.mxu0
  %780 = vmatprep.subr.bf16.mxu0 0
  %781 = vmatpush1.bf16.msra.mxu0 %v366
  %782 = vmatprep.subr.bf16.mxu0 0
  %783 = vmatpush1.bf16.msra.mxu0 %v369
  %784 = vmatprep.subr.bf16.mxu0 0
  %785 = vmatpush1.bf16.msra.mxu0 0
  %786 = vmatprep.subr.bf16.mxu0 0
  %787 = vmatpush1.bf16.msra.mxu0 0
  %788 = vmatprep.subr.bf16.mxu0 0
  %789 = vmatpush1.bf16.msra.mxu0 0
  %790 = vmatprep.subr.bf16.mxu0 0
  %791 = vmatpush1.bf16.msra.mxu0 0
  %792 = vmatprep.subr.bf16.mxu0 0
  %793 = vmatpush1.bf16.msra.mxu0 0
  %794 = vmatprep.subr.bf16.mxu0 0
  %795 = vmatpush1.bf16.msra.mxu0 0
  %796 = vmatprep.subr.bf16.mxu0 0
  %797 = vmatpush1.bf16.msra.mxu0 0
  %798 = vmatprep.subr.bf16.mxu0 0
  %799 = vmatpush1.bf16.msra.mxu0 0
  %800 = vmatprep.subr.bf16.mxu0 0
  %801 = vmatpush1.bf16.msra.mxu0 0
  %802 = vmatprep.subr.bf16.mxu0 0
  %803 = vmatpush1.bf16.msra.mxu0 0
  %804 = vmatprep.subr.bf16.mxu0 0
  %805 = vmatpush1.bf16.msra.mxu0 0
  %806 = vmatprep.subr.bf16.mxu0 0
  %807 = vmatpush1.bf16.msra.mxu0 0
  %808 = vmatprep.subr.bf16.mxu0 0
  %809 = vmatpush1.bf16.msra.mxu0 0
  %810 = vmatprep.subr.bf16.mxu0 0
  %811 = vmatpush1.bf16.msra.mxu0 0
  %812 = vmatprep.mubr.bf16.mxu0 0
  %813 = vmatmul.mubr.bf16.gmra.mrb[0].mxu0 %v516
  %v814 = vpop.f32.mrb[0].mxu0
  %v815 = vadd.f32 %v300, %v814
  %v816 = vpop.f32.mrb[0].mxu0
  %v817 = vpop.f32.mrb[0].mxu0
  %v818 = vpop.f32.mrb[0].mxu0
  %819 = vdwg.mxu0
  %v820 = vadd.f32 %v736, %v774
  %v821 = vxor.u32 %v820, 2147483648
  %v822 = vmul.f32 %v821, 1.442695
  %v823 = vpow.pop %v822
  %v824 = vadd.f32 %v823, 1.0
  %v825 = vrcp.pop %v824
  %v826 = vmul.f32 1.0, %v825
  %v827 = vadd.f32 %v737, %v776
  %v828 = vxor.u32 %v827, 2147483648
  %v829 = vmul.f32 %v828, 1.442695
  %v830 = vpow.pop %v829
  %v831 = vadd.f32 %v830, 1.0
  %v832 = vrcp.pop %v831
  %v833 = vmul.f32 1.0, %v832
  %v834 = vmul.f32 %v826, %v815
  %v835 = vadd.f32 %v738, %v834
  %v836 = vtanh.pop %v835
  %v837 = vsub.f32 1.0, %v833
  %v838 = vmul.f32 %v837, %v836
  %v839 = vmul.f32 %v833, %v481
  %v840 = vadd.f32 %v838, %v839
  %v841 = vpack.c.bf16 %v840, %v840
  %v843 = vsel %vm376, %v841, 0
  %845 = vmatprep.subr.bf16.mxu0 %v504
  %846 = vmatpush1.bf16.msra.mxu0 %v503
  %847 = vmatprep.subr.bf16.mxu0 %v507
  %848 = vmatpush1.bf16.msra.mxu0 %v506
  %849 = vmatprep.subr.bf16.mxu0 0
  %850 = vmatpush1.bf16.msra.mxu0 0
  %851 = vmatprep.subr.bf16.mxu0 0
  %852 = vmatpush1.bf16.msra.mxu0 0
  %853 = vmatprep.subr.bf16.mxu0 0
  %854 = vmatpush1.bf16.msra.mxu0 0
  %855 = vmatprep.subr.bf16.mxu0 0
  %856 = vmatpush1.bf16.msra.mxu0 0
  %857 = vmatprep.subr.bf16.mxu0 0
  %858 = vmatpush1.bf16.msra.mxu0 0
  %859 = vmatprep.subr.bf16.mxu0 0
  %860 = vmatpush1.bf16.msra.mxu0 0
  %861 = vmatprep.subr.bf16.mxu0 0
  %862 = vmatpush1.bf16.msra.mxu0 0
  %863 = vmatprep.subr.bf16.mxu0 0
  %864 = vmatpush1.bf16.msra.mxu0 0
  %865 = vmatprep.subr.bf16.mxu0 0
  %866 = vmatpush1.bf16.msra.mxu0 0
  %867 = vmatprep.subr.bf16.mxu0 0
  %868 = vmatpush1.bf16.msra.mxu0 0
  %869 = vmatprep.subr.bf16.mxu0 0
  %870 = vmatpush1.bf16.msra.mxu0 0
  %871 = vmatprep.subr.bf16.mxu0 0
  %872 = vmatpush1.bf16.msra.mxu0 0
  %873 = vmatprep.subr.bf16.mxu0 0
  %874 = vmatpush1.bf16.msra.mxu0 0
  %875 = vmatprep.subr.bf16.mxu0 0
  %876 = vmatpush1.bf16.msra.mxu0 0
  %877 = vmatprep.mubr.bf16.mxu0 0
  %878 = vmatmul.mubr.bf16.gmra.mrb[0].mxu0 %v843
  %v879 = vpop.f32.mrb[0].mxu0
  %v880 = vadd.f32 %v326, %v879
  %v881 = vpop.f32.mrb[0].mxu0
  %v882 = vadd.f32 %v330, %v881
  %v883 = vpop.f32.mrb[0].mxu0
  %v884 = vpop.f32.mrb[0].mxu0
  %885 = vdwg.mxu0
  %886 = vmatprep.subr.bf16.mxu0 0
  %887 = vmatpush1.bf16.msra.mxu0 %v505
  %888 = vmatprep.subr.bf16.mxu0 0
  %889 = vmatpush1.bf16.msra.mxu0 %v508
  %890 = vmatprep.subr.bf16.mxu0 0
  %891 = vmatpush1.bf16.msra.mxu0 0
  %892 = vmatprep.subr.bf16.mxu0 0
  %893 = vmatpush1.bf16.msra.mxu0 0
  %894 = vmatprep.subr.bf16.mxu0 0
  %895 = vmatpush1.bf16.msra.mxu0 0
  %896 = vmatprep.subr.bf16.mxu0 0
  %897 = vmatpush1.bf16.msra.mxu0 0
  %898 = vmatprep.subr.bf16.mxu0 0
  %899 = vmatpush1.bf16.msra.mxu0 0
  %900 = vmatprep.subr.bf16.mxu0 0
  %901 = vmatpush1.bf16.msra.mxu0 0
  %902 = vmatprep.subr.bf16.mxu0 0
  %903 = vmatpush1.bf16.msra.mxu0 0
  %904 = vmatprep.subr.bf16.mxu0 0
  %905 = vmatpush1.bf16.msra.mxu0 0
  %906 = vmatprep.subr.bf16.mxu0 0
  %907 = vmatpush1.bf16.msra.mxu0 0
  %908 = vmatprep.subr.bf16.mxu0 0
  %909 = vmatpush1.bf16.msra.mxu0 0
  %910 = vmatprep.subr.bf16.mxu0 0
  %911 = vmatpush1.bf16.msra.mxu0 0
  %912 = vmatprep.subr.bf16.mxu0 0
  %913 = vmatpush1.bf16.msra.mxu0 0
  %914 = vmatprep.subr.bf16.mxu0 0
  %915 = vmatpush1.bf16.msra.mxu0 0
  %916 = vmatprep.subr.bf16.mxu0 0
  %917 = vmatpush1.bf16.msra.mxu0 0
  %918 = vmatprep.mubr.bf16.mxu0 0
  %919 = vmatmul.mubr.bf16.gmra.mrb[0].mxu0 %v843
  %v920 = vpop.f32.mrb[0].mxu0
  %v921 = vadd.f32 %v334, %v920
  %v922 = vpop.f32.mrb[0].mxu0
  %v923 = vpop.f32.mrb[0].mxu0
  %v924 = vpop.f32.mrb[0].mxu0
  %925 = vdwg.mxu0
  %v926 = vpack.c.bf16 %v732, %v732
  %v928 = vsel %vm376, %v926, 0
  %930 = vmatprep.subr.bf16.mxu0 %v620
  %931 = vmatpush1.bf16.msra.mxu0 %v619
  %932 = vmatprep.subr.bf16.mxu0 %v623
  %933 = vmatpush1.bf16.msra.mxu0 %v622
  %934 = vmatprep.subr.bf16.mxu0 0
  %935 = vmatpush1.bf16.msra.mxu0 0
  %936 = vmatprep.subr.bf16.mxu0 0
  %937 = vmatpush1.bf16.msra.mxu0 0
  %938 = vmatprep.subr.bf16.mxu0 0
  %939 = vmatpush1.bf16.msra.mxu0 0
  %940 = vmatprep.subr.bf16.mxu0 0
  %941 = vmatpush1.bf16.msra.mxu0 0
  %942 = vmatprep.subr.bf16.mxu0 0
  %943 = vmatpush1.bf16.msra.mxu0 0
  %944 = vmatprep.subr.bf16.mxu0 0
  %945 = vmatpush1.bf16.msra.mxu0 0
  %946 = vmatprep.subr.bf16.mxu0 0
  %947 = vmatpush1.bf16.msra.mxu0 0
  %948 = vmatprep.subr.bf16.mxu0 0
  %949 = vmatpush1.bf16.msra.mxu0 0
  %950 = vmatprep.subr.bf16.mxu0 0
  %951 = vmatpush1.bf16.msra.mxu0 0
  %952 = vmatprep.subr.bf16.mxu0 0
  %953 = vmatpush1.bf16.msra.mxu0 0
  %954 = vmatprep.subr.bf16.mxu0 0
  %955 = vmatpush1.bf16.msra.mxu0 0
  %956 = vmatprep.subr.bf16.mxu0 0
  %957 = vmatpush1.bf16.msra.mxu0 0
  %958 = vmatprep.subr.bf16.mxu0 0
  %959 = vmatpush1.bf16.msra.mxu0 0
  %960 = vmatprep.subr.bf16.mxu0 0
  %961 = vmatpush1.bf16.msra.mxu0 0
  %962 = vmatprep.mubr.bf16.mxu0 0
  %963 = vmatmul.mubr.bf16.gmra.mrb[0].mxu0 %v928
  %v964 = vpop.f32.mrb[0].mxu0
  %v965 = vadd.f32 %v309, %v964
  %v966 = vpop.f32.mrb[0].mxu0
  %v967 = vadd.f32 %v313, %v966
  %v968 = vpop.f32.mrb[0].mxu0
  %v969 = vpop.f32.mrb[0].mxu0
  %970 = vdwg.mxu0
  %971 = vmatprep.subr.bf16.mxu0 0
  %972 = vmatpush1.bf16.msra.mxu0 %v621
  %973 = vmatprep.subr.bf16.mxu0 0
  %974 = vmatpush1.bf16.msra.mxu0 %v624
  %975 = vmatprep.subr.bf16.mxu0 0
  %976 = vmatpush1.bf16.msra.mxu0 0
  %977 = vmatprep.subr.bf16.mxu0 0
  %978 = vmatpush1.bf16.msra.mxu0 0
  %979 = vmatprep.subr.bf16.mxu0 0
  %980 = vmatpush1.bf16.msra.mxu0 0
  %981 = vmatprep.subr.bf16.mxu0 0
  %982 = vmatpush1.bf16.msra.mxu0 0
  %983 = vmatprep.subr.bf16.mxu0 0
  %984 = vmatpush1.bf16.msra.mxu0 0
  %985 = vmatprep.subr.bf16.mxu0 0
  %986 = vmatpush1.bf16.msra.mxu0 0
  %987 = vmatprep.subr.bf16.mxu0 0
  %988 = vmatpush1.bf16.msra.mxu0 0
  %989 = vmatprep.subr.bf16.mxu0 0
  %990 = vmatpush1.bf16.msra.mxu0 0
  %991 = vmatprep.subr.bf16.mxu0 0
  %992 = vmatpush1.bf16.msra.mxu0 0
  %993 = vmatprep.subr.bf16.mxu0 0
  %994 = vmatpush1.bf16.msra.mxu0 0
  %995 = vmatprep.subr.bf16.mxu0 0
  %996 = vmatpush1.bf16.msra.mxu0 0
  %997 = vmatprep.subr.bf16.mxu0 0
  %998 = vmatpush1.bf16.msra.mxu0 0
  %999 = vmatprep.subr.bf16.mxu0 0
  %1000 = vmatpush1.bf16.msra.mxu0 0
  %1001 = vmatprep.subr.bf16.mxu0 0
  %1002 = vmatpush1.bf16.msra.mxu0 0
  %1003 = vmatprep.mubr.bf16.mxu0 0
  %1004 = vmatmul.mubr.bf16.gmra.mrb[0].mxu0 %v928
  %v1005 = vpop.f32.mrb[0].mxu0
  %v1006 = vadd.f32 %v317, %v1005
  %v1007 = vpop.f32.mrb[0].mxu0
  %v1008 = vpop.f32.mrb[0].mxu0
  %v1009 = vpop.f32.mrb[0].mxu0
  %1010 = vdwg.mxu0
  %v1011 = vadd.f32 %v880, %v965
  %v1012 = vxor.u32 %v1011, 2147483648
  %v1013 = vmul.f32 %v1012, 1.442695
  %v1014 = vpow.pop %v1013
  %v1015 = vadd.f32 %v1014, 1.0
  %v1016 = vrcp.pop %v1015
  %v1017 = vmul.f32 1.0, %v1016
  %v1018 = vadd.f32 %v882, %v967
  %v1019 = vxor.u32 %v1018, 2147483648
  %v1020 = vmul.f32 %v1019, 1.442695
  %v1021 = vpow.pop %v1020
  %v1022 = vadd.f32 %v1021, 1.0
  %v1023 = vrcp.pop %v1022
  %v1024 = vmul.f32 1.0, %v1023
  %v1025 = vmul.f32 %v1017, %v1006
  %v1026 = vadd.f32 %v921, %v1025
  %v1027 = vtanh.pop %v1026
  %v1028 = vsub.f32 1.0, %v1024
  %v1029 = vmul.f32 %v1028, %v1027
  %v1030 = vmul.f32 %v1024, %v732
  %v1031 = vadd.f32 %v1029, %v1030
  %s1032 = smul.u32 2, 3
  %s1033 = smul.addr %s1032, 8
  %s1034 = scalar_lea.vmem [#allocation2], %s1033
  %v1035 = vld [vmem:[%s1034] sm:$0xff]
  %v1036 = vld [vmem:[%s1034 + $0x8] sm:$0xff]
  %v1037 = vld [vmem:[%s1034 + $0x10] sm:$0xff]
  %1038 = vmatprep.subr.bf16.mxu0 %v365
  %1039 = vmatpush1.bf16.msra.mxu0 %v364
  %1040 = vmatprep.subr.bf16.mxu0 %v368
  %1041 = vmatpush1.bf16.msra.mxu0 %v367
  %1042 = vmatprep.subr.bf16.mxu0 0
  %1043 = vmatpush1.bf16.msra.mxu0 0
  %1044 = vmatprep.subr.bf16.mxu0 0
  %1045 = vmatpush1.bf16.msra.mxu0 0
  %1046 = vmatprep.subr.bf16.mxu0 0
  %1047 = vmatpush1.bf16.msra.mxu0 0
  %1048 = vmatprep.subr.bf16.mxu0 0
  %1049 = vmatpush1.bf16.msra.mxu0 0
  %1050 = vmatprep.subr.bf16.mxu0 0
  %1051 = vmatpush1.bf16.msra.mxu0 0
  %1052 = vmatprep.subr.bf16.mxu0 0
  %1053 = vmatpush1.bf16.msra.mxu0 0
  %1054 = vmatprep.subr.bf16.mxu0 0
  %1055 = vmatpush1.bf16.msra.mxu0 0
  %1056 = vmatprep.subr.bf16.mxu0 0
  %1057 = vmatpush1.bf16.msra.mxu0 0
  %1058 = vmatprep.subr.bf16.mxu0 0
  %1059 = vmatpush1.bf16.msra.mxu0 0
  %1060 = vmatprep.subr.bf16.mxu0 0
  %1061 = vmatpush1.bf16.msra.mxu0 0
  %1062 = vmatprep.subr.bf16.mxu0 0
  %1063 = vmatpush1.bf16.msra.mxu0 0
  %1064 = vmatprep.subr.bf16.mxu0 0
  %1065 = vmatpush1.bf16.msra.mxu0 0
  %1066 = vmatprep.subr.bf16.mxu0 0
  %1067 = vmatpush1.bf16.msra.mxu0 0
  %1068 = vmatprep.subr.bf16.mxu0 0
  %1069 = vmatpush1.bf16.msra.mxu0 0
  %1070 = vmatprep.mubr.bf16.mxu0 0
  %1071 = vmatmul.mubr.bf16.gmra.mrb[0].mxu0 %v843
  %v1072 = vpop.f32.mrb[0].mxu0
  %v1073 = vadd.f32 %v292, %v1072
  %v1074 = vpop.f32.mrb[0].mxu0
  %v1075 = vadd.f32 %v296, %v1074
  %v1076 = vpop.f32.mrb[0].mxu0
  %v1077 = vpop.f32.mrb[0].mxu0
  %1078 = vdwg.mxu0
  %1079 = vmatprep.subr.bf16.mxu0 0
  %1080 = vmatpush1.bf16.msra.mxu0 %v366
  %1081 = vmatprep.subr.bf16.mxu0 0
  %1082 = vmatpush1.bf16.msra.mxu0 %v369
  %1083 = vmatprep.subr.bf16.mxu0 0
  %1084 = vmatpush1.bf16.msra.mxu0 0
  %1085 = vmatprep.subr.bf16.mxu0 0
  %1086 = vmatpush1.bf16.msra.mxu0 0
  %1087 = vmatprep.subr.bf16.mxu0 0
  %1088 = vmatpush1.bf16.msra.mxu0 0
  %1089 = vmatprep.subr.bf16.mxu0 0
  %1090 = vmatpush1.bf16.msra.mxu0 0
  %1091 = vmatprep.subr.bf16.mxu0 0
  %1092 = vmatpush1.bf16.msra.mxu0 0
  %1093 = vmatprep.subr.bf16.mxu0 0
  %1094 = vmatpush1.bf16.msra.mxu0 0
  %1095 = vmatprep.subr.bf16.mxu0 0
  %1096 = vmatpush1.bf16.msra.mxu0 0
  %1097 = vmatprep.subr.bf16.mxu0 0
  %1098 = vmatpush1.bf16.msra.mxu0 0
  %1099 = vmatprep.subr.bf16.mxu0 0
  %1100 = vmatpush1.bf16.msra.mxu0 0
  %1101 = vmatprep.subr.bf16.mxu0 0
  %1102 = vmatpush1.bf16.msra.mxu0 0
  %1103 = vmatprep.subr.bf16.mxu0 0
  %1104 = vmatpush1.bf16.msra.mxu0 0
  %1105 = vmatprep.subr.bf16.mxu0 0
  %1106 = vmatpush1.bf16.msra.mxu0 0
  %1107 = vmatprep.subr.bf16.mxu0 0
  %1108 = vmatpush1.bf16.msra.mxu0 0
  %1109 = vmatprep.subr.bf16.mxu0 0
  %1110 = vmatpush1.bf16.msra.mxu0 0
  %1111 = vmatprep.mubr.bf16.mxu0 0
  %1112 = vmatmul.mubr.bf16.gmra.mrb[0].mxu0 %v843
  %v1113 = vpop.f32.mrb[0].mxu0
  %v1114 = vadd.f32 %v300, %v1113
  %v1115 = vpop.f32.mrb[0].mxu0
  %v1116 = vpop.f32.mrb[0].mxu0
  %v1117 = vpop.f32.mrb[0].mxu0
  %1118 = vdwg.mxu0
  %v1119 = vadd.f32 %v1035, %v1073
  %v1120 = vxor.u32 %v1119, 2147483648
  %v1121 = vmul.f32 %v1120, 1.442695
  %v1122 = vpow.pop %v1121
  %v1123 = vadd.f32 %v1122, 1.0
  %v1124 = vrcp.pop %v1123
  %v1125 = vmul.f32 1.0, %v1124
  %v1126 = vadd.f32 %v1036, %v1075
  %v1127 = vxor.u32 %v1126, 2147483648
  %v1128 = vmul.f32 %v1127, 1.442695
  %v1129 = vpow.pop %v1128
  %v1130 = vadd.f32 %v1129, 1.0
  %v1131 = vrcp.pop %v1130
  %v1132 = vmul.f32 1.0, %v1131
  %v1133 = vmul.f32 %v1125, %v1114
  %v1134 = vadd.f32 %v1037, %v1133
  %v1135 = vtanh.pop %v1134
  %v1136 = vsub.f32 1.0, %v1132
  %v1137 = vmul.f32 %v1136, %v1135
  %v1138 = vmul.f32 %v1132, %v840
  %v1139 = vadd.f32 %v1137, %v1138
  %v1140 = vpack.c.bf16 %v1139, %v1139
  %v1142 = vsel %vm376, %v1140, 0
  %1144 = vmatprep.subr.bf16.mxu0 %v504
  %1145 = vmatpush1.bf16.msra.mxu0 %v503
  %1146 = vmatprep.subr.bf16.mxu0 %v507
  %1147 = vmatpush1.bf16.msra.mxu0 %v506
  %1148 = vmatprep.subr.bf16.mxu0 0
  %1149 = vmatpush1.bf16.msra.mxu0 0
  %1150 = vmatprep.subr.bf16.mxu0 0
  %1151 = vmatpush1.bf16.msra.mxu0 0
  %1152 = vmatprep.subr.bf16.mxu0 0
  %1153 = vmatpush1.bf16.msra.mxu0 0
  %1154 = vmatprep.subr.bf16.mxu0 0
  %1155 = vmatpush1.bf16.msra.mxu0 0
  %1156 = vmatprep.subr.bf16.mxu0 0
  %1157 = vmatpush1.bf16.msra.mxu0 0
  %1158 = vmatprep.subr.bf16.mxu0 0
  %1159 = vmatpush1.bf16.msra.mxu0 0
  %1160 = vmatprep.subr.bf16.mxu0 0
  %1161 = vmatpush1.bf16.msra.mxu0 0
  %1162 = vmatprep.subr.bf16.mxu0 0
  %1163 = vmatpush1.bf16.msra.mxu0 0
  %1164 = vmatprep.subr.bf16.mxu0 0
  %1165 = vmatpush1.bf16.msra.mxu0 0
  %1166 = vmatprep.subr.bf16.mxu0 0
  %1167 = vmatpush1.bf16.msra.mxu0 0
  %1168 = vmatprep.subr.bf16.mxu0 0
  %1169 = vmatpush1.bf16.msra.mxu0 0
  %1170 = vmatprep.subr.bf16.mxu0 0
  %1171 = vmatpush1.bf16.msra.mxu0 0
  %1172 = vmatprep.subr.bf16.mxu0 0
  %1173 = vmatpush1.bf16.msra.mxu0 0
  %1174 = vmatprep.subr.bf16.mxu0 0
  %1175 = vmatpush1.bf16.msra.mxu0 0
  %1176 = vmatprep.mubr.bf16.mxu0 0
  %1177 = vmatmul.mubr.bf16.gmra.mrb[0].mxu0 %v1142
  %v1178 = vpop.f32.mrb[0].mxu0
  %v1179 = vadd.f32 %v326, %v1178
  %v1180 = vpop.f32.mrb[0].mxu0
  %v1181 = vadd.f32 %v330, %v1180
  %v1182 = vpop.f32.mrb[0].mxu0
  %v1183 = vpop.f32.mrb[0].mxu0
  %1184 = vdwg.mxu0
  %1185 = vmatprep.subr.bf16.mxu0 0
  %1186 = vmatpush1.bf16.msra.mxu0 %v505
  %1187 = vmatprep.subr.bf16.mxu0 0
  %1188 = vmatpush1.bf16.msra.mxu0 %v508
  %1189 = vmatprep.subr.bf16.mxu0 0
  %1190 = vmatpush1.bf16.msra.mxu0 0
  %1191 = vmatprep.subr.bf16.mxu0 0
  %1192 = vmatpush1.bf16.msra.mxu0 0
  %1193 = vmatprep.subr.bf16.mxu0 0
  %1194 = vmatpush1.bf16.msra.mxu0 0
  %1195 = vmatprep.subr.bf16.mxu0 0
  %1196 = vmatpush1.bf16.msra.mxu0 0
  %1197 = vmatprep.subr.bf16.mxu0 0
  %1198 = vmatpush1.bf16.msra.mxu0 0
  %1199 = vmatprep.subr.bf16.mxu0 0
  %1200 = vmatpush1.bf16.msra.mxu0 0
  %1201 = vmatprep.subr.bf16.mxu0 0
  %1202 = vmatpush1.bf16.msra.mxu0 0
  %1203 = vmatprep.subr.bf16.mxu0 0
  %1204 = vmatpush1.bf16.msra.mxu0 0
  %1205 = vmatprep.subr.bf16.mxu0 0
  %1206 = vmatpush1.bf16.msra.mxu0 0
  %1207 = vmatprep.subr.bf16.mxu0 0
  %1208 = vmatpush1.bf16.msra.mxu0 0
  %1209 = vmatprep.subr.bf16.mxu0 0
  %1210 = vmatpush1.bf16.msra.mxu0 0
  %1211 = vmatprep.subr.bf16.mxu0 0
  %1212 = vmatpush1.bf16.msra.mxu0 0
  %1213 = vmatprep.subr.bf16.mxu0 0
  %1214 = vmatpush1.bf16.msra.mxu0 0
  %1215 = vmatprep.subr.bf16.mxu0 0
  %1216 = vmatpush1.bf16.msra.mxu0 0
  %1217 = vmatprep.mubr.bf16.mxu0 0
  %1218 = vmatmul.mubr.bf16.gmra.mrb[0].mxu0 %v1142
  %v1219 = vpop.f32.mrb[0].mxu0
  %v1220 = vadd.f32 %v334, %v1219
  %v1221 = vpop.f32.mrb[0].mxu0
  %v1222 = vpop.f32.mrb[0].mxu0
  %v1223 = vpop.f32.mrb[0].mxu0
  %1224 = vdwg.mxu0
  %v1225 = vpack.c.bf16 %v1031, %v1031
  %v1227 = vsel %vm376, %v1225, 0
  %1229 = vmatprep.subr.bf16.mxu0 %v620
  %1230 = vmatpush1.bf16.msra.mxu0 %v619
  %1231 = vmatprep.subr.bf16.mxu0 %v623
  %1232 = vmatpush1.bf16.msra.mxu0 %v622
  %1233 = vmatprep.subr.bf16.mxu0 0
  %1234 = vmatpush1.bf16.msra.mxu0 0
  %1235 = vmatprep.subr.bf16.mxu0 0
  %1236 = vmatpush1.bf16.msra.mxu0 0
  %1237 = vmatprep.subr.bf16.mxu0 0
  %1238 = vmatpush1.bf16.msra.mxu0 0
  %1239 = vmatprep.subr.bf16.mxu0 0
  %1240 = vmatpush1.bf16.msra.mxu0 0
  %1241 = vmatprep.subr.bf16.mxu0 0
  %1242 = vmatpush1.bf16.msra.mxu0 0
  %1243 = vmatprep.subr.bf16.mxu0 0
  %1244 = vmatpush1.bf16.msra.mxu0 0
  %1245 = vmatprep.subr.bf16.mxu0 0
  %1246 = vmatpush1.bf16.msra.mxu0 0
  %1247 = vmatprep.subr.bf16.mxu0 0
  %1248 = vmatpush1.bf16.msra.mxu0 0
  %1249 = vmatprep.subr.bf16.mxu0 0
  %1250 = vmatpush1.bf16.msra.mxu0 0
  %1251 = vmatprep.subr.bf16.mxu0 0
  %1252 = vmatpush1.bf16.msra.mxu0 0
  %1253 = vmatprep.subr.bf16.mxu0 0
  %1254 = vmatpush1.bf16.msra.mxu0 0
  %1255 = vmatprep.subr.bf16.mxu0 0
  %1256 = vmatpush1.bf16.msra.mxu0 0
  %1257 = vmatprep.subr.bf16.mxu0 0
  %1258 = vmatpush1.bf16.msra.mxu0 0
  %1259 = vmatprep.subr.bf16.mxu0 0
  %1260 = vmatpush1.bf16.msra.mxu0 0
  %1261 = vmatprep.mubr.bf16.mxu0 0
  %1262 = vmatmul.mubr.bf16.gmra.mrb[0].mxu0 %v1227
  %v1263 = vpop.f32.mrb[0].mxu0
  %v1264 = vadd.f32 %v309, %v1263
  %v1265 = vpop.f32.mrb[0].mxu0
  %v1266 = vadd.f32 %v313, %v1265
  %v1267 = vpop.f32.mrb[0].mxu0
  %v1268 = vpop.f32.mrb[0].mxu0
  %1269 = vdwg.mxu0
  %1270 = vmatprep.subr.bf16.mxu0 0
  %1271 = vmatpush1.bf16.msra.mxu0 %v621
  %1272 = vmatprep.subr.bf16.mxu0 0
  %1273 = vmatpush1.bf16.msra.mxu0 %v624
  %1274 = vmatprep.subr.bf16.mxu0 0
  %1275 = vmatpush1.bf16.msra.mxu0 0
  %1276 = vmatprep.subr.bf16.mxu0 0
  %1277 = vmatpush1.bf16.msra.mxu0 0
  %1278 = vmatprep.subr.bf16.mxu0 0
  %1279 = vmatpush1.bf16.msra.mxu0 0
  %1280 = vmatprep.subr.bf16.mxu0 0
  %1281 = vmatpush1.bf16.msra.mxu0 0
  %1282 = vmatprep.subr.bf16.mxu0 0
  %1283 = vmatpush1.bf16.msra.mxu0 0
  %1284 = vmatprep.subr.bf16.mxu0 0
  %1285 = vmatpush1.bf16.msra.mxu0 0
  %1286 = vmatprep.subr.bf16.mxu0 0
  %1287 = vmatpush1.bf16.msra.mxu0 0
  %1288 = vmatprep.subr.bf16.mxu0 0
  %1289 = vmatpush1.bf16.msra.mxu0 0
  %1290 = vmatprep.subr.bf16.mxu0 0
  %1291 = vmatpush1.bf16.msra.mxu0 0
  %1292 = vmatprep.subr.bf16.mxu0 0
  %1293 = vmatpush1.bf16.msra.mxu0 0
  %1294 = vmatprep.subr.bf16.mxu0 0
  %1295 = vmatpush1.bf16.msra.mxu0 0
  %1296 = vmatprep.subr.bf16.mxu0 0
  %1297 = vmatpush1.bf16.msra.mxu0 0
  %1298 = vmatprep.subr.bf16.mxu0 0
  %1299 = vmatpush1.bf16.msra.mxu0 0
  %1300 = vmatprep.subr.bf16.mxu0 0
  %1301 = vmatpush1.bf16.msra.mxu0 0
  %1302 = vmatprep.mubr.bf16.mxu0 0
  %1303 = vmatmul.mubr.bf16.gmra.mrb[0].mxu0 %v1227
  %v1304 = vpop.f32.mrb[0].mxu0
  %v1305 = vadd.f32 %v317, %v1304
  %v1306 = vpop.f32.mrb[0].mxu0
  %v1307 = vpop.f32.mrb[0].mxu0
  %v1308 = vpop.f32.mrb[0].mxu0
  %1309 = vdwg.mxu0
  %v1310 = vadd.f32 %v1179, %v1264
  %v1311 = vxor.u32 %v1310, 2147483648
  %v1312 = vmul.f32 %v1311, 1.442695
  %v1313 = vpow.pop %v1312
  %v1314 = vadd.f32 %v1313, 1.0
  %v1315 = vrcp.pop %v1314
  %v1316 = vmul.f32 1.0, %v1315
  %v1317 = vadd.f32 %v1181, %v1266
  %v1318 = vxor.u32 %v1317, 2147483648
  %v1319 = vmul.f32 %v1318, 1.442695
  %v1320 = vpow.pop %v1319
  %v1321 = vadd.f32 %v1320, 1.0
  %v1322 = vrcp.pop %v1321
  %v1323 = vmul.f32 1.0, %v1322
  %v1324 = vmul.f32 %v1316, %v1305
  %v1325 = vadd.f32 %v1220, %v1324
  %v1326 = vtanh.pop %v1325
  %v1327 = vsub.f32 1.0, %v1323
  %v1328 = vmul.f32 %v1327, %v1326
  %v1329 = vmul.f32 %v1323, %v1031
  %v1330 = vadd.f32 %v1328, %v1329
  %s1331 = smul.u32 3, 3
  %s1332 = smul.addr %s1331, 8
  %s1333 = scalar_lea.vmem [#allocation2], %s1332
  %v1334 = vld [vmem:[%s1333] sm:$0xff]
  %v1335 = vld [vmem:[%s1333 + $0x8] sm:$0xff]
  %v1336 = vld [vmem:[%s1333 + $0x10] sm:$0xff]
  %1337 = vmatprep.subr.bf16.mxu0 %v365
  %1338 = vmatpush1.bf16.msra.mxu0 %v364
  %1339 = vmatprep.subr.bf16.mxu0 %v368
  %1340 = vmatpush1.bf16.msra.mxu0 %v367
  %1341 = vmatprep.subr.bf16.mxu0 0
  %1342 = vmatpush1.bf16.msra.mxu0 0
  %1343 = vmatprep.subr.bf16.mxu0 0
  %1344 = vmatpush1.bf16.msra.mxu0 0
  %1345 = vmatprep.subr.bf16.mxu0 0
  %1346 = vmatpush1.bf16.msra.mxu0 0
  %1347 = vmatprep.subr.bf16.mxu0 0
  %1348 = vmatpush1.bf16.msra.mxu0 0
  %1349 = vmatprep.subr.bf16.mxu0 0
  %1350 = vmatpush1.bf16.msra.mxu0 0
  %1351 = vmatprep.subr.bf16.mxu0 0
  %1352 = vmatpush1.bf16.msra.mxu0 0
  %1353 = vmatprep.subr.bf16.mxu0 0
  %1354 = vmatpush1.bf16.msra.mxu0 0
  %1355 = vmatprep.subr.bf16.mxu0 0
  %1356 = vmatpush1.bf16.msra.mxu0 0
  %1357 = vmatprep.subr.bf16.mxu0 0
  %1358 = vmatpush1.bf16.msra.mxu0 0
  %1359 = vmatprep.subr.bf16.mxu0 0
  %1360 = vmatpush1.bf16.msra.mxu0 0
  %1361 = vmatprep.subr.bf16.mxu0 0
  %1362 = vmatpush1.bf16.msra.mxu0 0
  %1363 = vmatprep.subr.bf16.mxu0 0
  %1364 = vmatpush1.bf16.msra.mxu0 0
  %1365 = vmatprep.subr.bf16.mxu0 0
  %1366 = vmatpush1.bf16.msra.mxu0 0
  %1367 = vmatprep.subr.bf16.mxu0 0
  %1368 = vmatpush1.bf16.msra.mxu0 0
  %1369 = vmatprep.mubr.bf16.mxu0 0
  %1370 = vmatmul.mubr.bf16.gmra.mrb[0].mxu0 %v1142
  %v1371 = vpop.f32.mrb[0].mxu0
  %v1372 = vadd.f32 %v292, %v1371
  %v1373 = vpop.f32.mrb[0].mxu0
  %v1374 = vadd.f32 %v296, %v1373
  %v1375 = vpop.f32.mrb[0].mxu0
  %v1376 = vpop.f32.mrb[0].mxu0
  %1377 = vdwg.mxu0
  %1378 = vmatprep.subr.bf16.mxu0 0
  %1379 = vmatpush1.bf16.msra.mxu0 %v366
  %1380 = vmatprep.subr.bf16.mxu0 0
  %1381 = vmatpush1.bf16.msra.mxu0 %v369
  %1382 = vmatprep.subr.bf16.mxu0 0
  %1383 = vmatpush1.bf16.msra.mxu0 0
  %1384 = vmatprep.subr.bf16.mxu0 0
  %1385 = vmatpush1.bf16.msra.mxu0 0
  %1386 = vmatprep.subr.bf16.mxu0 0
  %1387 = vmatpush1.bf16.msra.mxu0 0
  %1388 = vmatprep.subr.bf16.mxu0 0
  %1389 = vmatpush1.bf16.msra.mxu0 0
  %1390 = vmatprep.subr.bf16.mxu0 0
  %1391 = vmatpush1.bf16.msra.mxu0 0
  %1392 = vmatprep.subr.bf16.mxu0 0
  %1393 = vmatpush1.bf16.msra.mxu0 0
  %1394 = vmatprep.subr.bf16.mxu0 0
  %1395 = vmatpush1.bf16.msra.mxu0 0
  %1396 = vmatprep.subr.bf16.mxu0 0
  %1397 = vmatpush1.bf16.msra.mxu0 0
  %1398 = vmatprep.subr.bf16.mxu0 0
  %1399 = vmatpush1.bf16.msra.mxu0 0
  %1400 = vmatprep.subr.bf16.mxu0 0
  %1401 = vmatpush1.bf16.msra.mxu0 0
  %1402 = vmatprep.subr.bf16.mxu0 0
  %1403 = vmatpush1.bf16.msra.mxu0 0
  %1404 = vmatprep.subr.bf16.mxu0 0
  %1405 = vmatpush1.bf16.msra.mxu0 0
  %1406 = vmatprep.subr.bf16.mxu0 0
  %1407 = vmatpush1.bf16.msra.mxu0 0
  %1408 = vmatprep.subr.bf16.mxu0 0
  %1409 = vmatpush1.bf16.msra.mxu0 0
  %1410 = vmatprep.mubr.bf16.mxu0 0
  %1411 = vmatmul.mubr.bf16.gmra.mrb[0].mxu0 %v1142
  %v1412 = vpop.f32.mrb[0].mxu0
  %v1413 = vadd.f32 %v300, %v1412
  %v1414 = vpop.f32.mrb[0].mxu0
  %v1415 = vpop.f32.mrb[0].mxu0
  %v1416 = vpop.f32.mrb[0].mxu0
  %1417 = vdwg.mxu0
  %v1418 = vadd.f32 %v1334, %v1372
  %v1419 = vxor.u32 %v1418, 2147483648
  %v1420 = vmul.f32 %v1419, 1.442695
  %v1421 = vpow.pop %v1420
  %v1422 = vadd.f32 %v1421, 1.0
  %v1423 = vrcp.pop %v1422
  %v1424 = vmul.f32 1.0, %v1423
  %v1425 = vadd.f32 %v1335, %v1374
  %v1426 = vxor.u32 %v1425, 2147483648
  %v1427 = vmul.f32 %v1426, 1.442695
  %v1428 = vpow.pop %v1427
  %v1429 = vadd.f32 %v1428, 1.0
  %v1430 = vrcp.pop %v1429
  %v1431 = vmul.f32 1.0, %v1430
  %v1432 = vmul.f32 %v1424, %v1413
  %v1433 = vadd.f32 %v1336, %v1432
  %v1434 = vtanh.pop %v1433
  %v1435 = vsub.f32 1.0, %v1431
  %v1436 = vmul.f32 %v1435, %v1434
  %v1437 = vmul.f32 %v1431, %v1139
  %v1438 = vadd.f32 %v1436, %v1437
  %v1439 = vpack.c.bf16 %v1438, %v1438
  %v1441 = vsel %vm376, %v1439, 0
  %1443 = vmatprep.subr.bf16.mxu0 %v504
  %1444 = vmatpush1.bf16.msra.mxu0 %v503
  %1445 = vmatprep.subr.bf16.mxu0 %v507
  %1446 = vmatpush1.bf16.msra.mxu0 %v506
  %1447 = vmatprep.subr.bf16.mxu0 0
  %1448 = vmatpush1.bf16.msra.mxu0 0
  %1449 = vmatprep.subr.bf16.mxu0 0
  %1450 = vmatpush1.bf16.msra.mxu0 0
  %1451 = vmatprep.subr.bf16.mxu0 0
  %1452 = vmatpush1.bf16.msra.mxu0 0
  %1453 = vmatprep.subr.bf16.mxu0 0
  %1454 = vmatpush1.bf16.msra.mxu0 0
  %1455 = vmatprep.subr.bf16.mxu0 0
  %1456 = vmatpush1.bf16.msra.mxu0 0
  %1457 = vmatprep.subr.bf16.mxu0 0
  %1458 = vmatpush1.bf16.msra.mxu0 0
  %1459 = vmatprep.subr.bf16.mxu0 0
  %1460 = vmatpush1.bf16.msra.mxu0 0
  %1461 = vmatprep.subr.bf16.mxu0 0
  %1462 = vmatpush1.bf16.msra.mxu0 0
  %1463 = vmatprep.subr.bf16.mxu0 0
  %1464 = vmatpush1.bf16.msra.mxu0 0
  %1465 = vmatprep.subr.bf16.mxu0 0
  %1466 = vmatpush1.bf16.msra.mxu0 0
  %1467 = vmatprep.subr.bf16.mxu0 0
  %1468 = vmatpush1.bf16.msra.mxu0 0
  %1469 = vmatprep.subr.bf16.mxu0 0
  %1470 = vmatpush1.bf16.msra.mxu0 0
  %1471 = vmatprep.subr.bf16.mxu0 0
  %1472 = vmatpush1.bf16.msra.mxu0 0
  %1473 = vmatprep.subr.bf16.mxu0 0
  %1474 = vmatpush1.bf16.msra.mxu0 0
  %1475 = vmatprep.mubr.bf16.mxu0 0
  %1476 = vmatmul.mubr.bf16.gmra.mrb[0].mxu0 %v1441
  %v1477 = vpop.f32.mrb[0].mxu0
  %v1478 = vadd.f32 %v326, %v1477
  %v1479 = vpop.f32.mrb[0].mxu0
  %v1480 = vadd.f32 %v330, %v1479
  %v1481 = vpop.f32.mrb[0].mxu0
  %v1482 = vpop.f32.mrb[0].mxu0
  %1483 = vdwg.mxu0
  %1484 = vmatprep.subr.bf16.mxu0 0
  %1485 = vmatpush1.bf16.msra.mxu0 %v505
  %1486 = vmatprep.subr.bf16.mxu0 0
  %1487 = vmatpush1.bf16.msra.mxu0 %v508
  %1488 = vmatprep.subr.bf16.mxu0 0
  %1489 = vmatpush1.bf16.msra.mxu0 0
  %1490 = vmatprep.subr.bf16.mxu0 0
  %1491 = vmatpush1.bf16.msra.mxu0 0
  %1492 = vmatprep.subr.bf16.mxu0 0
  %1493 = vmatpush1.bf16.msra.mxu0 0
  %1494 = vmatprep.subr.bf16.mxu0 0
  %1495 = vmatpush1.bf16.msra.mxu0 0
  %1496 = vmatprep.subr.bf16.mxu0 0
  %1497 = vmatpush1.bf16.msra.mxu0 0
  %1498 = vmatprep.subr.bf16.mxu0 0
  %1499 = vmatpush1.bf16.msra.mxu0 0
  %1500 = vmatprep.subr.bf16.mxu0 0
  %1501 = vmatpush1.bf16.msra.mxu0 0
  %1502 = vmatprep.subr.bf16.mxu0 0
  %1503 = vmatpush1.bf16.msra.mxu0 0
  %1504 = vmatprep.subr.bf16.mxu0 0
  %1505 = vmatpush1.bf16.msra.mxu0 0
  %1506 = vmatprep.subr.bf16.mxu0 0
  %1507 = vmatpush1.bf16.msra.mxu0 0
  %1508 = vmatprep.subr.bf16.mxu0 0
  %1509 = vmatpush1.bf16.msra.mxu0 0
  %1510 = vmatprep.subr.bf16.mxu0 0
  %1511 = vmatpush1.bf16.msra.mxu0 0
  %1512 = vmatprep.subr.bf16.mxu0 0
  %1513 = vmatpush1.bf16.msra.mxu0 0
  %1514 = vmatprep.subr.bf16.mxu0 0
  %1515 = vmatpush1.bf16.msra.mxu0 0
  %1516 = vmatprep.mubr.bf16.mxu0 0
  %1517 = vmatmul.mubr.bf16.gmra.mrb[0].mxu0 %v1441
  %v1518 = vpop.f32.mrb[0].mxu0
  %v1519 = vadd.f32 %v334, %v1518
  %v1520 = vpop.f32.mrb[0].mxu0
  %v1521 = vpop.f32.mrb[0].mxu0
  %v1522 = vpop.f32.mrb[0].mxu0
  %1523 = vdwg.mxu0
  %v1524 = vpack.c.bf16 %v1330, %v1330
  %v1526 = vsel %vm376, %v1524, 0
  %1528 = vmatprep.subr.bf16.mxu0 %v620
  %1529 = vmatpush1.bf16.msra.mxu0 %v619
  %1530 = vmatprep.subr.bf16.mxu0 %v623
  %1531 = vmatpush1.bf16.msra.mxu0 %v622
  %1532 = vmatprep.subr.bf16.mxu0 0
  %1533 = vmatpush1.bf16.msra.mxu0 0
  %1534 = vmatprep.subr.bf16.mxu0 0
  %1535 = vmatpush1.bf16.msra.mxu0 0
  %1536 = vmatprep.subr.bf16.mxu0 0
  %1537 = vmatpush1.bf16.msra.mxu0 0
  %1538 = vmatprep.subr.bf16.mxu0 0
  %1539 = vmatpush1.bf16.msra.mxu0 0
  %1540 = vmatprep.subr.bf16.mxu0 0
  %1541 = vmatpush1.bf16.msra.mxu0 0
  %1542 = vmatprep.subr.bf16.mxu0 0
  %1543 = vmatpush1.bf16.msra.mxu0 0
  %1544 = vmatprep.subr.bf16.mxu0 0
  %1545 = vmatpush1.bf16.msra.mxu0 0
  %1546 = vmatprep.subr.bf16.mxu0 0
  %1547 = vmatpush1.bf16.msra.mxu0 0
  %1548 = vmatprep.subr.bf16.mxu0 0
  %1549 = vmatpush1.bf16.msra.mxu0 0
  %1550 = vmatprep.subr.bf16.mxu0 0
  %1551 = vmatpush1.bf16.msra.mxu0 0
  %1552 = vmatprep.subr.bf16.mxu0 0
  %1553 = vmatpush1.bf16.msra.mxu0 0
  %1554 = vmatprep.subr.bf16.mxu0 0
  %1555 = vmatpush1.bf16.msra.mxu0 0
  %1556 = vmatprep.subr.bf16.mxu0 0
  %1557 = vmatpush1.bf16.msra.mxu0 0
  %1558 = vmatprep.subr.bf16.mxu0 0
  %1559 = vmatpush1.bf16.msra.mxu0 0
  %1560 = vmatprep.mubr.bf16.mxu0 0
  %1561 = vmatmul.mubr.bf16.gmra.mrb[0].mxu0 %v1526
  %v1562 = vpop.f32.mrb[0].mxu0
  %v1563 = vadd.f32 %v309, %v1562
  %v1564 = vpop.f32.mrb[0].mxu0
  %v1565 = vadd.f32 %v313, %v1564
  %v1566 = vpop.f32.mrb[0].mxu0
  %v1567 = vpop.f32.mrb[0].mxu0
  %1568 = vdwg.mxu0
  %1569 = vmatprep.subr.bf16.mxu0 0
  %1570 = vmatpush1.bf16.msra.mxu0 %v621
  %1571 = vmatprep.subr.bf16.mxu0 0
  %1572 = vmatpush1.bf16.msra.mxu0 %v624
  %1573 = vmatprep.subr.bf16.mxu0 0
  %1574 = vmatpush1.bf16.msra.mxu0 0
  %1575 = vmatprep.subr.bf16.mxu0 0
  %1576 = vmatpush1.bf16.msra.mxu0 0
  %1577 = vmatprep.subr.bf16.mxu0 0
  %1578 = vmatpush1.bf16.msra.mxu0 0
  %1579 = vmatprep.subr.bf16.mxu0 0
  %1580 = vmatpush1.bf16.msra.mxu0 0
  %1581 = vmatprep.subr.bf16.mxu0 0
  %1582 = vmatpush1.bf16.msra.mxu0 0
  %1583 = vmatprep.subr.bf16.mxu0 0
  %1584 = vmatpush1.bf16.msra.mxu0 0
  %1585 = vmatprep.subr.bf16.mxu0 0
  %1586 = vmatpush1.bf16.msra.mxu0 0
  %1587 = vmatprep.subr.bf16.mxu0 0
  %1588 = vmatpush1.bf16.msra.mxu0 0
  %1589 = vmatprep.subr.bf16.mxu0 0
  %1590 = vmatpush1.bf16.msra.mxu0 0
  %1591 = vmatprep.subr.bf16.mxu0 0
  %1592 = vmatpush1.bf16.msra.mxu0 0
  %1593 = vmatprep.subr.bf16.mxu0 0
  %1594 = vmatpush1.bf16.msra.mxu0 0
  %1595 = vmatprep.subr.bf16.mxu0 0
  %1596 = vmatpush1.bf16.msra.mxu0 0
  %1597 = vmatprep.subr.bf16.mxu0 0
  %1598 = vmatpush1.bf16.msra.mxu0 0
  %1599 = vmatprep.subr.bf16.mxu0 0
  %1600 = vmatpush1.bf16.msra.mxu0 0
  %1601 = vmatprep.mubr.bf16.mxu0 0
  %1602 = vmatmul.mubr.bf16.gmra.mrb[0].mxu0 %v1526
  %v1603 = vpop.f32.mrb[0].mxu0
  %v1604 = vadd.f32 %v317, %v1603
  %v1605 = vpop.f32.mrb[0].mxu0
  %v1606 = vpop.f32.mrb[0].mxu0
  %v1607 = vpop.f32.mrb[0].mxu0
  %1608 = vdwg.mxu0
  %v1609 = vadd.f32 %v1478, %v1563
  %v1610 = vxor.u32 %v1609, 2147483648
  %v1611 = vmul.f32 %v1610, 1.442695
  %v1612 = vpow.pop %v1611
  %v1613 = vadd.f32 %v1612, 1.0
  %v1614 = vrcp.pop %v1613
  %v1615 = vmul.f32 1.0, %v1614
  %v1616 = vadd.f32 %v1480, %v1565
  %v1617 = vxor.u32 %v1616, 2147483648
  %v1618 = vmul.f32 %v1617, 1.442695
  %v1619 = vpow.pop %v1618
  %v1620 = vadd.f32 %v1619, 1.0
  %v1621 = vrcp.pop %v1620
  %v1622 = vmul.f32 1.0, %v1621
  %v1623 = vmul.f32 %v1615, %v1604
  %v1624 = vadd.f32 %v1519, %v1623
  %v1625 = vtanh.pop %v1624
  %v1626 = vsub.f32 1.0, %v1622
  %v1627 = vmul.f32 %v1626, %v1625
  %v1628 = vmul.f32 %v1622, %v1330
  %v1629 = vadd.f32 %v1627, %v1628
  %s1630 = smul.u32 4, 3
  %s1631 = smul.addr %s1630, 8
  %s1632 = scalar_lea.vmem [#allocation2], %s1631
  %v1633 = vld [vmem:[%s1632] sm:$0xff]
  %v1634 = vld [vmem:[%s1632 + $0x8] sm:$0xff]
  %v1635 = vld [vmem:[%s1632 + $0x10] sm:$0xff]
  %1636 = vmatprep.subr.bf16.mxu0 %v365
  %1637 = vmatpush1.bf16.msra.mxu0 %v364
  %1638 = vmatprep.subr.bf16.mxu0 %v368
  %1639 = vmatpush1.bf16.msra.mxu0 %v367
  %1640 = vmatprep.subr.bf16.mxu0 0
  %1641 = vmatpush1.bf16.msra.mxu0 0
  %1642 = vmatprep.subr.bf16.mxu0 0
  %1643 = vmatpush1.bf16.msra.mxu0 0
  %1644 = vmatprep.subr.bf16.mxu0 0
  %1645 = vmatpush1.bf16.msra.mxu0 0
  %1646 = vmatprep.subr.bf16.mxu0 0
  %1647 = vmatpush1.bf16.msra.mxu0 0
  %1648 = vmatprep.subr.bf16.mxu0 0
  %1649 = vmatpush1.bf16.msra.mxu0 0
  %1650 = vmatprep.subr.bf16.mxu0 0
  %1651 = vmatpush1.bf16.msra.mxu0 0
  %1652 = vmatprep.subr.bf16.mxu0 0
  %1653 = vmatpush1.bf16.msra.mxu0 0
  %1654 = vmatprep.subr.bf16.mxu0 0
  %1655 = vmatpush1.bf16.msra.mxu0 0
  %1656 = vmatprep.subr.bf16.mxu0 0
  %1657 = vmatpush1.bf16.msra.mxu0 0
  %1658 = vmatprep.subr.bf16.mxu0 0
  %1659 = vmatpush1.bf16.msra.mxu0 0
  %1660 = vmatprep.subr.bf16.mxu0 0
  %1661 = vmatpush1.bf16.msra.mxu0 0
  %1662 = vmatprep.subr.bf16.mxu0 0
  %1663 = vmatpush1.bf16.msra.mxu0 0
  %1664 = vmatprep.subr.bf16.mxu0 0
  %1665 = vmatpush1.bf16.msra.mxu0 0
  %1666 = vmatprep.subr.bf16.mxu0 0
  %1667 = vmatpush1.bf16.msra.mxu0 0
  %1668 = vmatprep.mubr.bf16.mxu0 0
  %1669 = vmatmul.mubr.bf16.gmra.mrb[0].mxu0 %v1441
  %v1670 = vpop.f32.mrb[0].mxu0
  %v1671 = vadd.f32 %v292, %v1670
  %v1672 = vpop.f32.mrb[0].mxu0
  %v1673 = vadd.f32 %v296, %v1672
  %v1674 = vpop.f32.mrb[0].mxu0
  %v1675 = vpop.f32.mrb[0].mxu0
  %1676 = vdwg.mxu0
  %1677 = vmatprep.subr.bf16.mxu0 0
  %1678 = vmatpush1.bf16.msra.mxu0 %v366
  %1679 = vmatprep.subr.bf16.mxu0 0
  %1680 = vmatpush1.bf16.msra.mxu0 %v369
  %1681 = vmatprep.subr.bf16.mxu0 0
  %1682 = vmatpush1.bf16.msra.mxu0 0
  %1683 = vmatprep.subr.bf16.mxu0 0
  %1684 = vmatpush1.bf16.msra.mxu0 0
  %1685 = vmatprep.subr.bf16.mxu0 0
  %1686 = vmatpush1.bf16.msra.mxu0 0
  %1687 = vmatprep.subr.bf16.mxu0 0
  %1688 = vmatpush1.bf16.msra.mxu0 0
  %1689 = vmatprep.subr.bf16.mxu0 0
  %1690 = vmatpush1.bf16.msra.mxu0 0
  %1691 = vmatprep.subr.bf16.mxu0 0
  %1692 = vmatpush1.bf16.msra.mxu0 0
  %1693 = vmatprep.subr.bf16.mxu0 0
  %1694 = vmatpush1.bf16.msra.mxu0 0
  %1695 = vmatprep.subr.bf16.mxu0 0
  %1696 = vmatpush1.bf16.msra.mxu0 0
  %1697 = vmatprep.subr.bf16.mxu0 0
  %1698 = vmatpush1.bf16.msra.mxu0 0
  %1699 = vmatprep.subr.bf16.mxu0 0
  %1700 = vmatpush1.bf16.msra.mxu0 0
  %1701 = vmatprep.subr.bf16.mxu0 0
  %1702 = vmatpush1.bf16.msra.mxu0 0
  %1703 = vmatprep.subr.bf16.mxu0 0
  %1704 = vmatpush1.bf16.msra.mxu0 0
  %1705 = vmatprep.subr.bf16.mxu0 0
  %1706 = vmatpush1.bf16.msra.mxu0 0
  %1707 = vmatprep.subr.bf16.mxu0 0
  %1708 = vmatpush1.bf16.msra.mxu0 0
  %1709 = vmatprep.mubr.bf16.mxu0 0
  %1710 = vmatmul.mubr.bf16.gmra.mrb[0].mxu0 %v1441
  %v1711 = vpop.f32.mrb[0].mxu0
  %v1712 = vadd.f32 %v300, %v1711
  %v1713 = vpop.f32.mrb[0].mxu0
  %v1714 = vpop.f32.mrb[0].mxu0
  %v1715 = vpop.f32.mrb[0].mxu0
  %1716 = vdwg.mxu0
  %v1717 = vadd.f32 %v1633, %v1671
  %v1718 = vxor.u32 %v1717, 2147483648
  %v1719 = vmul.f32 %v1718, 1.442695
  %v1720 = vpow.pop %v1719
  %v1721 = vadd.f32 %v1720, 1.0
  %v1722 = vrcp.pop %v1721
  %v1723 = vmul.f32 1.0, %v1722
  %v1724 = vadd.f32 %v1634, %v1673
  %v1725 = vxor.u32 %v1724, 2147483648
  %v1726 = vmul.f32 %v1725, 1.442695
  %v1727 = vpow.pop %v1726
  %v1728 = vadd.f32 %v1727, 1.0
  %v1729 = vrcp.pop %v1728
  %v1730 = vmul.f32 1.0, %v1729
  %v1731 = vmul.f32 %v1723, %v1712
  %v1732 = vadd.f32 %v1635, %v1731
  %v1733 = vtanh.pop %v1732
  %v1734 = vsub.f32 1.0, %v1730
  %v1735 = vmul.f32 %v1734, %v1733
  %v1736 = vmul.f32 %v1730, %v1438
  %v1737 = vadd.f32 %v1735, %v1736
  %v1738 = vpack.c.bf16 %v1737, %v1737
  %v1740 = vsel %vm376, %v1738, 0
  %1742 = vmatprep.subr.bf16.mxu0 %v504
  %1743 = vmatpush1.bf16.msra.mxu0 %v503
  %1744 = vmatprep.subr.bf16.mxu0 %v507
  %1745 = vmatpush1.bf16.msra.mxu0 %v506
  %1746 = vmatprep.subr.bf16.mxu0 0
  %1747 = vmatpush1.bf16.msra.mxu0 0
  %1748 = vmatprep.subr.bf16.mxu0 0
  %1749 = vmatpush1.bf16.msra.mxu0 0
  %1750 = vmatprep.subr.bf16.mxu0 0
  %1751 = vmatpush1.bf16.msra.mxu0 0
  %1752 = vmatprep.subr.bf16.mxu0 0
  %1753 = vmatpush1.bf16.msra.mxu0 0
  %1754 = vmatprep.subr.bf16.mxu0 0
  %1755 = vmatpush1.bf16.msra.mxu0 0
  %1756 = vmatprep.subr.bf16.mxu0 0
  %1757 = vmatpush1.bf16.msra.mxu0 0
  %1758 = vmatprep.subr.bf16.mxu0 0
  %1759 = vmatpush1.bf16.msra.mxu0 0
  %1760 = vmatprep.subr.bf16.mxu0 0
  %1761 = vmatpush1.bf16.msra.mxu0 0
  %1762 = vmatprep.subr.bf16.mxu0 0
  %1763 = vmatpush1.bf16.msra.mxu0 0
  %1764 = vmatprep.subr.bf16.mxu0 0
  %1765 = vmatpush1.bf16.msra.mxu0 0
  %1766 = vmatprep.subr.bf16.mxu0 0
  %1767 = vmatpush1.bf16.msra.mxu0 0
  %1768 = vmatprep.subr.bf16.mxu0 0
  %1769 = vmatpush1.bf16.msra.mxu0 0
  %1770 = vmatprep.subr.bf16.mxu0 0
  %1771 = vmatpush1.bf16.msra.mxu0 0
  %1772 = vmatprep.subr.bf16.mxu0 0
  %1773 = vmatpush1.bf16.msra.mxu0 0
  %1774 = vmatprep.mubr.bf16.mxu0 0
  %1775 = vmatmul.mubr.bf16.gmra.mrb[0].mxu0 %v1740
  %v1776 = vpop.f32.mrb[0].mxu0
  %v1777 = vadd.f32 %v326, %v1776
  %v1778 = vpop.f32.mrb[0].mxu0
  %v1779 = vadd.f32 %v330, %v1778
  %v1780 = vpop.f32.mrb[0].mxu0
  %v1781 = vpop.f32.mrb[0].mxu0
  %1782 = vdwg.mxu0
  %1783 = vmatprep.subr.bf16.mxu0 0
  %1784 = vmatpush1.bf16.msra.mxu0 %v505
  %1785 = vmatprep.subr.bf16.mxu0 0
  %1786 = vmatpush1.bf16.msra.mxu0 %v508
  %1787 = vmatprep.subr.bf16.mxu0 0
  %1788 = vmatpush1.bf16.msra.mxu0 0
  %1789 = vmatprep.subr.bf16.mxu0 0
  %1790 = vmatpush1.bf16.msra.mxu0 0
  %1791 = vmatprep.subr.bf16.mxu0 0
  %1792 = vmatpush1.bf16.msra.mxu0 0
  %1793 = vmatprep.subr.bf16.mxu0 0
  %1794 = vmatpush1.bf16.msra.mxu0 0
  %1795 = vmatprep.subr.bf16.mxu0 0
  %1796 = vmatpush1.bf16.msra.mxu0 0
  %1797 = vmatprep.subr.bf16.mxu0 0
  %1798 = vmatpush1.bf16.msra.mxu0 0
  %1799 = vmatprep.subr.bf16.mxu0 0
  %1800 = vmatpush1.bf16.msra.mxu0 0
  %1801 = vmatprep.subr.bf16.mxu0 0
  %1802 = vmatpush1.bf16.msra.mxu0 0
  %1803 = vmatprep.subr.bf16.mxu0 0
  %1804 = vmatpush1.bf16.msra.mxu0 0
  %1805 = vmatprep.subr.bf16.mxu0 0
  %1806 = vmatpush1.bf16.msra.mxu0 0
  %1807 = vmatprep.subr.bf16.mxu0 0
  %1808 = vmatpush1.bf16.msra.mxu0 0
  %1809 = vmatprep.subr.bf16.mxu0 0
  %1810 = vmatpush1.bf16.msra.mxu0 0
  %1811 = vmatprep.subr.bf16.mxu0 0
  %1812 = vmatpush1.bf16.msra.mxu0 0
  %1813 = vmatprep.subr.bf16.mxu0 0
  %1814 = vmatpush1.bf16.msra.mxu0 0
  %1815 = vmatprep.mubr.bf16.mxu0 0
  %1816 = vmatmul.mubr.bf16.gmra.mrb[0].mxu0 %v1740
  %v1817 = vpop.f32.mrb[0].mxu0
  %v1818 = vadd.f32 %v334, %v1817
  %v1819 = vpop.f32.mrb[0].mxu0
  %v1820 = vpop.f32.mrb[0].mxu0
  %v1821 = vpop.f32.mrb[0].mxu0
  %1822 = vdwg.mxu0
  %v1823 = vpack.c.bf16 %v1629, %v1629
  %v1825 = vsel %vm376, %v1823, 0
  %1827 = vmatprep.subr.bf16.mxu0 %v620
  %1828 = vmatpush1.bf16.msra.mxu0 %v619
  %1829 = vmatprep.subr.bf16.mxu0 %v623
  %1830 = vmatpush1.bf16.msra.mxu0 %v622
  %1831 = vmatprep.subr.bf16.mxu0 0
  %1832 = vmatpush1.bf16.msra.mxu0 0
  %1833 = vmatprep.subr.bf16.mxu0 0
  %1834 = vmatpush1.bf16.msra.mxu0 0
  %1835 = vmatprep.subr.bf16.mxu0 0
  %1836 = vmatpush1.bf16.msra.mxu0 0
  %1837 = vmatprep.subr.bf16.mxu0 0
  %1838 = vmatpush1.bf16.msra.mxu0 0
  %1839 = vmatprep.subr.bf16.mxu0 0
  %1840 = vmatpush1.bf16.msra.mxu0 0
  %1841 = vmatprep.subr.bf16.mxu0 0
  %1842 = vmatpush1.bf16.msra.mxu0 0
  %1843 = vmatprep.subr.bf16.mxu0 0
  %1844 = vmatpush1.bf16.msra.mxu0 0
  %1845 = vmatprep.subr.bf16.mxu0 0
  %1846 = vmatpush1.bf16.msra.mxu0 0
  %1847 = vmatprep.subr.bf16.mxu0 0
  %1848 = vmatpush1.bf16.msra.mxu0 0
  %1849 = vmatprep.subr.bf16.mxu0 0
  %1850 = vmatpush1.bf16.msra.mxu0 0
  %1851 = vmatprep.subr.bf16.mxu0 0
  %1852 = vmatpush1.bf16.msra.mxu0 0
  %1853 = vmatprep.subr.bf16.mxu0 0
  %1854 = vmatpush1.bf16.msra.mxu0 0
  %1855 = vmatprep.subr.bf16.mxu0 0
  %1856 = vmatpush1.bf16.msra.mxu0 0
  %1857 = vmatprep.subr.bf16.mxu0 0
  %1858 = vmatpush1.bf16.msra.mxu0 0
  %1859 = vmatprep.mubr.bf16.mxu0 0
  %1860 = vmatmul.mubr.bf16.gmra.mrb[0].mxu0 %v1825
  %v1861 = vpop.f32.mrb[0].mxu0
  %v1862 = vadd.f32 %v309, %v1861
  %v1863 = vpop.f32.mrb[0].mxu0
  %v1864 = vadd.f32 %v313, %v1863
  %v1865 = vpop.f32.mrb[0].mxu0
  %v1866 = vpop.f32.mrb[0].mxu0
  %1867 = vdwg.mxu0
  %1868 = vmatprep.subr.bf16.mxu0 0
  %1869 = vmatpush1.bf16.msra.mxu0 %v621
  %1870 = vmatprep.subr.bf16.mxu0 0
  %1871 = vmatpush1.bf16.msra.mxu0 %v624
  %1872 = vmatprep.subr.bf16.mxu0 0
  %1873 = vmatpush1.bf16.msra.mxu0 0
  %1874 = vmatprep.subr.bf16.mxu0 0
  %1875 = vmatpush1.bf16.msra.mxu0 0
  %1876 = vmatprep.subr.bf16.mxu0 0
  %1877 = vmatpush1.bf16.msra.mxu0 0
  %1878 = vmatprep.subr.bf16.mxu0 0
  %1879 = vmatpush1.bf16.msra.mxu0 0
  %1880 = vmatprep.subr.bf16.mxu0 0
  %1881 = vmatpush1.bf16.msra.mxu0 0
  %1882 = vmatprep.subr.bf16.mxu0 0
  %1883 = vmatpush1.bf16.msra.mxu0 0
  %1884 = vmatprep.subr.bf16.mxu0 0
  %1885 = vmatpush1.bf16.msra.mxu0 0
  %1886 = vmatprep.subr.bf16.mxu0 0
  %1887 = vmatpush1.bf16.msra.mxu0 0
  %1888 = vmatprep.subr.bf16.mxu0 0
  %1889 = vmatpush1.bf16.msra.mxu0 0
  %1890 = vmatprep.subr.bf16.mxu0 0
  %1891 = vmatpush1.bf16.msra.mxu0 0
  %1892 = vmatprep.subr.bf16.mxu0 0
  %1893 = vmatpush1.bf16.msra.mxu0 0
  %1894 = vmatprep.subr.bf16.mxu0 0
  %1895 = vmatpush1.bf16.msra.mxu0 0
  %1896 = vmatprep.subr.bf16.mxu0 0
  %1897 = vmatpush1.bf16.msra.mxu0 0
  %1898 = vmatprep.subr.bf16.mxu0 0
  %1899 = vmatpush1.bf16.msra.mxu0 0
  %1900 = vmatprep.mubr.bf16.mxu0 0
  %1901 = vmatmul.mubr.bf16.gmra.mrb[0].mxu0 %v1825
  %v1902 = vpop.f32.mrb[0].mxu0
  %v1903 = vadd.f32 %v317, %v1902
  %v1904 = vpop.f32.mrb[0].mxu0
  %v1905 = vpop.f32.mrb[0].mxu0
  %v1906 = vpop.f32.mrb[0].mxu0
  %1907 = vdwg.mxu0
  %v1908 = vadd.f32 %v1777, %v1862
  %v1909 = vxor.u32 %v1908, 2147483648
  %v1910 = vmul.f32 %v1909, 1.442695
  %v1911 = vpow.pop %v1910
  %v1912 = vadd.f32 %v1911, 1.0
  %v1913 = vrcp.pop %v1912
  %v1914 = vmul.f32 1.0, %v1913
  %v1915 = vadd.f32 %v1779, %v1864
  %v1916 = vxor.u32 %v1915, 2147483648
  %v1917 = vmul.f32 %v1916, 1.442695
  %v1918 = vpow.pop %v1917
  %v1919 = vadd.f32 %v1918, 1.0
  %v1920 = vrcp.pop %v1919
  %v1921 = vmul.f32 1.0, %v1920
  %v1922 = vmul.f32 %v1914, %v1903
  %v1923 = vadd.f32 %v1818, %v1922
  %v1924 = vtanh.pop %v1923
  %v1925 = vsub.f32 1.0, %v1921
  %v1926 = vmul.f32 %v1925, %v1924
  %v1927 = vmul.f32 %v1921, %v1629
  %v1928 = vadd.f32 %v1926, %v1927
  %s1929 = smul.u32 5, 3
  %s1930 = smul.addr %s1929, 8
  %s1931 = scalar_lea.vmem [#allocation2], %s1930
  %v1932 = vld [vmem:[%s1931] sm:$0xff]
  %v1933 = vld [vmem:[%s1931 + $0x8] sm:$0xff]
  %v1934 = vld [vmem:[%s1931 + $0x10] sm:$0xff]
  %1935 = vmatprep.subr.bf16.mxu0 %v365
  %1936 = vmatpush1.bf16.msra.mxu0 %v364
  %1937 = vmatprep.subr.bf16.mxu0 %v368
  %1938 = vmatpush1.bf16.msra.mxu0 %v367
  %1939 = vmatprep.subr.bf16.mxu0 0
  %1940 = vmatpush1.bf16.msra.mxu0 0
  %1941 = vmatprep.subr.bf16.mxu0 0
  %1942 = vmatpush1.bf16.msra.mxu0 0
  %1943 = vmatprep.subr.bf16.mxu0 0
  %1944 = vmatpush1.bf16.msra.mxu0 0
  %1945 = vmatprep.subr.bf16.mxu0 0
  %1946 = vmatpush1.bf16.msra.mxu0 0
  %1947 = vmatprep.subr.bf16.mxu0 0
  %1948 = vmatpush1.bf16.msra.mxu0 0
  %1949 = vmatprep.subr.bf16.mxu0 0
  %1950 = vmatpush1.bf16.msra.mxu0 0
  %1951 = vmatprep.subr.bf16.mxu0 0
  %1952 = vmatpush1.bf16.msra.mxu0 0
  %1953 = vmatprep.subr.bf16.mxu0 0
  %1954 = vmatpush1.bf16.msra.mxu0 0
  %1955 = vmatprep.subr.bf16.mxu0 0
  %1956 = vmatpush1.bf16.msra.mxu0 0
  %1957 = vmatprep.subr.bf16.mxu0 0
  %1958 = vmatpush1.bf16.msra.mxu0 0
  %1959 = vmatprep.subr.bf16.mxu0 0
  %1960 = vmatpush1.bf16.msra.mxu0 0
  %1961 = vmatprep.subr.bf16.mxu0 0
  %1962 = vmatpush1.bf16.msra.mxu0 0
  %1963 = vmatprep.subr.bf16.mxu0 0
  %1964 = vmatpush1.bf16.msra.mxu0 0
  %1965 = vmatprep.subr.bf16.mxu0 0
  %1966 = vmatpush1.bf16.msra.mxu0 0
  %1967 = vmatprep.mubr.bf16.mxu0 0
  %1968 = vmatmul.mubr.bf16.gmra.mrb[0].mxu0 %v1740
  %v1969 = vpop.f32.mrb[0].mxu0
  %v1970 = vadd.f32 %v292, %v1969
  %v1971 = vpop.f32.mrb[0].mxu0
  %v1972 = vadd.f32 %v296, %v1971
  %v1973 = vpop.f32.mrb[0].mxu0
  %v1974 = vpop.f32.mrb[0].mxu0
  %1975 = vdwg.mxu0
  %1976 = vmatprep.subr.bf16.mxu0 0
  %1977 = vmatpush1.bf16.msra.mxu0 %v366
  %1978 = vmatprep.subr.bf16.mxu0 0
  %1979 = vmatpush1.bf16.msra.mxu0 %v369
  %1980 = vmatprep.subr.bf16.mxu0 0
  %1981 = vmatpush1.bf16.msra.mxu0 0
  %1982 = vmatprep.subr.bf16.mxu0 0
  %1983 = vmatpush1.bf16.msra.mxu0 0
  %1984 = vmatprep.subr.bf16.mxu0 0
  %1985 = vmatpush1.bf16.msra.mxu0 0
  %1986 = vmatprep.subr.bf16.mxu0 0
  %1987 = vmatpush1.bf16.msra.mxu0 0
  %1988 = vmatprep.subr.bf16.mxu0 0
  %1989 = vmatpush1.bf16.msra.mxu0 0
  %1990 = vmatprep.subr.bf16.mxu0 0
  %1991 = vmatpush1.bf16.msra.mxu0 0
  %1992 = vmatprep.subr.bf16.mxu0 0
  %1993 = vmatpush1.bf16.msra.mxu0 0
  %1994 = vmatprep.subr.bf16.mxu0 0
  %1995 = vmatpush1.bf16.msra.mxu0 0
  %1996 = vmatprep.subr.bf16.mxu0 0
  %1997 = vmatpush1.bf16.msra.mxu0 0
  %1998 = vmatprep.subr.bf16.mxu0 0
  %1999 = vmatpush1.bf16.msra.mxu0 0
  %2000 = vmatprep.subr.bf16.mxu0 0
  %2001 = vmatpush1.bf16.msra.mxu0 0
  %2002 = vmatprep.subr.bf16.mxu0 0
  %2003 = vmatpush1.bf16.msra.mxu0 0
  %2004 = vmatprep.subr.bf16.mxu0 0
  %2005 = vmatpush1.bf16.msra.mxu0 0
  %2006 = vmatprep.subr.bf16.mxu0 0
  %2007 = vmatpush1.bf16.msra.mxu0 0
  %2008 = vmatprep.mubr.bf16.mxu0 0
  %2009 = vmatmul.mubr.bf16.gmra.mrb[0].mxu0 %v1740
  %v2010 = vpop.f32.mrb[0].mxu0
  %v2011 = vadd.f32 %v300, %v2010
  %v2012 = vpop.f32.mrb[0].mxu0
  %v2013 = vpop.f32.mrb[0].mxu0
  %v2014 = vpop.f32.mrb[0].mxu0
  %2015 = vdwg.mxu0
  %v2016 = vadd.f32 %v1932, %v1970
  %v2017 = vxor.u32 %v2016, 2147483648
  %v2018 = vmul.f32 %v2017, 1.442695
  %v2019 = vpow.pop %v2018
  %v2020 = vadd.f32 %v2019, 1.0
  %v2021 = vrcp.pop %v2020
  %v2022 = vmul.f32 1.0, %v2021
  %v2023 = vadd.f32 %v1933, %v1972
  %v2024 = vxor.u32 %v2023, 2147483648
  %v2025 = vmul.f32 %v2024, 1.442695
  %v2026 = vpow.pop %v2025
  %v2027 = vadd.f32 %v2026, 1.0
  %v2028 = vrcp.pop %v2027
  %v2029 = vmul.f32 1.0, %v2028
  %v2030 = vmul.f32 %v2022, %v2011
  %v2031 = vadd.f32 %v1934, %v2030
  %v2032 = vtanh.pop %v2031
  %v2033 = vsub.f32 1.0, %v2029
  %v2034 = vmul.f32 %v2033, %v2032
  %v2035 = vmul.f32 %v2029, %v1737
  %v2036 = vadd.f32 %v2034, %v2035
  %v2037 = vpack.c.bf16 %v2036, %v2036
  %v2039 = vsel %vm376, %v2037, 0
  %2041 = vmatprep.subr.bf16.mxu0 %v504
  %2042 = vmatpush1.bf16.msra.mxu0 %v503
  %2043 = vmatprep.subr.bf16.mxu0 %v507
  %2044 = vmatpush1.bf16.msra.mxu0 %v506
  %2045 = vmatprep.subr.bf16.mxu0 0
  %2046 = vmatpush1.bf16.msra.mxu0 0
  %2047 = vmatprep.subr.bf16.mxu0 0
  %2048 = vmatpush1.bf16.msra.mxu0 0
  %2049 = vmatprep.subr.bf16.mxu0 0
  %2050 = vmatpush1.bf16.msra.mxu0 0
  %2051 = vmatprep.subr.bf16.mxu0 0
  %2052 = vmatpush1.bf16.msra.mxu0 0
  %2053 = vmatprep.subr.bf16.mxu0 0
  %2054 = vmatpush1.bf16.msra.mxu0 0
  %2055 = vmatprep.subr.bf16.mxu0 0
  %2056 = vmatpush1.bf16.msra.mxu0 0
  %2057 = vmatprep.subr.bf16.mxu0 0
  %2058 = vmatpush1.bf16.msra.mxu0 0
  %2059 = vmatprep.subr.bf16.mxu0 0
  %2060 = vmatpush1.bf16.msra.mxu0 0
  %2061 = vmatprep.subr.bf16.mxu0 0
  %2062 = vmatpush1.bf16.msra.mxu0 0
  %2063 = vmatprep.subr.bf16.mxu0 0
  %2064 = vmatpush1.bf16.msra.mxu0 0
  %2065 = vmatprep.subr.bf16.mxu0 0
  %2066 = vmatpush1.bf16.msra.mxu0 0
  %2067 = vmatprep.subr.bf16.mxu0 0
  %2068 = vmatpush1.bf16.msra.mxu0 0
  %2069 = vmatprep.subr.bf16.mxu0 0
  %2070 = vmatpush1.bf16.msra.mxu0 0
  %2071 = vmatprep.subr.bf16.mxu0 0
  %2072 = vmatpush1.bf16.msra.mxu0 0
  %2073 = vmatprep.mubr.bf16.mxu0 0
  %2074 = vmatmul.mubr.bf16.gmra.mrb[0].mxu0 %v2039
  %v2075 = vpop.f32.mrb[0].mxu0
  %v2076 = vadd.f32 %v326, %v2075
  %v2077 = vpop.f32.mrb[0].mxu0
  %v2078 = vadd.f32 %v330, %v2077
  %v2079 = vpop.f32.mrb[0].mxu0
  %v2080 = vpop.f32.mrb[0].mxu0
  %2081 = vdwg.mxu0
  %2082 = vmatprep.subr.bf16.mxu0 0
  %2083 = vmatpush1.bf16.msra.mxu0 %v505
  %2084 = vmatprep.subr.bf16.mxu0 0
  %2085 = vmatpush1.bf16.msra.mxu0 %v508
  %2086 = vmatprep.subr.bf16.mxu0 0
  %2087 = vmatpush1.bf16.msra.mxu0 0
  %2088 = vmatprep.subr.bf16.mxu0 0
  %2089 = vmatpush1.bf16.msra.mxu0 0
  %2090 = vmatprep.subr.bf16.mxu0 0
  %2091 = vmatpush1.bf16.msra.mxu0 0
  %2092 = vmatprep.subr.bf16.mxu0 0
  %2093 = vmatpush1.bf16.msra.mxu0 0
  %2094 = vmatprep.subr.bf16.mxu0 0
  %2095 = vmatpush1.bf16.msra.mxu0 0
  %2096 = vmatprep.subr.bf16.mxu0 0
  %2097 = vmatpush1.bf16.msra.mxu0 0
  %2098 = vmatprep.subr.bf16.mxu0 0
  %2099 = vmatpush1.bf16.msra.mxu0 0
  %2100 = vmatprep.subr.bf16.mxu0 0
  %2101 = vmatpush1.bf16.msra.mxu0 0
  %2102 = vmatprep.subr.bf16.mxu0 0
  %2103 = vmatpush1.bf16.msra.mxu0 0
  %2104 = vmatprep.subr.bf16.mxu0 0
  %2105 = vmatpush1.bf16.msra.mxu0 0
  %2106 = vmatprep.subr.bf16.mxu0 0
  %2107 = vmatpush1.bf16.msra.mxu0 0
  %2108 = vmatprep.subr.bf16.mxu0 0
  %2109 = vmatpush1.bf16.msra.mxu0 0
  %2110 = vmatprep.subr.bf16.mxu0 0
  %2111 = vmatpush1.bf16.msra.mxu0 0
  %2112 = vmatprep.subr.bf16.mxu0 0
  %2113 = vmatpush1.bf16.msra.mxu0 0
  %2114 = vmatprep.mubr.bf16.mxu0 0
  %2115 = vmatmul.mubr.bf16.gmra.mrb[0].mxu0 %v2039
  %v2116 = vpop.f32.mrb[0].mxu0
  %v2117 = vadd.f32 %v334, %v2116
  %v2118 = vpop.f32.mrb[0].mxu0
  %v2119 = vpop.f32.mrb[0].mxu0
  %v2120 = vpop.f32.mrb[0].mxu0
  %2121 = vdwg.mxu0
  %v2122 = vpack.c.bf16 %v1928, %v1928
  %v2124 = vsel %vm376, %v2122, 0
  %2126 = vmatprep.subr.bf16.mxu0 %v620
  %2127 = vmatpush1.bf16.msra.mxu0 %v619
  %2128 = vmatprep.subr.bf16.mxu0 %v623
  %2129 = vmatpush1.bf16.msra.mxu0 %v622
  %2130 = vmatprep.subr.bf16.mxu0 0
  %2131 = vmatpush1.bf16.msra.mxu0 0
  %2132 = vmatprep.subr.bf16.mxu0 0
  %2133 = vmatpush1.bf16.msra.mxu0 0
  %2134 = vmatprep.subr.bf16.mxu0 0
  %2135 = vmatpush1.bf16.msra.mxu0 0
  %2136 = vmatprep.subr.bf16.mxu0 0
  %2137 = vmatpush1.bf16.msra.mxu0 0
  %2138 = vmatprep.subr.bf16.mxu0 0
  %2139 = vmatpush1.bf16.msra.mxu0 0
  %2140 = vmatprep.subr.bf16.mxu0 0
  %2141 = vmatpush1.bf16.msra.mxu0 0
  %2142 = vmatprep.subr.bf16.mxu0 0
  %2143 = vmatpush1.bf16.msra.mxu0 0
  %2144 = vmatprep.subr.bf16.mxu0 0
  %2145 = vmatpush1.bf16.msra.mxu0 0
  %2146 = vmatprep.subr.bf16.mxu0 0
  %2147 = vmatpush1.bf16.msra.mxu0 0
  %2148 = vmatprep.subr.bf16.mxu0 0
  %2149 = vmatpush1.bf16.msra.mxu0 0
  %2150 = vmatprep.subr.bf16.mxu0 0
  %2151 = vmatpush1.bf16.msra.mxu0 0
  %2152 = vmatprep.subr.bf16.mxu0 0
  %2153 = vmatpush1.bf16.msra.mxu0 0
  %2154 = vmatprep.subr.bf16.mxu0 0
  %2155 = vmatpush1.bf16.msra.mxu0 0
  %2156 = vmatprep.subr.bf16.mxu0 0
  %2157 = vmatpush1.bf16.msra.mxu0 0
  %2158 = vmatprep.mubr.bf16.mxu0 0
  %2159 = vmatmul.mubr.bf16.gmra.mrb[0].mxu0 %v2124
  %v2160 = vpop.f32.mrb[0].mxu0
  %v2161 = vadd.f32 %v309, %v2160
  %v2162 = vpop.f32.mrb[0].mxu0
  %v2163 = vadd.f32 %v313, %v2162
  %v2164 = vpop.f32.mrb[0].mxu0
  %v2165 = vpop.f32.mrb[0].mxu0
  %2166 = vdwg.mxu0
  %2167 = vmatprep.subr.bf16.mxu0 0
  %2168 = vmatpush1.bf16.msra.mxu0 %v621
  %2169 = vmatprep.subr.bf16.mxu0 0
  %2170 = vmatpush1.bf16.msra.mxu0 %v624
  %2171 = vmatprep.subr.bf16.mxu0 0
  %2172 = vmatpush1.bf16.msra.mxu0 0
  %2173 = vmatprep.subr.bf16.mxu0 0
  %2174 = vmatpush1.bf16.msra.mxu0 0
  %2175 = vmatprep.subr.bf16.mxu0 0
  %2176 = vmatpush1.bf16.msra.mxu0 0
  %2177 = vmatprep.subr.bf16.mxu0 0
  %2178 = vmatpush1.bf16.msra.mxu0 0
  %2179 = vmatprep.subr.bf16.mxu0 0
  %2180 = vmatpush1.bf16.msra.mxu0 0
  %2181 = vmatprep.subr.bf16.mxu0 0
  %2182 = vmatpush1.bf16.msra.mxu0 0
  %2183 = vmatprep.subr.bf16.mxu0 0
  %2184 = vmatpush1.bf16.msra.mxu0 0
  %2185 = vmatprep.subr.bf16.mxu0 0
  %2186 = vmatpush1.bf16.msra.mxu0 0
  %2187 = vmatprep.subr.bf16.mxu0 0
  %2188 = vmatpush1.bf16.msra.mxu0 0
  %2189 = vmatprep.subr.bf16.mxu0 0
  %2190 = vmatpush1.bf16.msra.mxu0 0
  %2191 = vmatprep.subr.bf16.mxu0 0
  %2192 = vmatpush1.bf16.msra.mxu0 0
  %2193 = vmatprep.subr.bf16.mxu0 0
  %2194 = vmatpush1.bf16.msra.mxu0 0
  %2195 = vmatprep.subr.bf16.mxu0 0
  %2196 = vmatpush1.bf16.msra.mxu0 0
  %2197 = vmatprep.subr.bf16.mxu0 0
  %2198 = vmatpush1.bf16.msra.mxu0 0
  %2199 = vmatprep.mubr.bf16.mxu0 0
  %2200 = vmatmul.mubr.bf16.gmra.mrb[0].mxu0 %v2124
  %v2201 = vpop.f32.mrb[0].mxu0
  %v2202 = vadd.f32 %v317, %v2201
  %v2203 = vpop.f32.mrb[0].mxu0
  %v2204 = vpop.f32.mrb[0].mxu0
  %v2205 = vpop.f32.mrb[0].mxu0
  %2206 = vdwg.mxu0
  %v2207 = vadd.f32 %v2076, %v2161
  %v2208 = vxor.u32 %v2207, 2147483648
  %v2209 = vmul.f32 %v2208, 1.442695
  %v2210 = vpow.pop %v2209
  %v2211 = vadd.f32 %v2210, 1.0
  %v2212 = vrcp.pop %v2211
  %v2213 = vmul.f32 1.0, %v2212
  %v2214 = vadd.f32 %v2078, %v2163
  %v2215 = vxor.u32 %v2214, 2147483648
  %v2216 = vmul.f32 %v2215, 1.442695
  %v2217 = vpow.pop %v2216
  %v2218 = vadd.f32 %v2217, 1.0
  %v2219 = vrcp.pop %v2218
  %v2220 = vmul.f32 1.0, %v2219
  %v2221 = vmul.f32 %v2213, %v2202
  %v2222 = vadd.f32 %v2117, %v2221
  %v2223 = vtanh.pop %v2222
  %v2224 = vsub.f32 1.0, %v2220
  %v2225 = vmul.f32 %v2224, %v2223
  %v2226 = vmul.f32 %v2220, %v1928
  %v2227 = vadd.f32 %v2225, %v2226
  %s2228 = smul.u32 6, 3
  %s2229 = smul.addr %s2228, 8
  %s2230 = scalar_lea.vmem [#allocation2], %s2229
  %v2231 = vld [vmem:[%s2230] sm:$0xff]
  %v2232 = vld [vmem:[%s2230 + $0x8] sm:$0xff]
  %v2233 = vld [vmem:[%s2230 + $0x10] sm:$0xff]
  %2234 = vmatprep.subr.bf16.mxu0 %v365
  %2235 = vmatpush1.bf16.msra.mxu0 %v364
  %2236 = vmatprep.subr.bf16.mxu0 %v368
  %2237 = vmatpush1.bf16.msra.mxu0 %v367
  %2238 = vmatprep.subr.bf16.mxu0 0
  %2239 = vmatpush1.bf16.msra.mxu0 0
  %2240 = vmatprep.subr.bf16.mxu0 0
  %2241 = vmatpush1.bf16.msra.mxu0 0
  %2242 = vmatprep.subr.bf16.mxu0 0
  %2243 = vmatpush1.bf16.msra.mxu0 0
  %2244 = vmatprep.subr.bf16.mxu0 0
  %2245 = vmatpush1.bf16.msra.mxu0 0
  %2246 = vmatprep.subr.bf16.mxu0 0
  %2247 = vmatpush1.bf16.msra.mxu0 0
  %2248 = vmatprep.subr.bf16.mxu0 0
  %2249 = vmatpush1.bf16.msra.mxu0 0
  %2250 = vmatprep.subr.bf16.mxu0 0
  %2251 = vmatpush1.bf16.msra.mxu0 0
  %2252 = vmatprep.subr.bf16.mxu0 0
  %2253 = vmatpush1.bf16.msra.mxu0 0
  %2254 = vmatprep.subr.bf16.mxu0 0
  %2255 = vmatpush1.bf16.msra.mxu0 0
  %2256 = vmatprep.subr.bf16.mxu0 0
  %2257 = vmatpush1.bf16.msra.mxu0 0
  %2258 = vmatprep.subr.bf16.mxu0 0
  %2259 = vmatpush1.bf16.msra.mxu0 0
  %2260 = vmatprep.subr.bf16.mxu0 0
  %2261 = vmatpush1.bf16.msra.mxu0 0
  %2262 = vmatprep.subr.bf16.mxu0 0
  %2263 = vmatpush1.bf16.msra.mxu0 0
  %2264 = vmatprep.subr.bf16.mxu0 0
  %2265 = vmatpush1.bf16.msra.mxu0 0
  %2266 = vmatprep.mubr.bf16.mxu0 0
  %2267 = vmatmul.mubr.bf16.gmra.mrb[0].mxu0 %v2039
  %v2268 = vpop.f32.mrb[0].mxu0
  %v2269 = vadd.f32 %v292, %v2268
  %v2270 = vpop.f32.mrb[0].mxu0
  %v2271 = vadd.f32 %v296, %v2270
  %v2272 = vpop.f32.mrb[0].mxu0
  %v2273 = vpop.f32.mrb[0].mxu0
  %2274 = vdwg.mxu0
  %2275 = vmatprep.subr.bf16.mxu0 0
  %2276 = vmatpush1.bf16.msra.mxu0 %v366
  %2277 = vmatprep.subr.bf16.mxu0 0
  %2278 = vmatpush1.bf16.msra.mxu0 %v369
  %2279 = vmatprep.subr.bf16.mxu0 0
  %2280 = vmatpush1.bf16.msra.mxu0 0
  %2281 = vmatprep.subr.bf16.mxu0 0
  %2282 = vmatpush1.bf16.msra.mxu0 0
  %2283 = vmatprep.subr.bf16.mxu0 0
  %2284 = vmatpush1.bf16.msra.mxu0 0
  %2285 = vmatprep.subr.bf16.mxu0 0
  %2286 = vmatpush1.bf16.msra.mxu0 0
  %2287 = vmatprep.subr.bf16.mxu0 0
  %2288 = vmatpush1.bf16.msra.mxu0 0
  %2289 = vmatprep.subr.bf16.mxu0 0
  %2290 = vmatpush1.bf16.msra.mxu0 0
  %2291 = vmatprep.subr.bf16.mxu0 0
  %2292 = vmatpush1.bf16.msra.mxu0 0
  %2293 = vmatprep.subr.bf16.mxu0 0
  %2294 = vmatpush1.bf16.msra.mxu0 0
  %2295 = vmatprep.subr.bf16.mxu0 0
  %2296 = vmatpush1.bf16.msra.mxu0 0
  %2297 = vmatprep.subr.bf16.mxu0 0
  %2298 = vmatpush1.bf16.msra.mxu0 0
  %2299 = vmatprep.subr.bf16.mxu0 0
  %2300 = vmatpush1.bf16.msra.mxu0 0
  %2301 = vmatprep.subr.bf16.mxu0 0
  %2302 = vmatpush1.bf16.msra.mxu0 0
  %2303 = vmatprep.subr.bf16.mxu0 0
  %2304 = vmatpush1.bf16.msra.mxu0 0
  %2305 = vmatprep.subr.bf16.mxu0 0
  %2306 = vmatpush1.bf16.msra.mxu0 0
  %2307 = vmatprep.mubr.bf16.mxu0 0
  %2308 = vmatmul.mubr.bf16.gmra.mrb[0].mxu0 %v2039
  %v2309 = vpop.f32.mrb[0].mxu0
  %v2310 = vadd.f32 %v300, %v2309
  %v2311 = vpop.f32.mrb[0].mxu0
  %v2312 = vpop.f32.mrb[0].mxu0
  %v2313 = vpop.f32.mrb[0].mxu0
  %2314 = vdwg.mxu0
  %v2315 = vadd.f32 %v2231, %v2269
  %v2316 = vxor.u32 %v2315, 2147483648
  %v2317 = vmul.f32 %v2316, 1.442695
  %v2318 = vpow.pop %v2317
  %v2319 = vadd.f32 %v2318, 1.0
  %v2320 = vrcp.pop %v2319
  %v2321 = vmul.f32 1.0, %v2320
  %v2322 = vadd.f32 %v2232, %v2271
  %v2323 = vxor.u32 %v2322, 2147483648
  %v2324 = vmul.f32 %v2323, 1.442695
  %v2325 = vpow.pop %v2324
  %v2326 = vadd.f32 %v2325, 1.0
  %v2327 = vrcp.pop %v2326
  %v2328 = vmul.f32 1.0, %v2327
  %v2329 = vmul.f32 %v2321, %v2310
  %v2330 = vadd.f32 %v2233, %v2329
  %v2331 = vtanh.pop %v2330
  %v2332 = vsub.f32 1.0, %v2328
  %v2333 = vmul.f32 %v2332, %v2331
  %v2334 = vmul.f32 %v2328, %v2036
  %v2335 = vadd.f32 %v2333, %v2334
  %v2336 = vpack.c.bf16 %v2335, %v2335
  %v2338 = vsel %vm376, %v2336, 0
  %2340 = vmatprep.subr.bf16.mxu0 %v504
  %2341 = vmatpush1.bf16.msra.mxu0 %v503
  %2342 = vmatprep.subr.bf16.mxu0 %v507
  %2343 = vmatpush1.bf16.msra.mxu0 %v506
  %2344 = vmatprep.subr.bf16.mxu0 0
  %2345 = vmatpush1.bf16.msra.mxu0 0
  %2346 = vmatprep.subr.bf16.mxu0 0
  %2347 = vmatpush1.bf16.msra.mxu0 0
  %2348 = vmatprep.subr.bf16.mxu0 0
  %2349 = vmatpush1.bf16.msra.mxu0 0
  %2350 = vmatprep.subr.bf16.mxu0 0
  %2351 = vmatpush1.bf16.msra.mxu0 0
  %2352 = vmatprep.subr.bf16.mxu0 0
  %2353 = vmatpush1.bf16.msra.mxu0 0
  %2354 = vmatprep.subr.bf16.mxu0 0
  %2355 = vmatpush1.bf16.msra.mxu0 0
  %2356 = vmatprep.subr.bf16.mxu0 0
  %2357 = vmatpush1.bf16.msra.mxu0 0
  %2358 = vmatprep.subr.bf16.mxu0 0
  %2359 = vmatpush1.bf16.msra.mxu0 0
  %2360 = vmatprep.subr.bf16.mxu0 0
  %2361 = vmatpush1.bf16.msra.mxu0 0
  %2362 = vmatprep.subr.bf16.mxu0 0
  %2363 = vmatpush1.bf16.msra.mxu0 0
  %2364 = vmatprep.subr.bf16.mxu0 0
  %2365 = vmatpush1.bf16.msra.mxu0 0
  %2366 = vmatprep.subr.bf16.mxu0 0
  %2367 = vmatpush1.bf16.msra.mxu0 0
  %2368 = vmatprep.subr.bf16.mxu0 0
  %2369 = vmatpush1.bf16.msra.mxu0 0
  %2370 = vmatprep.subr.bf16.mxu0 0
  %2371 = vmatpush1.bf16.msra.mxu0 0
  %2372 = vmatprep.mubr.bf16.mxu0 0
  %2373 = vmatmul.mubr.bf16.gmra.mrb[0].mxu0 %v2338
  %v2374 = vpop.f32.mrb[0].mxu0
  %v2375 = vadd.f32 %v326, %v2374
  %v2376 = vpop.f32.mrb[0].mxu0
  %v2377 = vadd.f32 %v330, %v2376
  %v2378 = vpop.f32.mrb[0].mxu0
  %v2379 = vpop.f32.mrb[0].mxu0
  %2380 = vdwg.mxu0
  %2381 = vmatprep.subr.bf16.mxu0 0
  %2382 = vmatpush1.bf16.msra.mxu0 %v505
  %2383 = vmatprep.subr.bf16.mxu0 0
  %2384 = vmatpush1.bf16.msra.mxu0 %v508
  %2385 = vmatprep.subr.bf16.mxu0 0
  %2386 = vmatpush1.bf16.msra.mxu0 0
  %2387 = vmatprep.subr.bf16.mxu0 0
  %2388 = vmatpush1.bf16.msra.mxu0 0
  %2389 = vmatprep.subr.bf16.mxu0 0
  %2390 = vmatpush1.bf16.msra.mxu0 0
  %2391 = vmatprep.subr.bf16.mxu0 0
  %2392 = vmatpush1.bf16.msra.mxu0 0
  %2393 = vmatprep.subr.bf16.mxu0 0
  %2394 = vmatpush1.bf16.msra.mxu0 0
  %2395 = vmatprep.subr.bf16.mxu0 0
  %2396 = vmatpush1.bf16.msra.mxu0 0
  %2397 = vmatprep.subr.bf16.mxu0 0
  %2398 = vmatpush1.bf16.msra.mxu0 0
  %2399 = vmatprep.subr.bf16.mxu0 0
  %2400 = vmatpush1.bf16.msra.mxu0 0
  %2401 = vmatprep.subr.bf16.mxu0 0
  %2402 = vmatpush1.bf16.msra.mxu0 0
  %2403 = vmatprep.subr.bf16.mxu0 0
  %2404 = vmatpush1.bf16.msra.mxu0 0
  %2405 = vmatprep.subr.bf16.mxu0 0
  %2406 = vmatpush1.bf16.msra.mxu0 0
  %2407 = vmatprep.subr.bf16.mxu0 0
  %2408 = vmatpush1.bf16.msra.mxu0 0
  %2409 = vmatprep.subr.bf16.mxu0 0
  %2410 = vmatpush1.bf16.msra.mxu0 0
  %2411 = vmatprep.subr.bf16.mxu0 0
  %2412 = vmatpush1.bf16.msra.mxu0 0
  %2413 = vmatprep.mubr.bf16.mxu0 0
  %2414 = vmatmul.mubr.bf16.gmra.mrb[0].mxu0 %v2338
  %v2415 = vpop.f32.mrb[0].mxu0
  %v2416 = vadd.f32 %v334, %v2415
  %v2417 = vpop.f32.mrb[0].mxu0
  %v2418 = vpop.f32.mrb[0].mxu0
  %v2419 = vpop.f32.mrb[0].mxu0
  %2420 = vdwg.mxu0
  %v2421 = vpack.c.bf16 %v2227, %v2227
  %v2423 = vsel %vm376, %v2421, 0
  %2425 = vmatprep.subr.bf16.mxu0 %v620
  %2426 = vmatpush1.bf16.msra.mxu0 %v619
  %2427 = vmatprep.subr.bf16.mxu0 %v623
  %2428 = vmatpush1.bf16.msra.mxu0 %v622
  %2429 = vmatprep.subr.bf16.mxu0 0
  %2430 = vmatpush1.bf16.msra.mxu0 0
  %2431 = vmatprep.subr.bf16.mxu0 0
  %2432 = vmatpush1.bf16.msra.mxu0 0
  %2433 = vmatprep.subr.bf16.mxu0 0
  %2434 = vmatpush1.bf16.msra.mxu0 0
  %2435 = vmatprep.subr.bf16.mxu0 0
  %2436 = vmatpush1.bf16.msra.mxu0 0
  %2437 = vmatprep.subr.bf16.mxu0 0
  %2438 = vmatpush1.bf16.msra.mxu0 0
  %2439 = vmatprep.subr.bf16.mxu0 0
  %2440 = vmatpush1.bf16.msra.mxu0 0
  %2441 = vmatprep.subr.bf16.mxu0 0
  %2442 = vmatpush1.bf16.msra.mxu0 0
  %2443 = vmatprep.subr.bf16.mxu0 0
  %2444 = vmatpush1.bf16.msra.mxu0 0
  %2445 = vmatprep.subr.bf16.mxu0 0
  %2446 = vmatpush1.bf16.msra.mxu0 0
  %2447 = vmatprep.subr.bf16.mxu0 0
  %2448 = vmatpush1.bf16.msra.mxu0 0
  %2449 = vmatprep.subr.bf16.mxu0 0
  %2450 = vmatpush1.bf16.msra.mxu0 0
  %2451 = vmatprep.subr.bf16.mxu0 0
  %2452 = vmatpush1.bf16.msra.mxu0 0
  %2453 = vmatprep.subr.bf16.mxu0 0
  %2454 = vmatpush1.bf16.msra.mxu0 0
  %2455 = vmatprep.subr.bf16.mxu0 0
  %2456 = vmatpush1.bf16.msra.mxu0 0
  %2457 = vmatprep.mubr.bf16.mxu0 0
  %2458 = vmatmul.mubr.bf16.gmra.mrb[0].mxu0 %v2423
  %v2459 = vpop.f32.mrb[0].mxu0
  %v2460 = vadd.f32 %v309, %v2459
  %v2461 = vpop.f32.mrb[0].mxu0
  %v2462 = vadd.f32 %v313, %v2461
  %v2463 = vpop.f32.mrb[0].mxu0
  %v2464 = vpop.f32.mrb[0].mxu0
  %2465 = vdwg.mxu0
  %2466 = vmatprep.subr.bf16.mxu0 0
  %2467 = vmatpush1.bf16.msra.mxu0 %v621
  %2468 = vmatprep.subr.bf16.mxu0 0
  %2469 = vmatpush1.bf16.msra.mxu0 %v624
  %2470 = vmatprep.subr.bf16.mxu0 0
  %2471 = vmatpush1.bf16.msra.mxu0 0
  %2472 = vmatprep.subr.bf16.mxu0 0
  %2473 = vmatpush1.bf16.msra.mxu0 0
  %2474 = vmatprep.subr.bf16.mxu0 0
  %2475 = vmatpush1.bf16.msra.mxu0 0
  %2476 = vmatprep.subr.bf16.mxu0 0
  %2477 = vmatpush1.bf16.msra.mxu0 0
  %2478 = vmatprep.subr.bf16.mxu0 0
  %2479 = vmatpush1.bf16.msra.mxu0 0
  %2480 = vmatprep.subr.bf16.mxu0 0
  %2481 = vmatpush1.bf16.msra.mxu0 0
  %2482 = vmatprep.subr.bf16.mxu0 0
  %2483 = vmatpush1.bf16.msra.mxu0 0
  %2484 = vmatprep.subr.bf16.mxu0 0
  %2485 = vmatpush1.bf16.msra.mxu0 0
  %2486 = vmatprep.subr.bf16.mxu0 0
  %2487 = vmatpush1.bf16.msra.mxu0 0
  %2488 = vmatprep.subr.bf16.mxu0 0
  %2489 = vmatpush1.bf16.msra.mxu0 0
  %2490 = vmatprep.subr.bf16.mxu0 0
  %2491 = vmatpush1.bf16.msra.mxu0 0
  %2492 = vmatprep.subr.bf16.mxu0 0
  %2493 = vmatpush1.bf16.msra.mxu0 0
  %2494 = vmatprep.subr.bf16.mxu0 0
  %2495 = vmatpush1.bf16.msra.mxu0 0
  %2496 = vmatprep.subr.bf16.mxu0 0
  %2497 = vmatpush1.bf16.msra.mxu0 0
  %2498 = vmatprep.mubr.bf16.mxu0 0
  %2499 = vmatmul.mubr.bf16.gmra.mrb[0].mxu0 %v2423
  %v2500 = vpop.f32.mrb[0].mxu0
  %v2501 = vadd.f32 %v317, %v2500
  %v2502 = vpop.f32.mrb[0].mxu0
  %v2503 = vpop.f32.mrb[0].mxu0
  %v2504 = vpop.f32.mrb[0].mxu0
  %2505 = vdwg.mxu0
  %v2506 = vadd.f32 %v2375, %v2460
  %v2507 = vxor.u32 %v2506, 2147483648
  %v2508 = vmul.f32 %v2507, 1.442695
  %v2509 = vpow.pop %v2508
  %v2510 = vadd.f32 %v2509, 1.0
  %v2511 = vrcp.pop %v2510
  %v2512 = vmul.f32 1.0, %v2511
  %v2513 = vadd.f32 %v2377, %v2462
  %v2514 = vxor.u32 %v2513, 2147483648
  %v2515 = vmul.f32 %v2514, 1.442695
  %v2516 = vpow.pop %v2515
  %v2517 = vadd.f32 %v2516, 1.0
  %v2518 = vrcp.pop %v2517
  %v2519 = vmul.f32 1.0, %v2518
  %v2520 = vmul.f32 %v2512, %v2501
  %v2521 = vadd.f32 %v2416, %v2520
  %v2522 = vtanh.pop %v2521
  %v2523 = vsub.f32 1.0, %v2519
  %v2524 = vmul.f32 %v2523, %v2522
  %v2525 = vmul.f32 %v2519, %v2227
  %v2526 = vadd.f32 %v2524, %v2525
  %s2527 = smul.u32 7, 3
  %s2528 = smul.addr %s2527, 8
  %s2529 = scalar_lea.vmem [#allocation2], %s2528
  %v2530 = vld [vmem:[%s2529] sm:$0xff]
  %v2531 = vld [vmem:[%s2529 + $0x8] sm:$0xff]
  %v2532 = vld [vmem:[%s2529 + $0x10] sm:$0xff]
  %2533 = vmatprep.subr.bf16.mxu0 %v365
  %2534 = vmatpush1.bf16.msra.mxu0 %v364
  %2535 = vmatprep.subr.bf16.mxu0 %v368
  %2536 = vmatpush1.bf16.msra.mxu0 %v367
  %2537 = vmatprep.subr.bf16.mxu0 0
  %2538 = vmatpush1.bf16.msra.mxu0 0
  %2539 = vmatprep.subr.bf16.mxu0 0
  %2540 = vmatpush1.bf16.msra.mxu0 0
  %2541 = vmatprep.subr.bf16.mxu0 0
  %2542 = vmatpush1.bf16.msra.mxu0 0
  %2543 = vmatprep.subr.bf16.mxu0 0
  %2544 = vmatpush1.bf16.msra.mxu0 0
  %2545 = vmatprep.subr.bf16.mxu0 0
  %2546 = vmatpush1.bf16.msra.mxu0 0
  %2547 = vmatprep.subr.bf16.mxu0 0
  %2548 = vmatpush1.bf16.msra.mxu0 0
  %2549 = vmatprep.subr.bf16.mxu0 0
  %2550 = vmatpush1.bf16.msra.mxu0 0
  %2551 = vmatprep.subr.bf16.mxu0 0
  %2552 = vmatpush1.bf16.msra.mxu0 0
  %2553 = vmatprep.subr.bf16.mxu0 0
  %2554 = vmatpush1.bf16.msra.mxu0 0
  %2555 = vmatprep.subr.bf16.mxu0 0
  %2556 = vmatpush1.bf16.msra.mxu0 0
  %2557 = vmatprep.subr.bf16.mxu0 0
  %2558 = vmatpush1.bf16.msra.mxu0 0
  %2559 = vmatprep.subr.bf16.mxu0 0
  %2560 = vmatpush1.bf16.msra.mxu0 0
  %2561 = vmatprep.subr.bf16.mxu0 0
  %2562 = vmatpush1.bf16.msra.mxu0 0
  %2563 = vmatprep.subr.bf16.mxu0 0
  %2564 = vmatpush1.bf16.msra.mxu0 0
  %2565 = vmatprep.mubr.bf16.mxu0 0
  %2566 = vmatmul.mubr.bf16.gmra.mrb[0].mxu0 %v2338
  %v2567 = vpop.f32.mrb[0].mxu0
  %v2568 = vadd.f32 %v292, %v2567
  %v2569 = vpop.f32.mrb[0].mxu0
  %v2570 = vadd.f32 %v296, %v2569
  %v2571 = vpop.f32.mrb[0].mxu0
  %v2572 = vpop.f32.mrb[0].mxu0
  %2573 = vdwg.mxu0
  %2574 = vmatprep.subr.bf16.mxu0 0
  %2575 = vmatpush1.bf16.msra.mxu0 %v366
  %2576 = vmatprep.subr.bf16.mxu0 0
  %2577 = vmatpush1.bf16.msra.mxu0 %v369
  %2578 = vmatprep.subr.bf16.mxu0 0
  %2579 = vmatpush1.bf16.msra.mxu0 0
  %2580 = vmatprep.subr.bf16.mxu0 0
  %2581 = vmatpush1.bf16.msra.mxu0 0
  %2582 = vmatprep.subr.bf16.mxu0 0
  %2583 = vmatpush1.bf16.msra.mxu0 0
  %2584 = vmatprep.subr.bf16.mxu0 0
  %2585 = vmatpush1.bf16.msra.mxu0 0
  %2586 = vmatprep.subr.bf16.mxu0 0
  %2587 = vmatpush1.bf16.msra.mxu0 0
  %2588 = vmatprep.subr.bf16.mxu0 0
  %2589 = vmatpush1.bf16.msra.mxu0 0
  %2590 = vmatprep.subr.bf16.mxu0 0
  %2591 = vmatpush1.bf16.msra.mxu0 0
  %2592 = vmatprep.subr.bf16.mxu0 0
  %2593 = vmatpush1.bf16.msra.mxu0 0
  %2594 = vmatprep.subr.bf16.mxu0 0
  %2595 = vmatpush1.bf16.msra.mxu0 0
  %2596 = vmatprep.subr.bf16.mxu0 0
  %2597 = vmatpush1.bf16.msra.mxu0 0
  %2598 = vmatprep.subr.bf16.mxu0 0
  %2599 = vmatpush1.bf16.msra.mxu0 0
  %2600 = vmatprep.subr.bf16.mxu0 0
  %2601 = vmatpush1.bf16.msra.mxu0 0
  %2602 = vmatprep.subr.bf16.mxu0 0
  %2603 = vmatpush1.bf16.msra.mxu0 0
  %2604 = vmatprep.subr.bf16.mxu0 0
  %2605 = vmatpush1.bf16.msra.mxu0 0
  %2606 = vmatprep.mubr.bf16.mxu0 0
  %2607 = vmatmul.mubr.bf16.gmra.mrb[0].mxu0 %v2338
  %v2608 = vpop.f32.mrb[0].mxu0
  %v2609 = vadd.f32 %v300, %v2608
  %v2610 = vpop.f32.mrb[0].mxu0
  %v2611 = vpop.f32.mrb[0].mxu0
  %v2612 = vpop.f32.mrb[0].mxu0
  %2613 = vdwg.mxu0
  %v2614 = vadd.f32 %v2530, %v2568
  %v2615 = vxor.u32 %v2614, 2147483648
  %v2616 = vmul.f32 %v2615, 1.442695
  %v2617 = vpow.pop %v2616
  %v2618 = vadd.f32 %v2617, 1.0
  %v2619 = vrcp.pop %v2618
  %v2620 = vmul.f32 1.0, %v2619
  %v2621 = vadd.f32 %v2531, %v2570
  %v2622 = vxor.u32 %v2621, 2147483648
  %v2623 = vmul.f32 %v2622, 1.442695
  %v2624 = vpow.pop %v2623
  %v2625 = vadd.f32 %v2624, 1.0
  %v2626 = vrcp.pop %v2625
  %v2627 = vmul.f32 1.0, %v2626
  %v2628 = vmul.f32 %v2620, %v2609
  %v2629 = vadd.f32 %v2532, %v2628
  %v2630 = vtanh.pop %v2629
  %v2631 = vsub.f32 1.0, %v2627
  %v2632 = vmul.f32 %v2631, %v2630
  %v2633 = vmul.f32 %v2627, %v2335
  %v2634 = vadd.f32 %v2632, %v2633
  %v2635 = vpack.c.bf16 %v2634, %v2634
  %v2637 = vsel %vm376, %v2635, 0
  %2639 = vmatprep.subr.bf16.mxu0 %v504
  %2640 = vmatpush1.bf16.msra.mxu0 %v503
  %2641 = vmatprep.subr.bf16.mxu0 %v507
  %2642 = vmatpush1.bf16.msra.mxu0 %v506
  %2643 = vmatprep.subr.bf16.mxu0 0
  %2644 = vmatpush1.bf16.msra.mxu0 0
  %2645 = vmatprep.subr.bf16.mxu0 0
  %2646 = vmatpush1.bf16.msra.mxu0 0
  %2647 = vmatprep.subr.bf16.mxu0 0
  %2648 = vmatpush1.bf16.msra.mxu0 0
  %2649 = vmatprep.subr.bf16.mxu0 0
  %2650 = vmatpush1.bf16.msra.mxu0 0
  %2651 = vmatprep.subr.bf16.mxu0 0
  %2652 = vmatpush1.bf16.msra.mxu0 0
  %2653 = vmatprep.subr.bf16.mxu0 0
  %2654 = vmatpush1.bf16.msra.mxu0 0
  %2655 = vmatprep.subr.bf16.mxu0 0
  %2656 = vmatpush1.bf16.msra.mxu0 0
  %2657 = vmatprep.subr.bf16.mxu0 0
  %2658 = vmatpush1.bf16.msra.mxu0 0
  %2659 = vmatprep.subr.bf16.mxu0 0
  %2660 = vmatpush1.bf16.msra.mxu0 0
  %2661 = vmatprep.subr.bf16.mxu0 0
  %2662 = vmatpush1.bf16.msra.mxu0 0
  %2663 = vmatprep.subr.bf16.mxu0 0
  %2664 = vmatpush1.bf16.msra.mxu0 0
  %2665 = vmatprep.subr.bf16.mxu0 0
  %2666 = vmatpush1.bf16.msra.mxu0 0
  %2667 = vmatprep.subr.bf16.mxu0 0
  %2668 = vmatpush1.bf16.msra.mxu0 0
  %2669 = vmatprep.subr.bf16.mxu0 0
  %2670 = vmatpush1.bf16.msra.mxu0 0
  %2671 = vmatprep.mubr.bf16.mxu0 0
  %2672 = vmatmul.mubr.bf16.gmra.mrb[0].mxu0 %v2637
  %v2673 = vpop.f32.mrb[0].mxu0
  %v2674 = vadd.f32 %v326, %v2673
  %v2675 = vpop.f32.mrb[0].mxu0
  %v2676 = vadd.f32 %v330, %v2675
  %v2677 = vpop.f32.mrb[0].mxu0
  %v2678 = vpop.f32.mrb[0].mxu0
  %2679 = vdwg.mxu0
  %2680 = vmatprep.subr.bf16.mxu0 0
  %2681 = vmatpush1.bf16.msra.mxu0 %v505
  %2682 = vmatprep.subr.bf16.mxu0 0
  %2683 = vmatpush1.bf16.msra.mxu0 %v508
  %2684 = vmatprep.subr.bf16.mxu0 0
  %2685 = vmatpush1.bf16.msra.mxu0 0
  %2686 = vmatprep.subr.bf16.mxu0 0
  %2687 = vmatpush1.bf16.msra.mxu0 0
  %2688 = vmatprep.subr.bf16.mxu0 0
  %2689 = vmatpush1.bf16.msra.mxu0 0
  %2690 = vmatprep.subr.bf16.mxu0 0
  %2691 = vmatpush1.bf16.msra.mxu0 0
  %2692 = vmatprep.subr.bf16.mxu0 0
  %2693 = vmatpush1.bf16.msra.mxu0 0
  %2694 = vmatprep.subr.bf16.mxu0 0
  %2695 = vmatpush1.bf16.msra.mxu0 0
  %2696 = vmatprep.subr.bf16.mxu0 0
  %2697 = vmatpush1.bf16.msra.mxu0 0
  %2698 = vmatprep.subr.bf16.mxu0 0
  %2699 = vmatpush1.bf16.msra.mxu0 0
  %2700 = vmatprep.subr.bf16.mxu0 0
  %2701 = vmatpush1.bf16.msra.mxu0 0
  %2702 = vmatprep.subr.bf16.mxu0 0
  %2703 = vmatpush1.bf16.msra.mxu0 0
  %2704 = vmatprep.subr.bf16.mxu0 0
  %2705 = vmatpush1.bf16.msra.mxu0 0
  %2706 = vmatprep.subr.bf16.mxu0 0
  %2707 = vmatpush1.bf16.msra.mxu0 0
  %2708 = vmatprep.subr.bf16.mxu0 0
  %2709 = vmatpush1.bf16.msra.mxu0 0
  %2710 = vmatprep.subr.bf16.mxu0 0
  %2711 = vmatpush1.bf16.msra.mxu0 0
  %2712 = vmatprep.mubr.bf16.mxu0 0
  %2713 = vmatmul.mubr.bf16.gmra.mrb[0].mxu0 %v2637
  %v2714 = vpop.f32.mrb[0].mxu0
  %v2715 = vadd.f32 %v334, %v2714
  %v2716 = vpop.f32.mrb[0].mxu0
  %v2717 = vpop.f32.mrb[0].mxu0
  %v2718 = vpop.f32.mrb[0].mxu0
  %2719 = vdwg.mxu0
  %v2720 = vpack.c.bf16 %v2526, %v2526
  %v2722 = vsel %vm376, %v2720, 0
  %2724 = vmatprep.subr.bf16.mxu0 %v620
  %2725 = vmatpush1.bf16.msra.mxu0 %v619
  %2726 = vmatprep.subr.bf16.mxu0 %v623
  %2727 = vmatpush1.bf16.msra.mxu0 %v622
  %2728 = vmatprep.subr.bf16.mxu0 0
  %2729 = vmatpush1.bf16.msra.mxu0 0
  %2730 = vmatprep.subr.bf16.mxu0 0
  %2731 = vmatpush1.bf16.msra.mxu0 0
  %2732 = vmatprep.subr.bf16.mxu0 0
  %2733 = vmatpush1.bf16.msra.mxu0 0
  %2734 = vmatprep.subr.bf16.mxu0 0
  %2735 = vmatpush1.bf16.msra.mxu0 0
  %2736 = vmatprep.subr.bf16.mxu0 0
  %2737 = vmatpush1.bf16.msra.mxu0 0
  %2738 = vmatprep.subr.bf16.mxu0 0
  %2739 = vmatpush1.bf16.msra.mxu0 0
  %2740 = vmatprep.subr.bf16.mxu0 0
  %2741 = vmatpush1.bf16.msra.mxu0 0
  %2742 = vmatprep.subr.bf16.mxu0 0
  %2743 = vmatpush1.bf16.msra.mxu0 0
  %2744 = vmatprep.subr.bf16.mxu0 0
  %2745 = vmatpush1.bf16.msra.mxu0 0
  %2746 = vmatprep.subr.bf16.mxu0 0
  %2747 = vmatpush1.bf16.msra.mxu0 0
  %2748 = vmatprep.subr.bf16.mxu0 0
  %2749 = vmatpush1.bf16.msra.mxu0 0
  %2750 = vmatprep.subr.bf16.mxu0 0
  %2751 = vmatpush1.bf16.msra.mxu0 0
  %2752 = vmatprep.subr.bf16.mxu0 0
  %2753 = vmatpush1.bf16.msra.mxu0 0
  %2754 = vmatprep.subr.bf16.mxu0 0
  %2755 = vmatpush1.bf16.msra.mxu0 0
  %2756 = vmatprep.mubr.bf16.mxu0 0
  %2757 = vmatmul.mubr.bf16.gmra.mrb[0].mxu0 %v2722
  %v2758 = vpop.f32.mrb[0].mxu0
  %v2759 = vadd.f32 %v309, %v2758
  %v2760 = vpop.f32.mrb[0].mxu0
  %v2761 = vadd.f32 %v313, %v2760
  %v2762 = vpop.f32.mrb[0].mxu0
  %v2763 = vpop.f32.mrb[0].mxu0
  %2764 = vdwg.mxu0
  %2765 = vmatprep.subr.bf16.mxu0 0
  %2766 = vmatpush1.bf16.msra.mxu0 %v621
  %2767 = vmatprep.subr.bf16.mxu0 0
  %2768 = vmatpush1.bf16.msra.mxu0 %v624
  %2769 = vmatprep.subr.bf16.mxu0 0
  %2770 = vmatpush1.bf16.msra.mxu0 0
  %2771 = vmatprep.subr.bf16.mxu0 0
  %2772 = vmatpush1.bf16.msra.mxu0 0
  %2773 = vmatprep.subr.bf16.mxu0 0
  %2774 = vmatpush1.bf16.msra.mxu0 0
  %2775 = vmatprep.subr.bf16.mxu0 0
  %2776 = vmatpush1.bf16.msra.mxu0 0
  %2777 = vmatprep.subr.bf16.mxu0 0
  %2778 = vmatpush1.bf16.msra.mxu0 0
  %2779 = vmatprep.subr.bf16.mxu0 0
  %2780 = vmatpush1.bf16.msra.mxu0 0
  %2781 = vmatprep.subr.bf16.mxu0 0
  %2782 = vmatpush1.bf16.msra.mxu0 0
  %2783 = vmatprep.subr.bf16.mxu0 0
  %2784 = vmatpush1.bf16.msra.mxu0 0
  %2785 = vmatprep.subr.bf16.mxu0 0
  %2786 = vmatpush1.bf16.msra.mxu0 0
  %2787 = vmatprep.subr.bf16.mxu0 0
  %2788 = vmatpush1.bf16.msra.mxu0 0
  %2789 = vmatprep.subr.bf16.mxu0 0
  %2790 = vmatpush1.bf16.msra.mxu0 0
  %2791 = vmatprep.subr.bf16.mxu0 0
  %2792 = vmatpush1.bf16.msra.mxu0 0
  %2793 = vmatprep.subr.bf16.mxu0 0
  %2794 = vmatpush1.bf16.msra.mxu0 0
  %2795 = vmatprep.subr.bf16.mxu0 0
  %2796 = vmatpush1.bf16.msra.mxu0 0
  %2797 = vmatprep.mubr.bf16.mxu0 0
  %2798 = vmatmul.mubr.bf16.gmra.mrb[0].mxu0 %v2722
  %v2799 = vpop.f32.mrb[0].mxu0
  %v2800 = vadd.f32 %v317, %v2799
  %v2801 = vpop.f32.mrb[0].mxu0
  %v2802 = vpop.f32.mrb[0].mxu0
  %v2803 = vpop.f32.mrb[0].mxu0
  %2804 = vdwg.mxu0
  %v2805 = vadd.f32 %v2674, %v2759
  %v2806 = vxor.u32 %v2805, 2147483648
  %v2807 = vmul.f32 %v2806, 1.442695
  %v2808 = vpow.pop %v2807
  %v2809 = vadd.f32 %v2808, 1.0
  %v2810 = vrcp.pop %v2809
  %v2811 = vmul.f32 1.0, %v2810
  %v2812 = vadd.f32 %v2676, %v2761
  %v2813 = vxor.u32 %v2812, 2147483648
  %v2814 = vmul.f32 %v2813, 1.442695
  %v2815 = vpow.pop %v2814
  %v2816 = vadd.f32 %v2815, 1.0
  %v2817 = vrcp.pop %v2816
  %v2818 = vmul.f32 1.0, %v2817
  %v2819 = vmul.f32 %v2811, %v2800
  %v2820 = vadd.f32 %v2715, %v2819
  %v2821 = vtanh.pop %v2820
  %v2822 = vsub.f32 1.0, %v2818
  %v2823 = vmul.f32 %v2822, %v2821
  %v2824 = vmul.f32 %v2818, %v2526
  %v2825 = vadd.f32 %v2823, %v2824
  %v2826 = vtanh.pop %v2825
  %v2827 = vld [vmem:[%s9] sm:$0xff]
  %v2828 = vld [vmem:[%s9 + $0x8] sm:$0xff]
  %v2829 = vld [vmem:[%s9 + $0x10] sm:$0xff]
  %v2830 = vld [vmem:[%s9 + $0x18] sm:$0xff]
  %v2831 = vld [vmem:[%s10] sm:$0x1]
  %v2833 = vlaneseq
  %v2834 = vshrl.u32 %v2833, 7
  %v2835 = vsub.s32 0, %v2834
  %v2836 = vrot.slane %v2831, %v2835
  %v2839 = vsel %vm376, %v2826, 0
  %2841 = vmatprep.subr.mxu0 0.0
  %2842 = vmatpush1.msra.mxu0 %v2827
  %2843 = vmatprep.subr.mxu0 0.0
  %2844 = vmatpush1.msra.mxu0 %v2828
  %2845 = vmatprep.subr.mxu0 0.0
  %2846 = vmatpush1.msra.mxu0 %v2829
  %2847 = vmatprep.subr.mxu0 0.0
  %2848 = vmatpush1.msra.mxu0 %v2830
  %2849 = vmatprep.subr.mxu0 0.0
  %2850 = vmatpush1.msra.mxu0 0.0
  %2851 = vmatprep.subr.mxu0 0.0
  %2852 = vmatpush1.msra.mxu0 0.0
  %2853 = vmatprep.subr.mxu0 0.0
  %2854 = vmatpush1.msra.mxu0 0.0
  %2855 = vmatprep.subr.mxu0 0.0
  %2856 = vmatpush1.msra.mxu0 0.0
  %2857 = vmatprep.subr.mxu0 0.0
  %2858 = vmatpush1.msra.mxu0 0.0
  %2859 = vmatprep.subr.mxu0 0.0
  %2860 = vmatpush1.msra.mxu0 0.0
  %2861 = vmatprep.subr.mxu0 0.0
  %2862 = vmatpush1.msra.mxu0 0.0
  %2863 = vmatprep.subr.mxu0 0.0
  %2864 = vmatpush1.msra.mxu0 0.0
  %2865 = vmatprep.subr.mxu0 0.0
  %2866 = vmatpush1.msra.mxu0 0.0
  %2867 = vmatprep.subr.mxu0 0.0
  %2868 = vmatpush1.msra.mxu0 0.0
  %2869 = vmatprep.subr.mxu0 0.0
  %2870 = vmatpush1.msra.mxu0 0.0
  %2871 = vmatprep.subr.mxu0 0.0
  %2872 = vmatpush1.msra.mxu0 0.0
  %2873 = vmatprep.subr.mxu0 0.0
  %2874 = vmatpush1.msra.mxu0 0.0
  %2875 = vmatprep.subr.mxu0 0.0
  %2876 = vmatpush1.msra.mxu0 0.0
  %2877 = vmatprep.subr.mxu0 0.0
  %2878 = vmatpush1.msra.mxu0 0.0
  %2879 = vmatprep.subr.mxu0 0.0
  %2880 = vmatpush1.msra.mxu0 0.0
  %2881 = vmatprep.subr.mxu0 0.0
  %2882 = vmatpush1.msra.mxu0 0.0
  %2883 = vmatprep.subr.mxu0 0.0
  %2884 = vmatpush1.msra.mxu0 0.0
  %2885 = vmatprep.subr.mxu0 0.0
  %2886 = vmatpush1.msra.mxu0 0.0
  %2887 = vmatprep.subr.mxu0 0.0
  %2888 = vmatpush1.msra.mxu0 0.0
  %2889 = vmatprep.subr.mxu0 0.0
  %2890 = vmatpush1.msra.mxu0 0.0
  %2891 = vmatprep.subr.mxu0 0.0
  %2892 = vmatpush1.msra.mxu0 0.0
  %2893 = vmatprep.subr.mxu0 0.0
  %2894 = vmatpush1.msra.mxu0 0.0
  %2895 = vmatprep.subr.mxu0 0.0
  %2896 = vmatpush1.msra.mxu0 0.0
  %2897 = vmatprep.subr.mxu0 0.0
  %2898 = vmatpush1.msra.mxu0 0.0
  %2899 = vmatprep.subr.mxu0 0.0
  %2900 = vmatpush1.msra.mxu0 0.0
  %2901 = vmatprep.subr.mxu0 0.0
  %2902 = vmatpush1.msra.mxu0 0.0
  %2903 = vmatprep.subr.mxu0 0.0
  %2904 = vmatpush1.msra.mxu0 0.0
  %2905 = vmatprep.mubr.f32.mxu0 0.0
  %2906 = vmatmul.mubr.f32.gmra.mrb[0].mxu0 %v2839
  %v2907 = vpop.f32.mrb[0].mxu0
  %v2908 = vadd.f32 %v2836, %v2907
  %v2909 = vpop.f32.mrb[0].mxu0
  %2910 = vdwg.mxu0
  %vm2911 = vcmask 64512
  %2912 = vst.msk [vmem:[%s11] sm:$0xff] %vm2911, %v2908
  // Predicated region
  $region46: #{gru_forward.1} parent=0 // pred_check
    _
  $region47: #{gru_forward.1} parent=0 // pred_check_branch
    %2914 = sbr.rel (0) target = $region49
  $region48: #{gru_forward.1} parent=0 // pred_region
    _
  $region49: #{gru_forward.1} parent=0 // pred_fallthru
    _
  // Predicated region
  $region50: #{gru_forward.1} parent=0 // pred_check
    _
  $region51: #{gru_forward.1} parent=0 // pred_check_branch
    %2916 = sbr.rel (0) target = $region53
  $region52: #{gru_forward.1} parent=0 // pred_region
    _
  $region53: #{gru_forward.1} parent=0 // pred_fallthru
    _

</llo_original>
